<compile_context>
chip_gen: v6e
topology: v6e:2x2x1
jax: 0.10.0
libtpu: 0.0.40
codegen_flags: <defaults>
</compile_context>

<pallas_src>
import functools

import numpy as np
import jax
import jax.numpy as jnp
from jax.experimental import pallas as pl
from jax.experimental.pallas import tpu as pltpu

EPS = 1e-8
LANE = 128


def _round_up(x, m):
    return ((x + m - 1) // m) * m


def _cdiv(a, b):
    return -(-a // b)


# ----------------------------------------------------------------------------
# Hardware queries (perf-only; correctness does not depend on them).
# ----------------------------------------------------------------------------
def _num_core_splits():
    """How many TensorCores a 'parallel' grid axis can shard over on one device."""
    try:
        kind = jax.devices()[0].device_kind.lower()
    except Exception:
        return 1
    if "lite" in kind or "v5e" in kind or "v6e" in kind:
        return 1                                   # single TensorCore per chip
    if any(t in kind for t in ("v7", "7x", "v4", "v3", "v2", "v5p", "v5")):
        return 2                                   # v7x: 2 TC/chip; v2-v4/v5p megacore
    return 1


def _vmem_capacity_bytes():
    try:
        return int(pltpu.get_tpu_info().vmem_capacity_bytes)
    except Exception:
        return 64 << 20                            # conservative (v7x per-TC VMEM)


# ----------------------------------------------------------------------------
# Deterministic parameter construction (mirrors librosa.filters.mel, slaney,
# norm='slaney', and torch.hann_window(periodic=True) / torch.stft centering).
# ----------------------------------------------------------------------------
def _hz_to_mel(f):
    f = np.asarray(f, dtype=np.float64)
    f_sp = 200.0 / 3.0
    mels = f / f_sp
    min_log_hz = 1000.0
    min_log_mel = min_log_hz / f_sp
    logstep = np.log(6.4) / 27.0
    return np.where(
        f >= min_log_hz,
        min_log_mel + np.log(np.maximum(f, min_log_hz) / min_log_hz) / logstep,
        mels,
    )


def _mel_to_hz(m):
    m = np.asarray(m, dtype=np.float64)
    f_sp = 200.0 / 3.0
    freqs = f_sp * m
    min_log_hz = 1000.0
    min_log_mel = min_log_hz / f_sp
    logstep = np.log(6.4) / 27.0
    return np.where(
        m >= min_log_mel,
        min_log_hz * np.exp(logstep * (m - min_log_mel)),
        freqs,
    )


def mel_filterbank(sr, n_fft, n_mels):
    """Equivalent to librosa.filters.mel(sr=sr, n_fft=n_fft, n_mels=n_mels)."""
    fmin, fmax = 0.0, sr / 2.0
    n_freq = n_fft // 2 + 1
    fftfreqs = np.linspace(0.0, sr / 2.0, n_freq)
    mel_pts = _mel_to_hz(np.linspace(_hz_to_mel(fmin), _hz_to_mel(fmax), n_mels + 2))
    fdiff = np.diff(mel_pts)
    ramps = mel_pts[:, None] - fftfreqs[None, :]
    weights = np.zeros((n_mels, n_freq), dtype=np.float64)
    for i in range(n_mels):
        lower = -ramps[i] / fdiff[i]
        upper = ramps[i + 2] / fdiff[i + 1]
        weights[i] = np.maximum(0.0, np.minimum(lower, upper))
    enorm = 2.0 / (mel_pts[2 : n_mels + 2] - mel_pts[:n_mels])
    weights *= enorm[:, None]
    return weights.astype(np.float32)


def windowed_dft_mats(fft_size, win_length):
    """Real/imag rDFT matrices with the (center-padded) periodic hann window baked in."""
    n = np.arange(win_length)
    w = 0.5 * (1.0 - np.cos(2.0 * np.pi * n / win_length))  # torch.hann_window (periodic)
    left = (fft_size - win_length) // 2
    wp = np.zeros(fft_size, dtype=np.float64)
    wp[left : left + win_length] = w
    k = np.arange(fft_size // 2 + 1)
    nn = np.arange(fft_size)
    ang = 2.0 * np.pi * np.outer(nn, k) / fft_size
    dft_r = (wp[:, None] * np.cos(ang)).astype(np.float32)
    dft_i = (-wp[:, None] * np.sin(ang)).astype(np.float32)
    return dft_r, dft_i, wp.astype(np.float32)


# ----------------------------------------------------------------------------
# Framing glue (torch.stft: center=True, reflect pad). Casts to bf16 *before*
# the gather and folds the tile row-padding in, so the overlapped frame matrix
# is materialized exactly once, in bf16.
# ----------------------------------------------------------------------------
def frame_signals(xy, fft_size, hop, rows_padded):
    """xy: (2, B, L) f32 -> (2, rows_padded, fft_size) bf16 frames, plus valid-row count."""
    p = fft_size // 2
    xp = jnp.pad(xy, ((0, 0), (0, 0), (p, p)), mode="reflect").astype(jnp.bfloat16)
    T = 1 + (xp.shape[-1] - fft_size) // hop
    idx = (jnp.arange(T) * hop)[:, None] + jnp.arange(fft_size)[None, :]
    frames = xp[:, :, idx].reshape(2, -1, fft_size)        # (2, B*T, fft) bf16
    R = frames.shape[1]
    if rows_padded > R:
        # Zero rows give identical sqrt(eps) magnitudes for x and x_hat -> zero loss.
        frames = jnp.pad(frames, ((0, 0), (0, rows_padded - R), (0, 0)))
    return frames, R


# ----------------------------------------------------------------------------
# Pallas kernel: one fused bf16 MXU matmul (stacked x/y frame tile @ [Re||Im] rDFT),
# magnitudes, bf16 mel projection, element-wise accumulation of |dmel| and dmel^2
# into the resident per-core VMEM output block.
# ----------------------------------------------------------------------------
def _stft_loss_kernel(fxy_ref, dft_ref, fbT_ref, out_ref, *, f_pad, tile_rows, eps):
    i = pl.program_id(1)

    @pl.when(i == 0)
    def _init():
        out_ref[...] = jnp.zeros_like(out_ref)

    # Merge the stacked x/y tiles along rows (layout-trivial: tile_rows is a multiple
    # of 16 and the lane dim is unchanged) -> one MXU weight pass serves both signals.
    fxy = fxy_ref[...].reshape(2 * tile_rows, -1)                          # (2*TR, fft) bf16
    z = jnp.dot(fxy, dft_ref[...], preferred_element_type=jnp.float32)     # (2*TR, 2*Fp) f32

    zx, zy = z[:tile_rows], z[tile_rows:]
    xr, xi = zx[:, :f_pad], zx[:, f_pad:]
    yr, yi = zy[:, :f_pad], zy[:, f_pad:]
    # sqrt goes to the EUP slot (free next to the VPU square/sum); single eps clamp.
    xmag = jnp.sqrt(jnp.maximum(xr * xr + xi * xi, eps))                   # (TR, Fp)
    ymag = jnp.sqrt(jnp.maximum(yr * yr + yi * yi, eps))

    # mel(fb @ x_mag) - mel(fb @ xhat_mag) == (x_mag - xhat_mag) @ fb.T  (linear),
    # run in bf16 on the MXU with f32 accumulation (f32 matmul is a 3-6x multi-pass).
    dmel = jnp.dot((xmag - ymag).astype(jnp.bfloat16), fbT_ref[...],
                   preferred_element_type=jnp.float32)                     # (TR, NBp)

    # Element-wise VPU accumulation into the resident output block (reduced on host).
    out_ref[0, 0] += jnp.abs(dmel)
    out_ref[0, 1] += dmel * dmel


def stft_loss_pallas(frames_xy, dft, fbT, n_valid_rows, n_bins,
                     tile_rows, num_splits, vmem_bytes):
    """frames_xy: (2, RP, fft) bf16; dft: (fft, 2*Fp) bf16; fbT: (Fp, NBp) bf16."""
    _, rp, N = frames_xy.shape
    f_pad = dft.shape[1] // 2
    nb_pad = fbT.shape[1]
    tiles = rp // tile_rows
    tiles_per_core = tiles // num_splits

    kernel = functools.partial(_stft_loss_kernel, f_pad=f_pad,
                               tile_rows=tile_rows, eps=EPS)

    # Explicit scoped-VMEM budget: double-buffered stacked frame tiles +
    # single-buffered constants + resident accumulator + f32 temporaries, with
    # headroom, capped below physical capacity (critical on v7x's 64 MiB).
    need = (2 * (2 * tile_rows * N * 2)                 # frames, 2 bufs, bf16
            + N * 2 * f_pad * 2 + f_pad * nb_pad * 2    # dft + fbT, single buffer, bf16
            + 2 * 2 * tile_rows * nb_pad * 4            # resident output block, f32
            + (2 * tile_rows) * (2 * f_pad) * 4 * 3)    # z + magnitude temporaries, f32
    vmem_limit = int(min(int(vmem_bytes * 0.9), max(2 * need, 32 << 20)))

    flops = 2 * (2 * rp) * N * (2 * f_pad) + 2 * rp * f_pad * nb_pad
    bytes_accessed = (2 * rp * N) * 2 + int(dft.size) * 2 + int(fbT.size) * 2 \
        + num_splits * 2 * tile_rows * nb_pad * 4

    def call(single_buffer_consts):
        const_kw = {}
        if single_buffer_consts:
            # Constant block index => no re-DMA; double-buffering is pure VMEM waste.
            const_kw = dict(pipeline_mode=pl.Buffered(1))
        return pl.pallas_call(
            kernel,
            out_shape=jax.ShapeDtypeStruct(
                (num_splits, 2, tile_rows, nb_pad), jnp.float32),
            grid_spec=pltpu.PrefetchScalarGridSpec(
                num_scalar_prefetch=0,
                grid=(num_splits, tiles_per_core),
                in_specs=[
                    pl.BlockSpec((2, tile_rows, N),
                                 lambda c, i: (0, c * tiles_per_core + i, 0)),
                    pl.BlockSpec((N, 2 * f_pad), lambda c, i: (0, 0), **const_kw),
                    pl.BlockSpec((f_pad, nb_pad), lambda c, i: (0, 0), **const_kw),
                ],
                out_specs=pl.BlockSpec((1, 2, tile_rows, nb_pad),
                                       lambda c, i: (c, 0, 0, 0)),
            ),
            compiler_params=pltpu.CompilerParams(
                dimension_semantics=("parallel", "arbitrary"),
                vmem_limit_bytes=vmem_limit),
            cost_estimate=pl.CostEstimate(
                flops=int(flops),
                transcendentals=int(2 * rp * f_pad),
                bytes_accessed=int(bytes_accessed)),
        )(frames_xy, dft, fbT)

    try:
        out = call(True)
    except Exception:
        # Compatibility fallback: retry without pipeline_mode (real errors re-raise here).
        out = call(False)

    sums = jnp.sum(out, axis=(0, 2, 3))                  # [sum |dmel|, sum dmel^2]
    count = jnp.float32(n_valid_rows * n_bins)           # == B * n_bins * n_frames (.mean())
    l1 = sums[0] / count
    l2 = jnp.sqrt(sums[1] / count)
    return l1 + l2


# ----------------------------------------------------------------------------
# MultiSTFTLoss wrapper (parameters built deterministically in __init__).
# ----------------------------------------------------------------------------
class MultiSTFTLossPallas:
    def __init__(self, fft_sizes, hop_sizes, win_lengths, sample_rate, n_bins,
                 freq_weights_p=0.0, freq_weights_warmup_epochs=500):
        assert len(fft_sizes) == len(hop_sizes) == len(win_lengths)
        # TODO(synk): freq_weights_p != 0 warmup mask schedule (update()) not implemented;
        # at the default p == 0 the mask is all-ones and folds away entirely.
        assert freq_weights_p == 0.0
        self.n_bins = n_bins
        self.num_splits = _num_core_splits()
        self.vmem_bytes = _vmem_capacity_bytes()
        self.cfgs = []
        for fft, hop, win in zip(fft_sizes, hop_sizes, win_lengths):
            assert n_bins <= fft
            f = fft // 2 + 1
            f_pad = _round_up(f, LANE)
            nb_pad = _round_up(n_bins, LANE)

            dft_r, dft_i, _ = windowed_dft_mats(fft, win)
            dft = np.zeros((fft, 2 * f_pad), np.float32)   # fused [Re || Im], lane-padded
            dft[:, :f] = dft_r
            dft[:, f_pad:f_pad + f] = dft_i

            fb = mel_filterbank(sample_rate, fft, n_bins)  # (n_bins, F)
            fbT = np.zeros((f_pad, nb_pad), np.float32)    # zero-padded rows/cols -> 0 loss
            fbT[:f, :n_bins] = fb.T

            # TODO(synk): bf16 STFT/mel operands set the loss noise floor; switch these
            # back to f32 (multi-pass MXU) if this loss drives late-training convergence.
            self.cfgs.append(dict(
                fft=fft, hop=hop,
                dft=jnp.asarray(dft, dtype=jnp.bfloat16),
                fbT=jnp.asarray(fbT, dtype=jnp.bfloat16),
            ))

    def _tile_geometry(self, n_rows, fft):
        # Big row tiles amortize the ~0.35 us/step overhead and the DFT weight pushes;
        # cap depends on fft size and physical VMEM (v7x: 64 MiB per TensorCore).
        if fft >= 2048:
            cap = 256 if self.vmem_bytes <= (64 << 20) else 512
        elif fft >= 1024:
            cap = 512
        else:
            cap = 1024
        per_core = max(16, _round_up(_cdiv(n_rows, self.num_splits), 16))
        tile_rows = min(cap, per_core)
        tiles = _round_up(_cdiv(n_rows, tile_rows), self.num_splits)
        return tile_rows, tiles

    def __call__(self, x, x_hat):
        x2 = x.reshape(-1, x.shape[-1])
        y2 = x_hat.reshape(-1, x_hat.shape[-1])
        xy = jnp.stack([x2, y2], axis=0)                    # (2, B, L)
        B, L = x2.shape
        losses = []
        for c in self.cfgs:
            n_rows = B * (1 + L // c["hop"])                # frames (center=True, even fft)
            tile_rows, tiles = self._tile_geometry(n_rows, c["fft"])
            frames_xy, R = frame_signals(xy, c["fft"], c["hop"], tiles * tile_rows)
            assert R == n_rows
            losses.append(stft_loss_pallas(
                frames_xy, c["dft"], c["fbT"], n_valid_rows=R, n_bins=self.n_bins,
                tile_rows=tile_rows, num_splits=self.num_splits,
                vmem_bytes=self.vmem_bytes))
        return jnp.mean(jnp.stack(losses))


# ----------------------------------------------------------------------------
# Pure-JAX reference (f32, FFT-based) for a correctness sanity check.
# ----------------------------------------------------------------------------
def _frame_ref(x, fft_size, hop):
    p = fft_size // 2
    xp = jnp.pad(x, ((0, 0), (p, p)), mode="reflect")
    T = 1 + (xp.shape[1] - fft_size) // hop
    idx = (jnp.arange(T) * hop)[:, None] + jnp.arange(fft_size)[None, :]
    return xp[:, idx].reshape(-1, fft_size)


def multi_stft_loss_ref(x, x_hat, fft_sizes, hop_sizes, win_lengths, sr, n_bins):
    x2 = x.reshape(-1, x.shape[-1])
    y2 = x_hat.reshape(-1, x_hat.shape[-1])
    losses = []
    for fft, hop, win in zip(fft_sizes, hop_sizes, win_lengths):
        fb = jnp.asarray(mel_filterbank(sr, fft, n_bins))
        _, _, wp = windowed_dft_mats(fft, win)
        wp = jnp.asarray(wp)

        def mag(sig):
            fr = _frame_ref(sig, fft, hop)
            spec = jnp.fft.rfft(fr * wp[None, :], axis=-1)
            return jnp.sqrt(jnp.maximum(spec.real ** 2 + spec.imag ** 2, EPS))

        d = mag(x2) @ fb.T - mag(y2) @ fb.T
        l1 = jnp.mean(jnp.abs(d))
        l2 = jnp.sqrt(jnp.mean(d * d))
        losses.append(l1 + l2)
    return jnp.mean(jnp.stack(losses))


if __name__ == "__main__":
    key = jax.random.PRNGKey(0)
    k1, k2 = jax.random.split(key)
    B, L = 2, 2048
    x = jax.random.normal(k1, (B, L), dtype=jnp.float32)
    x_hat = x + 0.1 * jax.random.normal(k2, (B, L), dtype=jnp.float32)

    fft_sizes = [256, 512]
    hop_sizes = [64, 128]
    win_lengths = [256, 512]
    sample_rate = 16000
    n_bins = 64

    loss_mod = MultiSTFTLossPallas(fft_sizes, hop_sizes, win_lengths, sample_rate, n_bins)
    out = loss_mod(x, x_hat)
    out = jax.block_until_ready(out)

    ref = multi_stft_loss_ref(x, x_hat, fft_sizes, hop_sizes, win_lengths,
                              sample_rate, n_bins)
    np.testing.assert_allclose(float(out), float(ref), rtol=2e-2, atol=1e-3)
    print("KERNEL_OK")
</pallas_src>

<mosaic_0001>
module attributes {stable_mosaic.version = 11 : i64} {
  func.func @_stft_loss_kernel(%arg0: i32, %arg1: i32, %arg2: memref<2x80x256xbf16, #tpu.memory_space<vmem>>, %arg3: memref<256x512xbf16, #tpu.memory_space<vmem>>, %arg4: memref<256x128xbf16, #tpu.memory_space<vmem>>, %arg5: memref<1x2x80x128xf32, #tpu.memory_space<vmem>>) attributes {dimension_semantics = [#tpu.dimension_semantics<parallel>, #tpu.dimension_semantics<arbitrary>], iteration_bounds = array<i64: 1, 1>, scalar_prefetch = 0 : i64, scratch_operands = 0 : i64, tpu.core_type = #tpu.core_type<tc>, window_params = [{transform_indices = @transform_0, window_bounds = array<i64: 2, 80, 256>}, {pipeline_mode = #tpu.pipeline_mode<synchronous>, transform_indices = @transform_1, window_bounds = array<i64: 256, 512>}, {pipeline_mode = #tpu.pipeline_mode<synchronous>, transform_indices = @transform_2, window_bounds = array<i64: 256, 128>}, {transform_indices = @transform_3, window_bounds = array<i64: 1, 2, 80, 128>}]} {
    %c0_i32 = arith.constant 0 : i32
    %0 = arith.cmpi eq, %arg1, %c0_i32 : i32
    %1 = arith.extui %0 : i1 to i32
    %c0_i32_0 = arith.constant 0 : i32
    %2 = arith.cmpi ne, %1, %c0_i32_0 : i32
    scf.if %2 {
      %cst_25 = arith.constant 0.000000e+00 : f32
      %43 = vector.broadcast %cst_25 : f32 to vector<1x2x80x128xf32>
      %c0_26 = arith.constant 0 : index
      %c0_27 = arith.constant 0 : index
      %c0_28 = arith.constant 0 : index
      %c0_29 = arith.constant 0 : index
      %44 = vector.load %arg5[%c0_26, %c0_27, %c0_28, %c0_29] : memref<1x2x80x128xf32, #tpu.memory_space<vmem>>, vector<1x2x80x128xf32>
      tpu.vector_store %arg5[%c0_26, %c0_27, %c0_28, %c0_29], %43 {strides = array<i32>} : memref<1x2x80x128xf32, #tpu.memory_space<vmem>>, vector<1x2x80x128xf32>,
    } else {
    }
    %c0 = arith.constant 0 : index
    %c0_1 = arith.constant 0 : index
    %c0_2 = arith.constant 0 : index
    %3 = vector.load %arg2[%c0, %c0_1, %c0_2] : memref<2x80x256xbf16, #tpu.memory_space<vmem>>, vector<2x80x256xbf16>
    %4 = vector.shape_cast %3 : vector<2x80x256xbf16> to vector<160x256xbf16>
    %c0_3 = arith.constant 0 : index
    %c0_4 = arith.constant 0 : index
    %5 = vector.load %arg3[%c0_3, %c0_4] : memref<256x512xbf16, #tpu.memory_space<vmem>>, vector<256x512xbf16>
    %cst = arith.constant dense<0.000000e+00> : vector<160x512xf32>
    %6 = tpu.matmul %4, %5, %cst {dimension_numbers = #tpu.dot_dimension_numbers<[1], [0], [0], [1], [0, 0, 1, 1], [], []>} : vector<160x256xbf16>, vector<256x512xbf16>, vector<160x512xf32> -> vector<160x512xf32>
    %7 = vector.extract_strided_slice %6 {offsets = [0, 0], sizes = [80, 512], strides = [1, 1]} : vector<160x512xf32> to vector<80x512xf32>
    %8 = vector.extract_strided_slice %6 {offsets = [80, 0], sizes = [80, 512], strides = [1, 1]} : vector<160x512xf32> to vector<80x512xf32>
    %9 = vector.extract_strided_slice %7 {offsets = [0, 0], sizes = [80, 256], strides = [1, 1]} : vector<80x512xf32> to vector<80x256xf32>
    %10 = vector.extract_strided_slice %7 {offsets = [0, 256], sizes = [80, 256], strides = [1, 1]} : vector<80x512xf32> to vector<80x256xf32>
    %11 = vector.extract_strided_slice %8 {offsets = [0, 0], sizes = [80, 256], strides = [1, 1]} : vector<80x512xf32> to vector<80x256xf32>
    %12 = vector.extract_strided_slice %8 {offsets = [0, 256], sizes = [80, 256], strides = [1, 1]} : vector<80x512xf32> to vector<80x256xf32>
    %13 = arith.mulf %9, %9 : vector<80x256xf32>
    %14 = arith.mulf %10, %10 : vector<80x256xf32>
    %15 = arith.addf %13, %14 : vector<80x256xf32>
    %cst_5 = arith.constant 9.99999993E-9 : f32
    %16 = vector.broadcast %cst_5 : f32 to vector<80x256xf32>
    %17 = arith.maximumf %15, %16 : vector<80x256xf32>
    %18 = math.sqrt %17 : vector<80x256xf32>
    %19 = arith.mulf %11, %11 : vector<80x256xf32>
    %20 = arith.mulf %12, %12 : vector<80x256xf32>
    %21 = arith.addf %19, %20 : vector<80x256xf32>
    %cst_6 = arith.constant 9.99999993E-9 : f32
    %22 = vector.broadcast %cst_6 : f32 to vector<80x256xf32>
    %23 = arith.maximumf %21, %22 : vector<80x256xf32>
    %24 = math.sqrt %23 : vector<80x256xf32>
    %25 = arith.subf %18, %24 : vector<80x256xf32>
    %26 = arith.truncf %25 : vector<80x256xf32> to vector<80x256xbf16>
    %c0_7 = arith.constant 0 : index
    %c0_8 = arith.constant 0 : index
    %27 = vector.load %arg4[%c0_7, %c0_8] : memref<256x128xbf16, #tpu.memory_space<vmem>>, vector<256x128xbf16>
    %cst_9 = arith.constant dense<0.000000e+00> : vector<80x128xf32>
    %28 = tpu.matmul %26, %27, %cst_9 {dimension_numbers = #tpu.dot_dimension_numbers<[1], [0], [0], [1], [0, 0, 1, 1], [], []>} : vector<80x256xbf16>, vector<256x128xbf16>, vector<80x128xf32> -> vector<80x128xf32>
    %c0_10 = arith.constant 0 : index
    %c0_11 = arith.constant 0 : index
    %c0_12 = arith.constant 0 : index
    %c0_13 = arith.constant 0 : index
    %29 = vector.load %arg5[%c0_10, %c0_11, %c0_12, %c0_13] : memref<1x2x80x128xf32, #tpu.memory_space<vmem>>, vector<1x1x80x128xf32>
    %30 = vector.shape_cast %29 : vector<1x1x80x128xf32> to vector<80x128xf32>
    %31 = math.absf %28 : vector<80x128xf32>
    %32 = arith.addf %30, %31 : vector<80x128xf32>
    %c0_14 = arith.constant 0 : index
    %c0_15 = arith.constant 0 : index
    %c0_16 = arith.constant 0 : index
    %c0_17 = arith.constant 0 : index
    %33 = vector.load %arg5[%c0_14, %c0_15, %c0_16, %c0_17] : memref<1x2x80x128xf32, #tpu.memory_space<vmem>>, vector<1x1x80x128xf32>
    %34 = vector.shape_cast %33 : vector<1x1x80x128xf32> to vector<80x128xf32>
    %35 = vector.shape_cast %32 : vector<80x128xf32> to vector<1x1x80x128xf32>
    tpu.vector_store %arg5[%c0_14, %c0_15, %c0_16, %c0_17], %35 {strides = array<i32>} : memref<1x2x80x128xf32, #tpu.memory_space<vmem>>, vector<1x1x80x128xf32>,
    %c0_18 = arith.constant 0 : index
    %c1 = arith.constant 1 : index
    %c0_19 = arith.constant 0 : index
    %c0_20 = arith.constant 0 : index
    %36 = vector.load %arg5[%c0_18, %c1, %c0_19, %c0_20] : memref<1x2x80x128xf32, #tpu.memory_space<vmem>>, vector<1x1x80x128xf32>
    %37 = vector.shape_cast %36 : vector<1x1x80x128xf32> to vector<80x128xf32>
    %38 = arith.mulf %28, %28 : vector<80x128xf32>
    %39 = arith.addf %37, %38 : vector<80x128xf32>
    %c0_21 = arith.constant 0 : index
    %c1_22 = arith.constant 1 : index
    %c0_23 = arith.constant 0 : index
    %c0_24 = arith.constant 0 : index
    %40 = vector.load %arg5[%c0_21, %c1_22, %c0_23, %c0_24] : memref<1x2x80x128xf32, #tpu.memory_space<vmem>>, vector<1x1x80x128xf32>
    %41 = vector.shape_cast %40 : vector<1x1x80x128xf32> to vector<80x128xf32>
    %42 = vector.shape_cast %39 : vector<80x128xf32> to vector<1x1x80x128xf32>
    tpu.vector_store %arg5[%c0_21, %c1_22, %c0_23, %c0_24], %42 {strides = array<i32>} : memref<1x2x80x128xf32, #tpu.memory_space<vmem>>, vector<1x1x80x128xf32>,
    return
  }
  func.func @transform_0(%arg0: i32, %arg1: i32) -> (i32, i32, i32) {
    %c1_i32 = arith.constant 1 : i32
    %0 = arith.muli %arg0, %c1_i32 : i32
    %1 = arith.addi %0, %arg1 : i32
    %c0_i32 = arith.constant 0 : i32
    %c0_i32_0 = arith.constant 0 : i32
    %c0_i32_1 = arith.constant 0 : i32
    return %c0_i32, %1, %c0_i32_0 : i32, i32, i32
  }
  func.func @transform_1(%arg0: i32, %arg1: i32) -> (i32, i32) {
    %c0_i32 = arith.constant 0 : i32
    %c0_i32_0 = arith.constant 0 : i32
    %c0_i32_1 = arith.constant 0 : i32
    return %c0_i32, %c0_i32_0 : i32, i32
  }
  func.func @transform_2(%arg0: i32, %arg1: i32) -> (i32, i32) {
    %c0_i32 = arith.constant 0 : i32
    %c0_i32_0 = arith.constant 0 : i32
    %c0_i32_1 = arith.constant 0 : i32
    return %c0_i32, %c0_i32_0 : i32, i32
  }
  func.func @transform_3(%arg0: i32, %arg1: i32) -> (i32, i32, i32, i32) {
    %c0_i32 = arith.constant 0 : i32
    %c0_i32_0 = arith.constant 0 : i32
    %c0_i32_1 = arith.constant 0 : i32
    %c0_i32_2 = arith.constant 0 : i32
    return %arg0, %c0_i32, %c0_i32_0, %c0_i32_1 : i32, i32, i32, i32
  }
}

module attributes {stable_mosaic.version = 11 : i64} {
  func.func @_stft_loss_kernel(%arg0: i32, %arg1: i32, %arg2: memref<2x80x256xbf16, #tpu.memory_space<vmem>>, %arg3: memref<256x512xbf16, #tpu.memory_space<vmem>>, %arg4: memref<256x128xbf16, #tpu.memory_space<vmem>>, %arg5: memref<1x2x80x128xf32, #tpu.memory_space<vmem>>) attributes {dimension_semantics = [#tpu.dimension_semantics<parallel>, #tpu.dimension_semantics<arbitrary>], iteration_bounds = array<i64: 1, 1>, scalar_prefetch = 0 : i64, scratch_operands = 0 : i64, tpu.core_type = #tpu.core_type<tc>, window_params = [{transform_indices = @transform_0, window_bounds = array<i64: 2, 80, 256>}, {pipeline_mode = #tpu.pipeline_mode<synchronous>, transform_indices = @transform_1, window_bounds = array<i64: 256, 512>}, {pipeline_mode = #tpu.pipeline_mode<synchronous>, transform_indices = @transform_2, window_bounds = array<i64: 256, 128>}, {transform_indices = @transform_3, window_bounds = array<i64: 1, 2, 80, 128>}]} {
    %c0_i32 = arith.constant 0 : i32
    %0 = arith.cmpi eq, %arg1, %c0_i32 : i32
    %1 = arith.extui %0 : i1 to i32
    %c0_i32_0 = arith.constant 0 : i32
    %2 = arith.cmpi ne, %1, %c0_i32_0 : i32
    scf.if %2 {
      %cst_25 = arith.constant 0.000000e+00 : f32
      %43 = vector.broadcast %cst_25 : f32 to vector<1x2x80x128xf32>
      %c0_26 = arith.constant 0 : index
      %c0_27 = arith.constant 0 : index
      %c0_28 = arith.constant 0 : index
      %c0_29 = arith.constant 0 : index
      %44 = vector.load %arg5[%c0_26, %c0_27, %c0_28, %c0_29] : memref<1x2x80x128xf32, #tpu.memory_space<vmem>>, vector<1x2x80x128xf32>
      tpu.vector_store %arg5[%c0_26, %c0_27, %c0_28, %c0_29], %43 {strides = array<i32>} : memref<1x2x80x128xf32, #tpu.memory_space<vmem>>, vector<1x2x80x128xf32>,
    } else {
    }
    %c0 = arith.constant 0 : index
    %c0_1 = arith.constant 0 : index
    %c0_2 = arith.constant 0 : index
    %3 = vector.load %arg2[%c0, %c0_1, %c0_2] : memref<2x80x256xbf16, #tpu.memory_space<vmem>>, vector<2x80x256xbf16>
    %4 = vector.shape_cast %3 : vector<2x80x256xbf16> to vector<160x256xbf16>
    %c0_3 = arith.constant 0 : index
    %c0_4 = arith.constant 0 : index
    %5 = vector.load %arg3[%c0_3, %c0_4] : memref<256x512xbf16, #tpu.memory_space<vmem>>, vector<256x512xbf16>
    %cst = arith.constant dense<0.000000e+00> : vector<160x512xf32>
    %6 = tpu.matmul %4, %5, %cst {dimension_numbers = #tpu.dot_dimension_numbers<[1], [0], [0], [1], [0, 0, 1, 1], [], []>} : vector<160x256xbf16>, vector<256x512xbf16>, vector<160x512xf32> -> vector<160x512xf32>
    %7 = vector.extract_strided_slice %6 {offsets = [0, 0], sizes = [80, 512], strides = [1, 1]} : vector<160x512xf32> to vector<80x512xf32>
    %8 = vector.extract_strided_slice %6 {offsets = [80, 0], sizes = [80, 512], strides = [1, 1]} : vector<160x512xf32> to vector<80x512xf32>
    %9 = vector.extract_strided_slice %7 {offsets = [0, 0], sizes = [80, 256], strides = [1, 1]} : vector<80x512xf32> to vector<80x256xf32>
    %10 = vector.extract_strided_slice %7 {offsets = [0, 256], sizes = [80, 256], strides = [1, 1]} : vector<80x512xf32> to vector<80x256xf32>
    %11 = vector.extract_strided_slice %8 {offsets = [0, 0], sizes = [80, 256], strides = [1, 1]} : vector<80x512xf32> to vector<80x256xf32>
    %12 = vector.extract_strided_slice %8 {offsets = [0, 256], sizes = [80, 256], strides = [1, 1]} : vector<80x512xf32> to vector<80x256xf32>
    %13 = arith.mulf %9, %9 : vector<80x256xf32>
    %14 = arith.mulf %10, %10 : vector<80x256xf32>
    %15 = arith.addf %13, %14 : vector<80x256xf32>
    %cst_5 = arith.constant 9.99999993E-9 : f32
    %16 = vector.broadcast %cst_5 : f32 to vector<80x256xf32>
    %17 = arith.maximumf %15, %16 : vector<80x256xf32>
    %18 = math.sqrt %17 : vector<80x256xf32>
    %19 = arith.mulf %11, %11 : vector<80x256xf32>
    %20 = arith.mulf %12, %12 : vector<80x256xf32>
    %21 = arith.addf %19, %20 : vector<80x256xf32>
    %cst_6 = arith.constant 9.99999993E-9 : f32
    %22 = vector.broadcast %cst_6 : f32 to vector<80x256xf32>
    %23 = arith.maximumf %21, %22 : vector<80x256xf32>
    %24 = math.sqrt %23 : vector<80x256xf32>
    %25 = arith.subf %18, %24 : vector<80x256xf32>
    %26 = arith.truncf %25 : vector<80x256xf32> to vector<80x256xbf16>
    %c0_7 = arith.constant 0 : index
    %c0_8 = arith.constant 0 : index
    %27 = vector.load %arg4[%c0_7, %c0_8] : memref<256x128xbf16, #tpu.memory_space<vmem>>, vector<256x128xbf16>
    %cst_9 = arith.constant dense<0.000000e+00> : vector<80x128xf32>
    %28 = tpu.matmul %26, %27, %cst_9 {dimension_numbers = #tpu.dot_dimension_numbers<[1], [0], [0], [1], [0, 0, 1, 1], [], []>} : vector<80x256xbf16>, vector<256x128xbf16>, vector<80x128xf32> -> vector<80x128xf32>
    %c0_10 = arith.constant 0 : index
    %c0_11 = arith.constant 0 : index
    %c0_12 = arith.constant 0 : index
    %c0_13 = arith.constant 0 : index
    %29 = vector.load %arg5[%c0_10, %c0_11, %c0_12, %c0_13] : memref<1x2x80x128xf32, #tpu.memory_space<vmem>>, vector<1x1x80x128xf32>
    %30 = vector.shape_cast %29 : vector<1x1x80x128xf32> to vector<80x128xf32>
    %31 = math.absf %28 : vector<80x128xf32>
    %32 = arith.addf %30, %31 : vector<80x128xf32>
    %c0_14 = arith.constant 0 : index
    %c0_15 = arith.constant 0 : index
    %c0_16 = arith.constant 0 : index
    %c0_17 = arith.constant 0 : index
    %33 = vector.load %arg5[%c0_14, %c0_15, %c0_16, %c0_17] : memref<1x2x80x128xf32, #tpu.memory_space<vmem>>, vector<1x1x80x128xf32>
    %34 = vector.shape_cast %33 : vector<1x1x80x128xf32> to vector<80x128xf32>
    %35 = vector.shape_cast %32 : vector<80x128xf32> to vector<1x1x80x128xf32>
    tpu.vector_store %arg5[%c0_14, %c0_15, %c0_16, %c0_17], %35 {strides = array<i32>} : memref<1x2x80x128xf32, #tpu.memory_space<vmem>>, vector<1x1x80x128xf32>,
    %c0_18 = arith.constant 0 : index
    %c1 = arith.constant 1 : index
    %c0_19 = arith.constant 0 : index
    %c0_20 = arith.constant 0 : index
    %36 = vector.load %arg5[%c0_18, %c1, %c0_19, %c0_20] : memref<1x2x80x128xf32, #tpu.memory_space<vmem>>, vector<1x1x80x128xf32>
    %37 = vector.shape_cast %36 : vector<1x1x80x128xf32> to vector<80x128xf32>
    %38 = arith.mulf %28, %28 : vector<80x128xf32>
    %39 = arith.addf %37, %38 : vector<80x128xf32>
    %c0_21 = arith.constant 0 : index
    %c1_22 = arith.constant 1 : index
    %c0_23 = arith.constant 0 : index
    %c0_24 = arith.constant 0 : index
    %40 = vector.load %arg5[%c0_21, %c1_22, %c0_23, %c0_24] : memref<1x2x80x128xf32, #tpu.memory_space<vmem>>, vector<1x1x80x128xf32>
    %41 = vector.shape_cast %40 : vector<1x1x80x128xf32> to vector<80x128xf32>
    %42 = vector.shape_cast %39 : vector<80x128xf32> to vector<1x1x80x128xf32>
    tpu.vector_store %arg5[%c0_21, %c1_22, %c0_23, %c0_24], %42 {strides = array<i32>} : memref<1x2x80x128xf32, #tpu.memory_space<vmem>>, vector<1x1x80x128xf32>,
    return
  }
  func.func @transform_0(%arg0: i32, %arg1: i32) -> (i32, i32, i32) {
    %c1_i32 = arith.constant 1 : i32
    %0 = arith.muli %arg0, %c1_i32 : i32
    %1 = arith.addi %0, %arg1 : i32
    %c0_i32 = arith.constant 0 : i32
    %c0_i32_0 = arith.constant 0 : i32
    %c0_i32_1 = arith.constant 0 : i32
    return %c0_i32, %1, %c0_i32_0 : i32, i32, i32
  }
  func.func @transform_1(%arg0: i32, %arg1: i32) -> (i32, i32) {
    %c0_i32 = arith.constant 0 : i32
    %c0_i32_0 = arith.constant 0 : i32
    %c0_i32_1 = arith.constant 0 : i32
    return %c0_i32, %c0_i32_0 : i32, i32
  }
  func.func @transform_2(%arg0: i32, %arg1: i32) -> (i32, i32) {
    %c0_i32 = arith.constant 0 : i32
    %c0_i32_0 = arith.constant 0 : i32
    %c0_i32_1 = arith.constant 0 : i32
    return %c0_i32, %c0_i32_0 : i32, i32
  }
  func.func @transform_3(%arg0: i32, %arg1: i32) -> (i32, i32, i32, i32) {
    %c0_i32 = arith.constant 0 : i32
    %c0_i32_0 = arith.constant 0 : i32
    %c0_i32_1 = arith.constant 0 : i32
    %c0_i32_2 = arith.constant 0 : i32
    return %arg0, %c0_i32, %c0_i32_0, %c0_i32_1 : i32, i32, i32, i32
  }
}

</mosaic_0001>

<llo_original>
// kernel: tpu_custom_call.1
$region0: #{tpu_custom_call.1}
  #allocation0 [shape = 'u32[]', space=smem, size = 0x4, offset = 0x4, fixed_abs, tag = 'smem constant byte address 0x4 - core index']
  #allocation1 [shape = 'u32[144,128]{1,0:T(1,128)}', space=vmem, size = 0x12000, scoped, tag = 'internal scratch']
  %s0 = inlined_call_operand.hbm [shape: bf16[2,80,256], index: 0, kind: input, shape index: {}]
  %s1 = inlined_call_operand.hbm [shape: bf16[256,512], index: 1, kind: input, shape index: {}]
  %s2 = inlined_call_operand.hbm [shape: bf16[256,128], index: 2, kind: input, shape index: {}]
  %s3 = inlined_call_operand.hbm [shape: f32[1,2,80,128], index: 3, kind: output, shape index: {}]
  %s4 = sld [smem:[#allocation0]]
  $region38: #{tpu_custom_call.1} parent=0
    _
  %s6 = ssub.s32 1, %s4
  %s7 = scalar_select 0, %s6, %s4
  $region1: #{tpu_custom_call.1} parent=0
    #allocation2 [shape = 'u8[81920]{0}', space=vmem, size = 0x14000, scoped, tag = 'input window, operand 0, single buffered']
    #allocation3 [shape = 's32[1]{0}', space=sflag, size = 0x4, scoped, tag = 'scoped memory for tpu_custom_call.1']
    #allocation4 [shape = 's32[1]{0}', space=sflag, size = 0x4, scoped, tag = 'scoped memory for tpu_custom_call.1']
    #allocation5 [shape = 'u8[262144]{0}', space=vmem, size = 0x40000, scoped, tag = 'input window, operand 1, single buffered']
    #allocation6 [shape = 's32[1]{0}', space=sflag, size = 0x4, scoped, tag = 'scoped memory for tpu_custom_call.1']
    #allocation7 [shape = 'u8[65536]{0}', space=vmem, size = 0x10000, scoped, tag = 'input window, operand 2, single buffered']
    #allocation8 [shape = 'u8[81920]{0}', space=vmem, size = 0x14000, scoped, tag = 'output window, operand 0, single buffered']
    %8 = vsyncpa [#allocation3], 0
    %9 = vsyncpa [#allocation6], 0
    %10 = vsyncpa [#allocation4], 0
    // Predicated region
    $region2: #{tpu_custom_call.1} parent=1 // pred_check
      _
    $region3: #{tpu_custom_call.1} parent=1 // pred_check_branch
      %12 = sbr.rel (0) target = $region5
    $region4: #{tpu_custom_call.1} parent=1 // pred_region
      %s13 = sadd.s32 0, 0
      %s14 = smul.u32 10, %s13
      %s16 = ssub.s32 2560, 2560
      %17 = vsyncadd [#allocation3], %s16
      %s18 = smul.addr %s14, 2
      %s19 = smul.addr %s18, 64
      %s20 = scalar_lea.hbm %s0, %s19
      %s21 = sshll.u32 [#allocation2], 4
      %s22 = int_to_ptr.vmem [resolvable:$true] %s21
      %27 = dma.hbm_to_vmem [thread:$0]  %s20, 2560, %s22, [#allocation3], 128, 128, 8
    $region5: #{tpu_custom_call.1} parent=1 // pred_fallthru
      _
    // Predicated region
    $region6: #{tpu_custom_call.1} parent=1 // pred_check
      _
    $region7: #{tpu_custom_call.1} parent=1 // pred_check_branch
      %29 = sbr.rel (0) target = $region9
    $region8: #{tpu_custom_call.1} parent=1 // pred_region
      %s31 = ssub.s32 8192, 8192
      %32 = vsyncadd [#allocation6], %s31
      %s33 = sshll.u32 [#allocation5], 4
      %s34 = int_to_ptr.vmem [resolvable:$true] %s33
      %39 = dma.hbm_to_vmem [thread:$0]  %s1, 8192, %s34, [#allocation6], 256, 256, 16
    $region9: #{tpu_custom_call.1} parent=1 // pred_fallthru
      _
    // Predicated region
    $region10: #{tpu_custom_call.1} parent=1 // pred_check
      _
    $region11: #{tpu_custom_call.1} parent=1 // pred_check_branch
      %41 = sbr.rel (0) target = $region13
    $region12: #{tpu_custom_call.1} parent=1 // pred_region
      %s43 = ssub.s32 2048, 2048
      %44 = vsyncadd [#allocation6], %s43
      %s45 = sshll.u32 [#allocation7], 4
      %s46 = int_to_ptr.vmem [resolvable:$true] %s45
      %51 = dma.hbm_to_vmem [thread:$0]  %s2, 2048, %s46, [#allocation6], 64, 64, 4
    $region13: #{tpu_custom_call.1} parent=1 // pred_fallthru
      _
    // Predicated region
    $region14: #{tpu_custom_call.1} parent=1 // pred_check
      _
    $region15: #{tpu_custom_call.1} parent=1 // pred_check_branch
      %53 = sbr.rel (0) target = $region17
    $region16: #{tpu_custom_call.1} parent=1 // pred_region
      %54 = dma.done [#allocation3], 2560
    $region17: #{tpu_custom_call.1} parent=1 // pred_fallthru
      _
    // Predicated region
    $region18: #{tpu_custom_call.1} parent=1 // pred_check
      _
    $region19: #{tpu_custom_call.1} parent=1 // pred_check_branch
      %56 = sbr.rel (0) target = $region21
    $region20: #{tpu_custom_call.1} parent=1 // pred_region
      %57 = dma.done [#allocation6], 8192
    $region21: #{tpu_custom_call.1} parent=1 // pred_fallthru
      _
    // Predicated region
    $region22: #{tpu_custom_call.1} parent=1 // pred_check
      _
    $region23: #{tpu_custom_call.1} parent=1 // pred_check_branch
      %59 = sbr.rel (0) target = $region25
    $region24: #{tpu_custom_call.1} parent=1 // pred_region
      %60 = dma.done [#allocation6], 2048
    $region25: #{tpu_custom_call.1} parent=1 // pred_fallthru
      _
    %s61 = sadd.s32 0, 0
    %s62 = smul.u32 10, %s61
    %p64 = scmp.eq.s32.totalorder 0, 0
    // Predicated region
    $region26: #{tpu_custom_call.1} parent=1 // pred_check
      %p65 = pneg %p64
    $region27: #{tpu_custom_call.1} parent=1 // pred_check_branch
      %67 = sbr.rel (%p65) target = $region29
    $region28: #{tpu_custom_call.1} parent=1 // pred_region
      %68 = vst [vmem:[#allocation8] sm:$0xff] 0.0
      %69 = vst [vmem:[#allocation8 + $0x8] sm:$0xff] 0.0
      %70 = vst [vmem:[#allocation8 + $0x10] sm:$0xff] 0.0
      %71 = vst [vmem:[#allocation8 + $0x18] sm:$0xff] 0.0
      %72 = vst [vmem:[#allocation8 + $0x20] sm:$0xff] 0.0
      %73 = vst [vmem:[#allocation8 + $0x28] sm:$0xff] 0.0
      %74 = vst [vmem:[#allocation8 + $0x30] sm:$0xff] 0.0
      %75 = vst [vmem:[#allocation8 + $0x38] sm:$0xff] 0.0
      %76 = vst [vmem:[#allocation8 + $0x40] sm:$0xff] 0.0
      %77 = vst [vmem:[#allocation8 + $0x48] sm:$0xff] 0.0
      %78 = vst [vmem:[#allocation8 + $0x50] sm:$0xff] 0.0
      %79 = vst [vmem:[#allocation8 + $0x58] sm:$0xff] 0.0
      %80 = vst [vmem:[#allocation8 + $0x60] sm:$0xff] 0.0
      %81 = vst [vmem:[#allocation8 + $0x68] sm:$0xff] 0.0
      %82 = vst [vmem:[#allocation8 + $0x70] sm:$0xff] 0.0
      %83 = vst [vmem:[#allocation8 + $0x78] sm:$0xff] 0.0
      %84 = vst [vmem:[#allocation8 + $0x80] sm:$0xff] 0.0
      %85 = vst [vmem:[#allocation8 + $0x88] sm:$0xff] 0.0
      %86 = vst [vmem:[#allocation8 + $0x90] sm:$0xff] 0.0
      %87 = vst [vmem:[#allocation8 + $0x98] sm:$0xff] 0.0
    $region29: #{tpu_custom_call.1} parent=1 // pred_fallthru
      _
    %v88 = vld [vmem:[#allocation2] sm:$0xff]
    %v89 = vld [vmem:[#allocation2 + $0x8] sm:$0xff]
    %v90 = vld [vmem:[#allocation2 + $0x10] sm:$0xff]
    %v91 = vld [vmem:[#allocation2 + $0x18] sm:$0xff]
    %v92 = vld [vmem:[#allocation2 + $0x20] sm:$0xff]
    %v93 = vld [vmem:[#allocation2 + $0x28] sm:$0xff]
    %v94 = vld [vmem:[#allocation2 + $0x30] sm:$0xff]
    %v95 = vld [vmem:[#allocation2 + $0x38] sm:$0xff]
    %v96 = vld [vmem:[#allocation2 + $0x40] sm:$0xff]
    %v97 = vld [vmem:[#allocation2 + $0x48] sm:$0xff]
    %v98 = vld [vmem:[#allocation2 + $0x50] sm:$0xff]
    %v99 = vld [vmem:[#allocation2 + $0x58] sm:$0xff]
    %v100 = vld [vmem:[#allocation2 + $0x60] sm:$0xff]
    %v101 = vld [vmem:[#allocation2 + $0x68] sm:$0xff]
    %v102 = vld [vmem:[#allocation2 + $0x70] sm:$0xff]
    %v103 = vld [vmem:[#allocation2 + $0x78] sm:$0xff]
    %v104 = vld [vmem:[#allocation2 + $0x80] sm:$0xff]
    %v105 = vld [vmem:[#allocation2 + $0x88] sm:$0xff]
    %v106 = vld [vmem:[#allocation2 + $0x90] sm:$0xff]
    %v107 = vld [vmem:[#allocation2 + $0x98] sm:$0xff]
    %v108 = vld [vmem:[#allocation5] sm:$0xff]
    %v109 = vld [vmem:[#allocation5 + $0x8] sm:$0xff]
    %v110 = vld [vmem:[#allocation5 + $0x10] sm:$0xff]
    %v111 = vld [vmem:[#allocation5 + $0x18] sm:$0xff]
    %v112 = vld [vmem:[#allocation5 + $0x20] sm:$0xff]
    %v113 = vld [vmem:[#allocation5 + $0x28] sm:$0xff]
    %v114 = vld [vmem:[#allocation5 + $0x30] sm:$0xff]
    %v115 = vld [vmem:[#allocation5 + $0x38] sm:$0xff]
    %v116 = vld [vmem:[#allocation5 + $0x40] sm:$0xff]
    %v117 = vld [vmem:[#allocation5 + $0x48] sm:$0xff]
    %v118 = vld [vmem:[#allocation5 + $0x50] sm:$0xff]
    %v119 = vld [vmem:[#allocation5 + $0x58] sm:$0xff]
    %v120 = vld [vmem:[#allocation5 + $0x60] sm:$0xff]
    %v121 = vld [vmem:[#allocation5 + $0x68] sm:$0xff]
    %v122 = vld [vmem:[#allocation5 + $0x70] sm:$0xff]
    %v123 = vld [vmem:[#allocation5 + $0x78] sm:$0xff]
    %v124 = vld [vmem:[#allocation5 + $0x80] sm:$0xff]
    %v125 = vld [vmem:[#allocation5 + $0x88] sm:$0xff]
    %v126 = vld [vmem:[#allocation5 + $0x90] sm:$0xff]
    %v127 = vld [vmem:[#allocation5 + $0x98] sm:$0xff]
    %v128 = vld [vmem:[#allocation5 + $0xa0] sm:$0xff]
    %v129 = vld [vmem:[#allocation5 + $0xa8] sm:$0xff]
    %v130 = vld [vmem:[#allocation5 + $0xb0] sm:$0xff]
    %v131 = vld [vmem:[#allocation5 + $0xb8] sm:$0xff]
    %v132 = vld [vmem:[#allocation5 + $0xc0] sm:$0xff]
    %v133 = vld [vmem:[#allocation5 + $0xc8] sm:$0xff]
    %v134 = vld [vmem:[#allocation5 + $0xd0] sm:$0xff]
    %v135 = vld [vmem:[#allocation5 + $0xd8] sm:$0xff]
    %v136 = vld [vmem:[#allocation5 + $0xe0] sm:$0xff]
    %v137 = vld [vmem:[#allocation5 + $0xe8] sm:$0xff]
    %v138 = vld [vmem:[#allocation5 + $0xf0] sm:$0xff]
    %v139 = vld [vmem:[#allocation5 + $0xf8] sm:$0xff]
    %v140 = vld [vmem:[#allocation5 + $0x100] sm:$0xff]
    %v141 = vld [vmem:[#allocation5 + $0x108] sm:$0xff]
    %v142 = vld [vmem:[#allocation5 + $0x110] sm:$0xff]
    %v143 = vld [vmem:[#allocation5 + $0x118] sm:$0xff]
    %v144 = vld [vmem:[#allocation5 + $0x120] sm:$0xff]
    %v145 = vld [vmem:[#allocation5 + $0x128] sm:$0xff]
    %v146 = vld [vmem:[#allocation5 + $0x130] sm:$0xff]
    %v147 = vld [vmem:[#allocation5 + $0x138] sm:$0xff]
    %v148 = vld [vmem:[#allocation5 + $0x140] sm:$0xff]
    %v149 = vld [vmem:[#allocation5 + $0x148] sm:$0xff]
    %v150 = vld [vmem:[#allocation5 + $0x150] sm:$0xff]
    %v151 = vld [vmem:[#allocation5 + $0x158] sm:$0xff]
    %v152 = vld [vmem:[#allocation5 + $0x160] sm:$0xff]
    %v153 = vld [vmem:[#allocation5 + $0x168] sm:$0xff]
    %v154 = vld [vmem:[#allocation5 + $0x170] sm:$0xff]
    %v155 = vld [vmem:[#allocation5 + $0x178] sm:$0xff]
    %v156 = vld [vmem:[#allocation5 + $0x180] sm:$0xff]
    %v157 = vld [vmem:[#allocation5 + $0x188] sm:$0xff]
    %v158 = vld [vmem:[#allocation5 + $0x190] sm:$0xff]
    %v159 = vld [vmem:[#allocation5 + $0x198] sm:$0xff]
    %v160 = vld [vmem:[#allocation5 + $0x1a0] sm:$0xff]
    %v161 = vld [vmem:[#allocation5 + $0x1a8] sm:$0xff]
    %v162 = vld [vmem:[#allocation5 + $0x1b0] sm:$0xff]
    %v163 = vld [vmem:[#allocation5 + $0x1b8] sm:$0xff]
    %v164 = vld [vmem:[#allocation5 + $0x1c0] sm:$0xff]
    %v165 = vld [vmem:[#allocation5 + $0x1c8] sm:$0xff]
    %v166 = vld [vmem:[#allocation5 + $0x1d0] sm:$0xff]
    %v167 = vld [vmem:[#allocation5 + $0x1d8] sm:$0xff]
    %v168 = vld [vmem:[#allocation5 + $0x1e0] sm:$0xff]
    %v169 = vld [vmem:[#allocation5 + $0x1e8] sm:$0xff]
    %v170 = vld [vmem:[#allocation5 + $0x1f0] sm:$0xff]
    %v171 = vld [vmem:[#allocation5 + $0x1f8] sm:$0xff]
    %v192 = vunpack.c.l.b16 %v88
    %v193 = vunpack.c.h.b16 %v88
    %v194 = vunpack.c.l.b16 %v89
    %v195 = vunpack.c.h.b16 %v89
    %v196 = vunpack.c.l.b16 %v90
    %v197 = vunpack.c.h.b16 %v90
    %v198 = vunpack.c.l.b16 %v91
    %v199 = vunpack.c.h.b16 %v91
    %v200 = vunpack.c.l.b16 %v92
    %v201 = vunpack.c.h.b16 %v92
    %v202 = vunpack.c.l.b16 %v93
    %v203 = vunpack.c.h.b16 %v93
    %v204 = vunpack.c.l.b16 %v94
    %v205 = vunpack.c.h.b16 %v94
    %v206 = vunpack.c.l.b16 %v95
    %v207 = vunpack.c.h.b16 %v95
    %v208 = vunpack.c.l.b16 %v96
    %v209 = vunpack.c.h.b16 %v96
    %v210 = vunpack.c.l.b16 %v97
    %v211 = vunpack.c.h.b16 %v97
    %v212 = vunpack.c.l.b16 %v98
    %v213 = vunpack.c.h.b16 %v98
    %v214 = vunpack.c.l.b16 %v99
    %v215 = vunpack.c.h.b16 %v99
    %v216 = vunpack.c.l.b16 %v100
    %v217 = vunpack.c.h.b16 %v100
    %v218 = vunpack.c.l.b16 %v101
    %v219 = vunpack.c.h.b16 %v101
    %v220 = vunpack.c.l.b16 %v102
    %v221 = vunpack.c.h.b16 %v102
    %v222 = vunpack.c.l.b16 %v103
    %v223 = vunpack.c.h.b16 %v103
    %v224 = vunpack.c.l.b16 %v104
    %v225 = vunpack.c.h.b16 %v104
    %v226 = vunpack.c.l.b16 %v105
    %v227 = vunpack.c.h.b16 %v105
    %v228 = vunpack.c.l.b16 %v106
    %v229 = vunpack.c.h.b16 %v106
    %v230 = vunpack.c.l.b16 %v107
    %v231 = vunpack.c.h.b16 %v107
    %v232 = vpack.c.b16 %v194, %v192
    %v233 = vpack.c.b16 %v195, %v193
    %v234 = vpack.c.b16 %v198, %v196
    %v235 = vpack.c.b16 %v199, %v197
    %v236 = vpack.c.b16 %v202, %v200
    %v237 = vpack.c.b16 %v203, %v201
    %v238 = vpack.c.b16 %v206, %v204
    %v239 = vpack.c.b16 %v207, %v205
    %v240 = vpack.c.b16 %v210, %v208
    %v241 = vpack.c.b16 %v211, %v209
    %v242 = vpack.c.b16 %v214, %v212
    %v243 = vpack.c.b16 %v215, %v213
    %v244 = vpack.c.b16 %v218, %v216
    %v245 = vpack.c.b16 %v219, %v217
    %v246 = vpack.c.b16 %v222, %v220
    %v247 = vpack.c.b16 %v223, %v221
    %v248 = vpack.c.b16 %v226, %v224
    %v249 = vpack.c.b16 %v227, %v225
    %v250 = vpack.c.b16 %v230, %v228
    %v251 = vpack.c.b16 %v231, %v229
    %v336 = vunpack.c.l.b16 %v108
    %v337 = vunpack.c.h.b16 %v108
    %v338 = vunpack.c.l.b16 %v109
    %v339 = vunpack.c.h.b16 %v109
    %v340 = vunpack.c.l.b16 %v110
    %v341 = vunpack.c.h.b16 %v110
    %v342 = vunpack.c.l.b16 %v111
    %v343 = vunpack.c.h.b16 %v111
    %v344 = vunpack.c.l.b16 %v112
    %v345 = vunpack.c.h.b16 %v112
    %v346 = vunpack.c.l.b16 %v113
    %v347 = vunpack.c.h.b16 %v113
    %v348 = vunpack.c.l.b16 %v114
    %v349 = vunpack.c.h.b16 %v114
    %v350 = vunpack.c.l.b16 %v115
    %v351 = vunpack.c.h.b16 %v115
    %v352 = vunpack.c.l.b16 %v116
    %v353 = vunpack.c.h.b16 %v116
    %v354 = vunpack.c.l.b16 %v117
    %v355 = vunpack.c.h.b16 %v117
    %v356 = vunpack.c.l.b16 %v118
    %v357 = vunpack.c.h.b16 %v118
    %v358 = vunpack.c.l.b16 %v119
    %v359 = vunpack.c.h.b16 %v119
    %v360 = vunpack.c.l.b16 %v120
    %v361 = vunpack.c.h.b16 %v120
    %v362 = vunpack.c.l.b16 %v121
    %v363 = vunpack.c.h.b16 %v121
    %v364 = vunpack.c.l.b16 %v122
    %v365 = vunpack.c.h.b16 %v122
    %v366 = vunpack.c.l.b16 %v123
    %v367 = vunpack.c.h.b16 %v123
    %v368 = vunpack.c.l.b16 %v124
    %v369 = vunpack.c.h.b16 %v124
    %v370 = vunpack.c.l.b16 %v125
    %v371 = vunpack.c.h.b16 %v125
    %v372 = vunpack.c.l.b16 %v126
    %v373 = vunpack.c.h.b16 %v126
    %v374 = vunpack.c.l.b16 %v127
    %v375 = vunpack.c.h.b16 %v127
    %v376 = vunpack.c.l.b16 %v128
    %v377 = vunpack.c.h.b16 %v128
    %v378 = vunpack.c.l.b16 %v129
    %v379 = vunpack.c.h.b16 %v129
    %v380 = vunpack.c.l.b16 %v130
    %v381 = vunpack.c.h.b16 %v130
    %v382 = vunpack.c.l.b16 %v131
    %v383 = vunpack.c.h.b16 %v131
    %v384 = vunpack.c.l.b16 %v132
    %v385 = vunpack.c.h.b16 %v132
    %v386 = vunpack.c.l.b16 %v133
    %v387 = vunpack.c.h.b16 %v133
    %v388 = vunpack.c.l.b16 %v134
    %v389 = vunpack.c.h.b16 %v134
    %v390 = vunpack.c.l.b16 %v135
    %v391 = vunpack.c.h.b16 %v135
    %v392 = vunpack.c.l.b16 %v136
    %v393 = vunpack.c.h.b16 %v136
    %v394 = vunpack.c.l.b16 %v137
    %v395 = vunpack.c.h.b16 %v137
    %v396 = vunpack.c.l.b16 %v138
    %v397 = vunpack.c.h.b16 %v138
    %v398 = vunpack.c.l.b16 %v139
    %v399 = vunpack.c.h.b16 %v139
    %v400 = vunpack.c.l.b16 %v140
    %v401 = vunpack.c.h.b16 %v140
    %v402 = vunpack.c.l.b16 %v141
    %v403 = vunpack.c.h.b16 %v141
    %v404 = vunpack.c.l.b16 %v142
    %v405 = vunpack.c.h.b16 %v142
    %v406 = vunpack.c.l.b16 %v143
    %v407 = vunpack.c.h.b16 %v143
    %v408 = vunpack.c.l.b16 %v144
    %v409 = vunpack.c.h.b16 %v144
    %v410 = vunpack.c.l.b16 %v145
    %v411 = vunpack.c.h.b16 %v145
    %v412 = vunpack.c.l.b16 %v146
    %v413 = vunpack.c.h.b16 %v146
    %v414 = vunpack.c.l.b16 %v147
    %v415 = vunpack.c.h.b16 %v147
    %v416 = vunpack.c.l.b16 %v148
    %v417 = vunpack.c.h.b16 %v148
    %v418 = vunpack.c.l.b16 %v149
    %v419 = vunpack.c.h.b16 %v149
    %v420 = vunpack.c.l.b16 %v150
    %v421 = vunpack.c.h.b16 %v150
    %v422 = vunpack.c.l.b16 %v151
    %v423 = vunpack.c.h.b16 %v151
    %v424 = vunpack.c.l.b16 %v152
    %v425 = vunpack.c.h.b16 %v152
    %v426 = vunpack.c.l.b16 %v153
    %v427 = vunpack.c.h.b16 %v153
    %v428 = vunpack.c.l.b16 %v154
    %v429 = vunpack.c.h.b16 %v154
    %v430 = vunpack.c.l.b16 %v155
    %v431 = vunpack.c.h.b16 %v155
    %v432 = vunpack.c.l.b16 %v156
    %v433 = vunpack.c.h.b16 %v156
    %v434 = vunpack.c.l.b16 %v157
    %v435 = vunpack.c.h.b16 %v157
    %v436 = vunpack.c.l.b16 %v158
    %v437 = vunpack.c.h.b16 %v158
    %v438 = vunpack.c.l.b16 %v159
    %v439 = vunpack.c.h.b16 %v159
    %v440 = vunpack.c.l.b16 %v160
    %v441 = vunpack.c.h.b16 %v160
    %v442 = vunpack.c.l.b16 %v161
    %v443 = vunpack.c.h.b16 %v161
    %v444 = vunpack.c.l.b16 %v162
    %v445 = vunpack.c.h.b16 %v162
    %v446 = vunpack.c.l.b16 %v163
    %v447 = vunpack.c.h.b16 %v163
    %v448 = vunpack.c.l.b16 %v164
    %v449 = vunpack.c.h.b16 %v164
    %v450 = vunpack.c.l.b16 %v165
    %v451 = vunpack.c.h.b16 %v165
    %v452 = vunpack.c.l.b16 %v166
    %v453 = vunpack.c.h.b16 %v166
    %v454 = vunpack.c.l.b16 %v167
    %v455 = vunpack.c.h.b16 %v167
    %v456 = vunpack.c.l.b16 %v168
    %v457 = vunpack.c.h.b16 %v168
    %v458 = vunpack.c.l.b16 %v169
    %v459 = vunpack.c.h.b16 %v169
    %v460 = vunpack.c.l.b16 %v170
    %v461 = vunpack.c.h.b16 %v170
    %v462 = vunpack.c.l.b16 %v171
    %v463 = vunpack.c.h.b16 %v171
    %v464 = vpack.c.b16 %v340, %v336
    %v465 = vpack.c.b16 %v341, %v337
    %v466 = vpack.c.b16 %v342, %v338
    %v467 = vpack.c.b16 %v343, %v339
    %v468 = vpack.c.b16 %v348, %v344
    %v469 = vpack.c.b16 %v349, %v345
    %v470 = vpack.c.b16 %v350, %v346
    %v471 = vpack.c.b16 %v351, %v347
    %v472 = vpack.c.b16 %v356, %v352
    %v473 = vpack.c.b16 %v357, %v353
    %v474 = vpack.c.b16 %v358, %v354
    %v475 = vpack.c.b16 %v359, %v355
    %v476 = vpack.c.b16 %v364, %v360
    %v477 = vpack.c.b16 %v365, %v361
    %v478 = vpack.c.b16 %v366, %v362
    %v479 = vpack.c.b16 %v367, %v363
    %v480 = vpack.c.b16 %v372, %v368
    %v481 = vpack.c.b16 %v373, %v369
    %v482 = vpack.c.b16 %v374, %v370
    %v483 = vpack.c.b16 %v375, %v371
    %v484 = vpack.c.b16 %v380, %v376
    %v485 = vpack.c.b16 %v381, %v377
    %v486 = vpack.c.b16 %v382, %v378
    %v487 = vpack.c.b16 %v383, %v379
    %v488 = vpack.c.b16 %v388, %v384
    %v489 = vpack.c.b16 %v389, %v385
    %v490 = vpack.c.b16 %v390, %v386
    %v491 = vpack.c.b16 %v391, %v387
    %v492 = vpack.c.b16 %v396, %v392
    %v493 = vpack.c.b16 %v397, %v393
    %v494 = vpack.c.b16 %v398, %v394
    %v495 = vpack.c.b16 %v399, %v395
    %v496 = vpack.c.b16 %v404, %v400
    %v497 = vpack.c.b16 %v405, %v401
    %v498 = vpack.c.b16 %v406, %v402
    %v499 = vpack.c.b16 %v407, %v403
    %v500 = vpack.c.b16 %v412, %v408
    %v501 = vpack.c.b16 %v413, %v409
    %v502 = vpack.c.b16 %v414, %v410
    %v503 = vpack.c.b16 %v415, %v411
    %v504 = vpack.c.b16 %v420, %v416
    %v505 = vpack.c.b16 %v421, %v417
    %v506 = vpack.c.b16 %v422, %v418
    %v507 = vpack.c.b16 %v423, %v419
    %v508 = vpack.c.b16 %v428, %v424
    %v509 = vpack.c.b16 %v429, %v425
    %v510 = vpack.c.b16 %v430, %v426
    %v511 = vpack.c.b16 %v431, %v427
    %v512 = vpack.c.b16 %v436, %v432
    %v513 = vpack.c.b16 %v437, %v433
    %v514 = vpack.c.b16 %v438, %v434
    %v515 = vpack.c.b16 %v439, %v435
    %v516 = vpack.c.b16 %v444, %v440
    %v517 = vpack.c.b16 %v445, %v441
    %v518 = vpack.c.b16 %v446, %v442
    %v519 = vpack.c.b16 %v447, %v443
    %v520 = vpack.c.b16 %v452, %v448
    %v521 = vpack.c.b16 %v453, %v449
    %v522 = vpack.c.b16 %v454, %v450
    %v523 = vpack.c.b16 %v455, %v451
    %v524 = vpack.c.b16 %v460, %v456
    %v525 = vpack.c.b16 %v461, %v457
    %v526 = vpack.c.b16 %v462, %v458
    %v527 = vpack.c.b16 %v463, %v459
    %592 = vmatprep.subr.bf16.mxu0 %v493
    %593 = vmatpush1.bf16.msra.mxu0 %v492
    %594 = vmatprep.subr.bf16.mxu0 %v489
    %595 = vmatpush1.bf16.msra.mxu0 %v488
    %596 = vmatprep.subr.bf16.mxu0 %v485
    %597 = vmatpush1.bf16.msra.mxu0 %v484
    %598 = vmatprep.subr.bf16.mxu0 %v481
    %599 = vmatpush1.bf16.msra.mxu0 %v480
    %600 = vmatprep.subr.bf16.mxu0 %v477
    %601 = vmatpush1.bf16.msra.mxu0 %v476
    %602 = vmatprep.subr.bf16.mxu0 %v473
    %603 = vmatpush1.bf16.msra.mxu0 %v472
    %604 = vmatprep.subr.bf16.mxu0 %v469
    %605 = vmatpush1.bf16.msra.mxu0 %v468
    %606 = vmatprep.subr.bf16.mxu0 %v465
    %607 = vmatpush1.bf16.msra.mxu0 %v464
    %608 = vmatprep.subr.bf16.mxu0 %v525
    %609 = vmatpush2.bf16.msra.mxu0 %v524
    %610 = vmatprep.subr.bf16.mxu0 %v521
    %611 = vmatpush2.bf16.msra.mxu0 %v520
    %612 = vmatprep.subr.bf16.mxu0 %v517
    %613 = vmatpush2.bf16.msra.mxu0 %v516
    %614 = vmatprep.subr.bf16.mxu0 %v513
    %615 = vmatpush2.bf16.msra.mxu0 %v512
    %616 = vmatprep.subr.bf16.mxu0 %v509
    %617 = vmatpush2.bf16.msra.mxu0 %v508
    %618 = vmatprep.subr.bf16.mxu0 %v505
    %619 = vmatpush2.bf16.msra.mxu0 %v504
    %620 = vmatprep.subr.bf16.mxu0 %v501
    %621 = vmatpush2.bf16.msra.mxu0 %v500
    %622 = vmatprep.subr.bf16.mxu0 %v497
    %623 = vmatpush2.bf16.msra.mxu0 %v496
    %624 = vmatprep.mubr.bf16.mxu0 %v233
    %625 = vmatmul.mubr.bf16.gmra.mxu0 %v232
    %v626 = vpop.f32.mrf.mxu0
    %v627 = vadd.f32 0.0, %v626
    %v628 = vpop.f32.mrf.mxu0
    %v629 = vadd.f32 0.0, %v628
    %v630 = vpop.f32.mrf.mxu0
    %v631 = vadd.f32 0.0, %v630
    %v632 = vpop.f32.mrf.mxu0
    %v633 = vadd.f32 0.0, %v632
    %634 = vmatprep.mubr.bf16.mxu0 %v235
    %635 = vmatmul.mubr.bf16.gmra.mxu0 %v234
    %v636 = vpop.f32.mrf.mxu0
    %v637 = vadd.f32 0.0, %v636
    %v638 = vpop.f32.mrf.mxu0
    %v639 = vadd.f32 0.0, %v638
    %v640 = vpop.f32.mrf.mxu0
    %v641 = vadd.f32 0.0, %v640
    %v642 = vpop.f32.mrf.mxu0
    %v643 = vadd.f32 0.0, %v642
    %644 = vmatprep.mubr.bf16.mxu0 %v237
    %645 = vmatmul.mubr.bf16.gmra.mxu0 %v236
    %v646 = vpop.f32.mrf.mxu0
    %v647 = vadd.f32 0.0, %v646
    %v648 = vpop.f32.mrf.mxu0
    %v649 = vadd.f32 0.0, %v648
    %v650 = vpop.f32.mrf.mxu0
    %v651 = vadd.f32 0.0, %v650
    %v652 = vpop.f32.mrf.mxu0
    %v653 = vadd.f32 0.0, %v652
    %654 = vmatprep.mubr.bf16.mxu0 %v239
    %655 = vmatmul.mubr.bf16.gmra.mxu0 %v238
    %v656 = vpop.f32.mrf.mxu0
    %v657 = vadd.f32 0.0, %v656
    %v658 = vpop.f32.mrf.mxu0
    %v659 = vadd.f32 0.0, %v658
    %v660 = vpop.f32.mrf.mxu0
    %v661 = vadd.f32 0.0, %v660
    %v662 = vpop.f32.mrf.mxu0
    %v663 = vadd.f32 0.0, %v662
    %664 = vmatprep.mubr.bf16.mxu0 %v241
    %665 = vmatmul.mubr.bf16.gmra.mxu0 %v240
    %v666 = vpop.f32.mrf.mxu0
    %v667 = vadd.f32 0.0, %v666
    %v668 = vpop.f32.mrf.mxu0
    %v669 = vadd.f32 0.0, %v668
    %v670 = vpop.f32.mrf.mxu0
    %v671 = vadd.f32 0.0, %v670
    %v672 = vpop.f32.mrf.mxu0
    %v673 = vadd.f32 0.0, %v672
    %674 = vmatprep.mubr.bf16.mxu0 %v243
    %675 = vmatmul.mubr.bf16.gmra.mxu0 %v242
    %v676 = vpop.f32.mrf.mxu0
    %v677 = vadd.f32 0.0, %v676
    %v678 = vpop.f32.mrf.mxu0
    %v679 = vadd.f32 0.0, %v678
    %v680 = vpop.f32.mrf.mxu0
    %v681 = vadd.f32 0.0, %v680
    %v682 = vpop.f32.mrf.mxu0
    %v683 = vadd.f32 0.0, %v682
    %684 = vmatprep.mubr.bf16.mxu0 %v245
    %685 = vmatmul.mubr.bf16.gmra.mxu0 %v244
    %v686 = vpop.f32.mrf.mxu0
    %v687 = vadd.f32 0.0, %v686
    %v688 = vpop.f32.mrf.mxu0
    %v689 = vadd.f32 0.0, %v688
    %v690 = vpop.f32.mrf.mxu0
    %v691 = vadd.f32 0.0, %v690
    %v692 = vpop.f32.mrf.mxu0
    %v693 = vadd.f32 0.0, %v692
    %694 = vmatprep.mubr.bf16.mxu0 %v247
    %695 = vmatmul.mubr.bf16.gmra.mxu0 %v246
    %v696 = vpop.f32.mrf.mxu0
    %v697 = vadd.f32 0.0, %v696
    %v698 = vpop.f32.mrf.mxu0
    %v699 = vadd.f32 0.0, %v698
    %v700 = vpop.f32.mrf.mxu0
    %v701 = vadd.f32 0.0, %v700
    %v702 = vpop.f32.mrf.mxu0
    %v703 = vadd.f32 0.0, %v702
    %704 = vmatprep.mubr.bf16.mxu0 %v249
    %705 = vmatmul.mubr.bf16.gmra.mxu0 %v248
    %v706 = vpop.f32.mrf.mxu0
    %v707 = vadd.f32 0.0, %v706
    %v708 = vpop.f32.mrf.mxu0
    %v709 = vadd.f32 0.0, %v708
    %v710 = vpop.f32.mrf.mxu0
    %v711 = vadd.f32 0.0, %v710
    %v712 = vpop.f32.mrf.mxu0
    %v713 = vadd.f32 0.0, %v712
    %714 = vmatprep.mubr.bf16.mxu0 %v251
    %715 = vmatmul.mubr.bf16.gmra.mxu0 %v250
    %v716 = vpop.f32.mrf.mxu0
    %v717 = vadd.f32 0.0, %v716
    %v718 = vpop.f32.mrf.mxu0
    %v719 = vadd.f32 0.0, %v718
    %v720 = vpop.f32.mrf.mxu0
    %v721 = vadd.f32 0.0, %v720
    %v722 = vpop.f32.mrf.mxu0
    %v723 = vadd.f32 0.0, %v722
    %724 = vdwg.mxu0
    %725 = vmatprep.subr.bf16.mxu0 %v495
    %726 = vmatpush1.bf16.msra.mxu0 %v494
    %727 = vmatprep.subr.bf16.mxu0 %v491
    %728 = vmatpush1.bf16.msra.mxu0 %v490
    %729 = vmatprep.subr.bf16.mxu0 %v487
    %730 = vmatpush1.bf16.msra.mxu0 %v486
    %731 = vmatprep.subr.bf16.mxu0 %v483
    %732 = vmatpush1.bf16.msra.mxu0 %v482
    %733 = vmatprep.subr.bf16.mxu0 %v479
    %734 = vmatpush1.bf16.msra.mxu0 %v478
    %735 = vmatprep.subr.bf16.mxu0 %v475
    %736 = vmatpush1.bf16.msra.mxu0 %v474
    %737 = vmatprep.subr.bf16.mxu0 %v471
    %738 = vmatpush1.bf16.msra.mxu0 %v470
    %739 = vmatprep.subr.bf16.mxu0 %v467
    %740 = vmatpush1.bf16.msra.mxu0 %v466
    %741 = vmatprep.subr.bf16.mxu0 %v527
    %742 = vmatpush2.bf16.msra.mxu0 %v526
    %743 = vmatprep.subr.bf16.mxu0 %v523
    %744 = vmatpush2.bf16.msra.mxu0 %v522
    %745 = vmatprep.subr.bf16.mxu0 %v519
    %746 = vmatpush2.bf16.msra.mxu0 %v518
    %747 = vmatprep.subr.bf16.mxu0 %v515
    %748 = vmatpush2.bf16.msra.mxu0 %v514
    %749 = vmatprep.subr.bf16.mxu0 %v511
    %750 = vmatpush2.bf16.msra.mxu0 %v510
    %751 = vmatprep.subr.bf16.mxu0 %v507
    %752 = vmatpush2.bf16.msra.mxu0 %v506
    %753 = vmatprep.subr.bf16.mxu0 %v503
    %754 = vmatpush2.bf16.msra.mxu0 %v502
    %755 = vmatprep.subr.bf16.mxu0 %v499
    %756 = vmatpush2.bf16.msra.mxu0 %v498
    %757 = vmatprep.mubr.bf16.mxu0 %v233
    %758 = vmatmul.mubr.bf16.gmra.mxu0 %v232
    %v759 = vpop.f32.mrf.mxu0
    %v760 = vadd.f32 0.0, %v759
    %v761 = vpop.f32.mrf.mxu0
    %v762 = vadd.f32 0.0, %v761
    %v763 = vpop.f32.mrf.mxu0
    %v764 = vadd.f32 0.0, %v763
    %v765 = vpop.f32.mrf.mxu0
    %v766 = vadd.f32 0.0, %v765
    %767 = vmatprep.mubr.bf16.mxu0 %v235
    %768 = vmatmul.mubr.bf16.gmra.mxu0 %v234
    %v769 = vpop.f32.mrf.mxu0
    %v770 = vadd.f32 0.0, %v769
    %v771 = vpop.f32.mrf.mxu0
    %v772 = vadd.f32 0.0, %v771
    %v773 = vpop.f32.mrf.mxu0
    %v774 = vadd.f32 0.0, %v773
    %v775 = vpop.f32.mrf.mxu0
    %v776 = vadd.f32 0.0, %v775
    %777 = vmatprep.mubr.bf16.mxu0 %v237
    %778 = vmatmul.mubr.bf16.gmra.mxu0 %v236
    %v779 = vpop.f32.mrf.mxu0
    %v780 = vadd.f32 0.0, %v779
    %v781 = vpop.f32.mrf.mxu0
    %v782 = vadd.f32 0.0, %v781
    %v783 = vpop.f32.mrf.mxu0
    %v784 = vadd.f32 0.0, %v783
    %v785 = vpop.f32.mrf.mxu0
    %v786 = vadd.f32 0.0, %v785
    %787 = vmatprep.mubr.bf16.mxu0 %v239
    %788 = vmatmul.mubr.bf16.gmra.mxu0 %v238
    %v789 = vpop.f32.mrf.mxu0
    %v790 = vadd.f32 0.0, %v789
    %v791 = vpop.f32.mrf.mxu0
    %v792 = vadd.f32 0.0, %v791
    %v793 = vpop.f32.mrf.mxu0
    %v794 = vadd.f32 0.0, %v793
    %v795 = vpop.f32.mrf.mxu0
    %v796 = vadd.f32 0.0, %v795
    %797 = vmatprep.mubr.bf16.mxu0 %v241
    %798 = vmatmul.mubr.bf16.gmra.mxu0 %v240
    %v799 = vpop.f32.mrf.mxu0
    %v800 = vadd.f32 0.0, %v799
    %v801 = vpop.f32.mrf.mxu0
    %v802 = vadd.f32 0.0, %v801
    %v803 = vpop.f32.mrf.mxu0
    %v804 = vadd.f32 0.0, %v803
    %v805 = vpop.f32.mrf.mxu0
    %v806 = vadd.f32 0.0, %v805
    %807 = vmatprep.mubr.bf16.mxu0 %v243
    %808 = vmatmul.mubr.bf16.gmra.mxu0 %v242
    %v809 = vpop.f32.mrf.mxu0
    %v810 = vadd.f32 0.0, %v809
    %v811 = vpop.f32.mrf.mxu0
    %v812 = vadd.f32 0.0, %v811
    %v813 = vpop.f32.mrf.mxu0
    %v814 = vadd.f32 0.0, %v813
    %v815 = vpop.f32.mrf.mxu0
    %v816 = vadd.f32 0.0, %v815
    %817 = vmatprep.mubr.bf16.mxu0 %v245
    %818 = vmatmul.mubr.bf16.gmra.mxu0 %v244
    %v819 = vpop.f32.mrf.mxu0
    %v820 = vadd.f32 0.0, %v819
    %v821 = vpop.f32.mrf.mxu0
    %v822 = vadd.f32 0.0, %v821
    %v823 = vpop.f32.mrf.mxu0
    %v824 = vadd.f32 0.0, %v823
    %v825 = vpop.f32.mrf.mxu0
    %v826 = vadd.f32 0.0, %v825
    %827 = vmatprep.mubr.bf16.mxu0 %v247
    %828 = vmatmul.mubr.bf16.gmra.mxu0 %v246
    %v829 = vpop.f32.mrf.mxu0
    %v830 = vadd.f32 0.0, %v829
    %v831 = vpop.f32.mrf.mxu0
    %v832 = vadd.f32 0.0, %v831
    %v833 = vpop.f32.mrf.mxu0
    %v834 = vadd.f32 0.0, %v833
    %v835 = vpop.f32.mrf.mxu0
    %v836 = vadd.f32 0.0, %v835
    %837 = vmatprep.mubr.bf16.mxu0 %v249
    %838 = vmatmul.mubr.bf16.gmra.mxu0 %v248
    %v839 = vpop.f32.mrf.mxu0
    %v840 = vadd.f32 0.0, %v839
    %v841 = vpop.f32.mrf.mxu0
    %v842 = vadd.f32 0.0, %v841
    %v843 = vpop.f32.mrf.mxu0
    %v844 = vadd.f32 0.0, %v843
    %v845 = vpop.f32.mrf.mxu0
    %v846 = vadd.f32 0.0, %v845
    %847 = vmatprep.mubr.bf16.mxu0 %v251
    %848 = vmatmul.mubr.bf16.gmra.mxu0 %v250
    %v849 = vpop.f32.mrf.mxu0
    %v850 = vadd.f32 0.0, %v849
    %v851 = vpop.f32.mrf.mxu0
    %v852 = vadd.f32 0.0, %v851
    %v853 = vpop.f32.mrf.mxu0
    %v854 = vadd.f32 0.0, %v853
    %v855 = vpop.f32.mrf.mxu0
    %v856 = vadd.f32 0.0, %v855
    %857 = vdwg.mxu0
    %v858 = vmul.f32 %v627, %v627
    %v859 = vmul.f32 %v629, %v629
    %v860 = vmul.f32 %v631, %v631
    %v861 = vmul.f32 %v633, %v633
    %v862 = vmul.f32 %v637, %v637
    %v863 = vmul.f32 %v639, %v639
    %v864 = vmul.f32 %v641, %v641
    %v865 = vmul.f32 %v643, %v643
    %v866 = vmul.f32 %v647, %v647
    %v867 = vmul.f32 %v649, %v649
    %v868 = vmul.f32 %v651, %v651
    %v869 = vmul.f32 %v653, %v653
    %v870 = vmul.f32 %v657, %v657
    %v871 = vmul.f32 %v659, %v659
    %v872 = vmul.f32 %v661, %v661
    %v873 = vmul.f32 %v663, %v663
    %v874 = vmul.f32 %v667, %v667
    %v875 = vmul.f32 %v669, %v669
    %v876 = vmul.f32 %v671, %v671
    %v877 = vmul.f32 %v673, %v673
    %v878 = vmul.f32 %v760, %v760
    %v879 = vmul.f32 %v762, %v762
    %v880 = vmul.f32 %v764, %v764
    %v881 = vmul.f32 %v766, %v766
    %v882 = vmul.f32 %v770, %v770
    %v883 = vmul.f32 %v772, %v772
    %v884 = vmul.f32 %v774, %v774
    %v885 = vmul.f32 %v776, %v776
    %v886 = vmul.f32 %v780, %v780
    %v887 = vmul.f32 %v782, %v782
    %v888 = vmul.f32 %v784, %v784
    %v889 = vmul.f32 %v786, %v786
    %v890 = vmul.f32 %v790, %v790
    %v891 = vmul.f32 %v792, %v792
    %v892 = vmul.f32 %v794, %v794
    %v893 = vmul.f32 %v796, %v796
    %v894 = vmul.f32 %v800, %v800
    %v895 = vmul.f32 %v802, %v802
    %v896 = vmul.f32 %v804, %v804
    %v897 = vmul.f32 %v806, %v806
    %v898 = vadd.f32 %v858, %v878
    %v899 = vadd.f32 %v859, %v879
    %v900 = vadd.f32 %v860, %v880
    %v901 = vadd.f32 %v861, %v881
    %v902 = vadd.f32 %v862, %v882
    %v903 = vadd.f32 %v863, %v883
    %v904 = vadd.f32 %v864, %v884
    %v905 = vadd.f32 %v865, %v885
    %v906 = vadd.f32 %v866, %v886
    %v907 = vadd.f32 %v867, %v887
    %v908 = vadd.f32 %v868, %v888
    %v909 = vadd.f32 %v869, %v889
    %v910 = vadd.f32 %v870, %v890
    %v911 = vadd.f32 %v871, %v891
    %v912 = vadd.f32 %v872, %v892
    %v913 = vadd.f32 %v873, %v893
    %v914 = vadd.f32 %v874, %v894
    %v915 = vadd.f32 %v875, %v895
    %v916 = vadd.f32 %v876, %v896
    %v917 = vadd.f32 %v877, %v897
    %v918 = vmax.f32 %v898, 1e-08
    %v919 = vmax.f32 %v899, 1e-08
    %v920 = vmax.f32 %v900, 1e-08
    %v921 = vmax.f32 %v901, 1e-08
    %v922 = vmax.f32 %v902, 1e-08
    %v923 = vmax.f32 %v903, 1e-08
    %v924 = vmax.f32 %v904, 1e-08
    %v925 = vmax.f32 %v905, 1e-08
    %v926 = vmax.f32 %v906, 1e-08
    %v927 = vmax.f32 %v907, 1e-08
    %v928 = vmax.f32 %v908, 1e-08
    %v929 = vmax.f32 %v909, 1e-08
    %v930 = vmax.f32 %v910, 1e-08
    %v931 = vmax.f32 %v911, 1e-08
    %v932 = vmax.f32 %v912, 1e-08
    %v933 = vmax.f32 %v913, 1e-08
    %v934 = vmax.f32 %v914, 1e-08
    %v935 = vmax.f32 %v915, 1e-08
    %v936 = vmax.f32 %v916, 1e-08
    %v937 = vmax.f32 %v917, 1e-08
    %v938 = vrsqrt.pop %v918
    %v939 = vmul.f32 %v918, %v938
    %vm940 = vcmp.eq.f32.partialorder %v918, inf
    %v941 = vsel %vm940, %v918, %v939
    %vm942 = vcmp.eq.f32.partialorder %v918, 0.0
    %v943 = vand.u32 %v918, 2147483648
    %v944 = vsel %vm942, %v943, %v941
    %v945 = vrsqrt.pop %v919
    %v946 = vmul.f32 %v919, %v945
    %vm947 = vcmp.eq.f32.partialorder %v919, inf
    %v948 = vsel %vm947, %v919, %v946
    %vm949 = vcmp.eq.f32.partialorder %v919, 0.0
    %v950 = vand.u32 %v919, 2147483648
    %v951 = vsel %vm949, %v950, %v948
    %v952 = vrsqrt.pop %v920
    %v953 = vmul.f32 %v920, %v952
    %vm954 = vcmp.eq.f32.partialorder %v920, inf
    %v955 = vsel %vm954, %v920, %v953
    %vm956 = vcmp.eq.f32.partialorder %v920, 0.0
    %v957 = vand.u32 %v920, 2147483648
    %v958 = vsel %vm956, %v957, %v955
    %v959 = vrsqrt.pop %v921
    %v960 = vmul.f32 %v921, %v959
    %vm961 = vcmp.eq.f32.partialorder %v921, inf
    %v962 = vsel %vm961, %v921, %v960
    %vm963 = vcmp.eq.f32.partialorder %v921, 0.0
    %v964 = vand.u32 %v921, 2147483648
    %v965 = vsel %vm963, %v964, %v962
    %v966 = vrsqrt.pop %v922
    %v967 = vmul.f32 %v922, %v966
    %vm968 = vcmp.eq.f32.partialorder %v922, inf
    %v969 = vsel %vm968, %v922, %v967
    %vm970 = vcmp.eq.f32.partialorder %v922, 0.0
    %v971 = vand.u32 %v922, 2147483648
    %v972 = vsel %vm970, %v971, %v969
    %v973 = vrsqrt.pop %v923
    %v974 = vmul.f32 %v923, %v973
    %vm975 = vcmp.eq.f32.partialorder %v923, inf
    %v976 = vsel %vm975, %v923, %v974
    %vm977 = vcmp.eq.f32.partialorder %v923, 0.0
    %v978 = vand.u32 %v923, 2147483648
    %v979 = vsel %vm977, %v978, %v976
    %v980 = vrsqrt.pop %v924
    %v981 = vmul.f32 %v924, %v980
    %vm982 = vcmp.eq.f32.partialorder %v924, inf
    %v983 = vsel %vm982, %v924, %v981
    %vm984 = vcmp.eq.f32.partialorder %v924, 0.0
    %v985 = vand.u32 %v924, 2147483648
    %v986 = vsel %vm984, %v985, %v983
    %v987 = vrsqrt.pop %v925
    %v988 = vmul.f32 %v925, %v987
    %vm989 = vcmp.eq.f32.partialorder %v925, inf
    %v990 = vsel %vm989, %v925, %v988
    %vm991 = vcmp.eq.f32.partialorder %v925, 0.0
    %v992 = vand.u32 %v925, 2147483648
    %v993 = vsel %vm991, %v992, %v990
    %v994 = vrsqrt.pop %v926
    %v995 = vmul.f32 %v926, %v994
    %vm996 = vcmp.eq.f32.partialorder %v926, inf
    %v997 = vsel %vm996, %v926, %v995
    %vm998 = vcmp.eq.f32.partialorder %v926, 0.0
    %v999 = vand.u32 %v926, 2147483648
    %v1000 = vsel %vm998, %v999, %v997
    %v1001 = vrsqrt.pop %v927
    %v1002 = vmul.f32 %v927, %v1001
    %vm1003 = vcmp.eq.f32.partialorder %v927, inf
    %v1004 = vsel %vm1003, %v927, %v1002
    %vm1005 = vcmp.eq.f32.partialorder %v927, 0.0
    %v1006 = vand.u32 %v927, 2147483648
    %v1007 = vsel %vm1005, %v1006, %v1004
    %v1008 = vrsqrt.pop %v928
    %v1009 = vmul.f32 %v928, %v1008
    %vm1010 = vcmp.eq.f32.partialorder %v928, inf
    %v1011 = vsel %vm1010, %v928, %v1009
    %vm1012 = vcmp.eq.f32.partialorder %v928, 0.0
    %v1013 = vand.u32 %v928, 2147483648
    %v1014 = vsel %vm1012, %v1013, %v1011
    %v1015 = vrsqrt.pop %v929
    %v1016 = vmul.f32 %v929, %v1015
    %vm1017 = vcmp.eq.f32.partialorder %v929, inf
    %v1018 = vsel %vm1017, %v929, %v1016
    %vm1019 = vcmp.eq.f32.partialorder %v929, 0.0
    %v1020 = vand.u32 %v929, 2147483648
    %v1021 = vsel %vm1019, %v1020, %v1018
    %v1022 = vrsqrt.pop %v930
    %v1023 = vmul.f32 %v930, %v1022
    %vm1024 = vcmp.eq.f32.partialorder %v930, inf
    %v1025 = vsel %vm1024, %v930, %v1023
    %vm1026 = vcmp.eq.f32.partialorder %v930, 0.0
    %v1027 = vand.u32 %v930, 2147483648
    %v1028 = vsel %vm1026, %v1027, %v1025
    %v1029 = vrsqrt.pop %v931
    %v1030 = vmul.f32 %v931, %v1029
    %vm1031 = vcmp.eq.f32.partialorder %v931, inf
    %v1032 = vsel %vm1031, %v931, %v1030
    %vm1033 = vcmp.eq.f32.partialorder %v931, 0.0
    %v1034 = vand.u32 %v931, 2147483648
    %v1035 = vsel %vm1033, %v1034, %v1032
    %v1036 = vrsqrt.pop %v932
    %v1037 = vmul.f32 %v932, %v1036
    %vm1038 = vcmp.eq.f32.partialorder %v932, inf
    %v1039 = vsel %vm1038, %v932, %v1037
    %vm1040 = vcmp.eq.f32.partialorder %v932, 0.0
    %v1041 = vand.u32 %v932, 2147483648
    %v1042 = vsel %vm1040, %v1041, %v1039
    %v1043 = vrsqrt.pop %v933
    %v1044 = vmul.f32 %v933, %v1043
    %vm1045 = vcmp.eq.f32.partialorder %v933, inf
    %v1046 = vsel %vm1045, %v933, %v1044
    %vm1047 = vcmp.eq.f32.partialorder %v933, 0.0
    %v1048 = vand.u32 %v933, 2147483648
    %v1049 = vsel %vm1047, %v1048, %v1046
    %v1050 = vrsqrt.pop %v934
    %v1051 = vmul.f32 %v934, %v1050
    %vm1052 = vcmp.eq.f32.partialorder %v934, inf
    %v1053 = vsel %vm1052, %v934, %v1051
    %vm1054 = vcmp.eq.f32.partialorder %v934, 0.0
    %v1055 = vand.u32 %v934, 2147483648
    %v1056 = vsel %vm1054, %v1055, %v1053
    %v1057 = vrsqrt.pop %v935
    %v1058 = vmul.f32 %v935, %v1057
    %vm1059 = vcmp.eq.f32.partialorder %v935, inf
    %v1060 = vsel %vm1059, %v935, %v1058
    %vm1061 = vcmp.eq.f32.partialorder %v935, 0.0
    %v1062 = vand.u32 %v935, 2147483648
    %v1063 = vsel %vm1061, %v1062, %v1060
    %v1064 = vrsqrt.pop %v936
    %v1065 = vmul.f32 %v936, %v1064
    %vm1066 = vcmp.eq.f32.partialorder %v936, inf
    %v1067 = vsel %vm1066, %v936, %v1065
    %vm1068 = vcmp.eq.f32.partialorder %v936, 0.0
    %v1069 = vand.u32 %v936, 2147483648
    %v1070 = vsel %vm1068, %v1069, %v1067
    %v1071 = vrsqrt.pop %v937
    %v1072 = vmul.f32 %v937, %v1071
    %vm1073 = vcmp.eq.f32.partialorder %v937, inf
    %v1074 = vsel %vm1073, %v937, %v1072
    %vm1075 = vcmp.eq.f32.partialorder %v937, 0.0
    %v1076 = vand.u32 %v937, 2147483648
    %v1077 = vsel %vm1075, %v1076, %v1074
    %v1078 = vmul.f32 %v677, %v677
    %v1079 = vmul.f32 %v679, %v679
    %v1080 = vmul.f32 %v681, %v681
    %v1081 = vmul.f32 %v683, %v683
    %v1082 = vmul.f32 %v687, %v687
    %v1083 = vmul.f32 %v689, %v689
    %v1084 = vmul.f32 %v691, %v691
    %v1085 = vmul.f32 %v693, %v693
    %v1086 = vmul.f32 %v697, %v697
    %v1087 = vmul.f32 %v699, %v699
    %v1088 = vmul.f32 %v701, %v701
    %v1089 = vmul.f32 %v703, %v703
    %v1090 = vmul.f32 %v707, %v707
    %v1091 = vmul.f32 %v709, %v709
    %v1092 = vmul.f32 %v711, %v711
    %v1093 = vmul.f32 %v713, %v713
    %v1094 = vmul.f32 %v717, %v717
    %v1095 = vmul.f32 %v719, %v719
    %v1096 = vmul.f32 %v721, %v721
    %v1097 = vmul.f32 %v723, %v723
    %v1098 = vmul.f32 %v810, %v810
    %v1099 = vmul.f32 %v812, %v812
    %v1100 = vmul.f32 %v814, %v814
    %v1101 = vmul.f32 %v816, %v816
    %v1102 = vmul.f32 %v820, %v820
    %v1103 = vmul.f32 %v822, %v822
    %v1104 = vmul.f32 %v824, %v824
    %v1105 = vmul.f32 %v826, %v826
    %v1106 = vmul.f32 %v830, %v830
    %v1107 = vmul.f32 %v832, %v832
    %v1108 = vmul.f32 %v834, %v834
    %v1109 = vmul.f32 %v836, %v836
    %v1110 = vmul.f32 %v840, %v840
    %v1111 = vmul.f32 %v842, %v842
    %v1112 = vmul.f32 %v844, %v844
    %v1113 = vmul.f32 %v846, %v846
    %v1114 = vmul.f32 %v850, %v850
    %v1115 = vmul.f32 %v852, %v852
    %v1116 = vmul.f32 %v854, %v854
    %v1117 = vmul.f32 %v856, %v856
    %v1118 = vadd.f32 %v1078, %v1098
    %v1119 = vadd.f32 %v1079, %v1099
    %v1120 = vadd.f32 %v1080, %v1100
    %v1121 = vadd.f32 %v1081, %v1101
    %v1122 = vadd.f32 %v1082, %v1102
    %v1123 = vadd.f32 %v1083, %v1103
    %v1124 = vadd.f32 %v1084, %v1104
    %v1125 = vadd.f32 %v1085, %v1105
    %v1126 = vadd.f32 %v1086, %v1106
    %v1127 = vadd.f32 %v1087, %v1107
    %v1128 = vadd.f32 %v1088, %v1108
    %v1129 = vadd.f32 %v1089, %v1109
    %v1130 = vadd.f32 %v1090, %v1110
    %v1131 = vadd.f32 %v1091, %v1111
    %v1132 = vadd.f32 %v1092, %v1112
    %v1133 = vadd.f32 %v1093, %v1113
    %v1134 = vadd.f32 %v1094, %v1114
    %v1135 = vadd.f32 %v1095, %v1115
    %v1136 = vadd.f32 %v1096, %v1116
    %v1137 = vadd.f32 %v1097, %v1117
    %v1138 = vmax.f32 %v1118, 1e-08
    %v1139 = vmax.f32 %v1119, 1e-08
    %v1140 = vmax.f32 %v1120, 1e-08
    %v1141 = vmax.f32 %v1121, 1e-08
    %v1142 = vmax.f32 %v1122, 1e-08
    %v1143 = vmax.f32 %v1123, 1e-08
    %v1144 = vmax.f32 %v1124, 1e-08
    %v1145 = vmax.f32 %v1125, 1e-08
    %v1146 = vmax.f32 %v1126, 1e-08
    %v1147 = vmax.f32 %v1127, 1e-08
    %v1148 = vmax.f32 %v1128, 1e-08
    %v1149 = vmax.f32 %v1129, 1e-08
    %v1150 = vmax.f32 %v1130, 1e-08
    %v1151 = vmax.f32 %v1131, 1e-08
    %v1152 = vmax.f32 %v1132, 1e-08
    %v1153 = vmax.f32 %v1133, 1e-08
    %v1154 = vmax.f32 %v1134, 1e-08
    %v1155 = vmax.f32 %v1135, 1e-08
    %v1156 = vmax.f32 %v1136, 1e-08
    %v1157 = vmax.f32 %v1137, 1e-08
    %v1158 = vrsqrt.pop %v1138
    %v1159 = vmul.f32 %v1138, %v1158
    %vm1160 = vcmp.eq.f32.partialorder %v1138, inf
    %v1161 = vsel %vm1160, %v1138, %v1159
    %vm1162 = vcmp.eq.f32.partialorder %v1138, 0.0
    %v1163 = vand.u32 %v1138, 2147483648
    %v1164 = vsel %vm1162, %v1163, %v1161
    %v1165 = vrsqrt.pop %v1139
    %v1166 = vmul.f32 %v1139, %v1165
    %vm1167 = vcmp.eq.f32.partialorder %v1139, inf
    %v1168 = vsel %vm1167, %v1139, %v1166
    %vm1169 = vcmp.eq.f32.partialorder %v1139, 0.0
    %v1170 = vand.u32 %v1139, 2147483648
    %v1171 = vsel %vm1169, %v1170, %v1168
    %v1172 = vrsqrt.pop %v1140
    %v1173 = vmul.f32 %v1140, %v1172
    %vm1174 = vcmp.eq.f32.partialorder %v1140, inf
    %v1175 = vsel %vm1174, %v1140, %v1173
    %vm1176 = vcmp.eq.f32.partialorder %v1140, 0.0
    %v1177 = vand.u32 %v1140, 2147483648
    %v1178 = vsel %vm1176, %v1177, %v1175
    %v1179 = vrsqrt.pop %v1141
    %v1180 = vmul.f32 %v1141, %v1179
    %vm1181 = vcmp.eq.f32.partialorder %v1141, inf
    %v1182 = vsel %vm1181, %v1141, %v1180
    %vm1183 = vcmp.eq.f32.partialorder %v1141, 0.0
    %v1184 = vand.u32 %v1141, 2147483648
    %v1185 = vsel %vm1183, %v1184, %v1182
    %v1186 = vrsqrt.pop %v1142
    %v1187 = vmul.f32 %v1142, %v1186
    %vm1188 = vcmp.eq.f32.partialorder %v1142, inf
    %v1189 = vsel %vm1188, %v1142, %v1187
    %vm1190 = vcmp.eq.f32.partialorder %v1142, 0.0
    %v1191 = vand.u32 %v1142, 2147483648
    %v1192 = vsel %vm1190, %v1191, %v1189
    %v1193 = vrsqrt.pop %v1143
    %v1194 = vmul.f32 %v1143, %v1193
    %vm1195 = vcmp.eq.f32.partialorder %v1143, inf
    %v1196 = vsel %vm1195, %v1143, %v1194
    %vm1197 = vcmp.eq.f32.partialorder %v1143, 0.0
    %v1198 = vand.u32 %v1143, 2147483648
    %v1199 = vsel %vm1197, %v1198, %v1196
    %v1200 = vrsqrt.pop %v1144
    %v1201 = vmul.f32 %v1144, %v1200
    %vm1202 = vcmp.eq.f32.partialorder %v1144, inf
    %v1203 = vsel %vm1202, %v1144, %v1201
    %vm1204 = vcmp.eq.f32.partialorder %v1144, 0.0
    %v1205 = vand.u32 %v1144, 2147483648
    %v1206 = vsel %vm1204, %v1205, %v1203
    %v1207 = vrsqrt.pop %v1145
    %v1208 = vmul.f32 %v1145, %v1207
    %vm1209 = vcmp.eq.f32.partialorder %v1145, inf
    %v1210 = vsel %vm1209, %v1145, %v1208
    %vm1211 = vcmp.eq.f32.partialorder %v1145, 0.0
    %v1212 = vand.u32 %v1145, 2147483648
    %v1213 = vsel %vm1211, %v1212, %v1210
    %v1214 = vrsqrt.pop %v1146
    %v1215 = vmul.f32 %v1146, %v1214
    %vm1216 = vcmp.eq.f32.partialorder %v1146, inf
    %v1217 = vsel %vm1216, %v1146, %v1215
    %vm1218 = vcmp.eq.f32.partialorder %v1146, 0.0
    %v1219 = vand.u32 %v1146, 2147483648
    %v1220 = vsel %vm1218, %v1219, %v1217
    %v1221 = vrsqrt.pop %v1147
    %v1222 = vmul.f32 %v1147, %v1221
    %vm1223 = vcmp.eq.f32.partialorder %v1147, inf
    %v1224 = vsel %vm1223, %v1147, %v1222
    %vm1225 = vcmp.eq.f32.partialorder %v1147, 0.0
    %v1226 = vand.u32 %v1147, 2147483648
    %v1227 = vsel %vm1225, %v1226, %v1224
    %v1228 = vrsqrt.pop %v1148
    %v1229 = vmul.f32 %v1148, %v1228
    %vm1230 = vcmp.eq.f32.partialorder %v1148, inf
    %v1231 = vsel %vm1230, %v1148, %v1229
    %vm1232 = vcmp.eq.f32.partialorder %v1148, 0.0
    %v1233 = vand.u32 %v1148, 2147483648
    %v1234 = vsel %vm1232, %v1233, %v1231
    %v1235 = vrsqrt.pop %v1149
    %v1236 = vmul.f32 %v1149, %v1235
    %vm1237 = vcmp.eq.f32.partialorder %v1149, inf
    %v1238 = vsel %vm1237, %v1149, %v1236
    %vm1239 = vcmp.eq.f32.partialorder %v1149, 0.0
    %v1240 = vand.u32 %v1149, 2147483648
    %v1241 = vsel %vm1239, %v1240, %v1238
    %v1242 = vrsqrt.pop %v1150
    %v1243 = vmul.f32 %v1150, %v1242
    %vm1244 = vcmp.eq.f32.partialorder %v1150, inf
    %v1245 = vsel %vm1244, %v1150, %v1243
    %vm1246 = vcmp.eq.f32.partialorder %v1150, 0.0
    %v1247 = vand.u32 %v1150, 2147483648
    %v1248 = vsel %vm1246, %v1247, %v1245
    %v1249 = vrsqrt.pop %v1151
    %v1250 = vmul.f32 %v1151, %v1249
    %vm1251 = vcmp.eq.f32.partialorder %v1151, inf
    %v1252 = vsel %vm1251, %v1151, %v1250
    %vm1253 = vcmp.eq.f32.partialorder %v1151, 0.0
    %v1254 = vand.u32 %v1151, 2147483648
    %v1255 = vsel %vm1253, %v1254, %v1252
    %v1256 = vrsqrt.pop %v1152
    %v1257 = vmul.f32 %v1152, %v1256
    %vm1258 = vcmp.eq.f32.partialorder %v1152, inf
    %v1259 = vsel %vm1258, %v1152, %v1257
    %vm1260 = vcmp.eq.f32.partialorder %v1152, 0.0
    %v1261 = vand.u32 %v1152, 2147483648
    %v1262 = vsel %vm1260, %v1261, %v1259
    %v1263 = vrsqrt.pop %v1153
    %v1264 = vmul.f32 %v1153, %v1263
    %vm1265 = vcmp.eq.f32.partialorder %v1153, inf
    %v1266 = vsel %vm1265, %v1153, %v1264
    %vm1267 = vcmp.eq.f32.partialorder %v1153, 0.0
    %v1268 = vand.u32 %v1153, 2147483648
    %v1269 = vsel %vm1267, %v1268, %v1266
    %v1270 = vrsqrt.pop %v1154
    %v1271 = vmul.f32 %v1154, %v1270
    %vm1272 = vcmp.eq.f32.partialorder %v1154, inf
    %v1273 = vsel %vm1272, %v1154, %v1271
    %vm1274 = vcmp.eq.f32.partialorder %v1154, 0.0
    %v1275 = vand.u32 %v1154, 2147483648
    %v1276 = vsel %vm1274, %v1275, %v1273
    %v1277 = vrsqrt.pop %v1155
    %v1278 = vmul.f32 %v1155, %v1277
    %vm1279 = vcmp.eq.f32.partialorder %v1155, inf
    %v1280 = vsel %vm1279, %v1155, %v1278
    %vm1281 = vcmp.eq.f32.partialorder %v1155, 0.0
    %v1282 = vand.u32 %v1155, 2147483648
    %v1283 = vsel %vm1281, %v1282, %v1280
    %v1284 = vrsqrt.pop %v1156
    %v1285 = vmul.f32 %v1156, %v1284
    %vm1286 = vcmp.eq.f32.partialorder %v1156, inf
    %v1287 = vsel %vm1286, %v1156, %v1285
    %vm1288 = vcmp.eq.f32.partialorder %v1156, 0.0
    %v1289 = vand.u32 %v1156, 2147483648
    %v1290 = vsel %vm1288, %v1289, %v1287
    %v1291 = vrsqrt.pop %v1157
    %v1292 = vmul.f32 %v1157, %v1291
    %vm1293 = vcmp.eq.f32.partialorder %v1157, inf
    %v1294 = vsel %vm1293, %v1157, %v1292
    %vm1295 = vcmp.eq.f32.partialorder %v1157, 0.0
    %v1296 = vand.u32 %v1157, 2147483648
    %v1297 = vsel %vm1295, %v1296, %v1294
    %v1298 = vsub.f32 %v944, %v1164
    %v1299 = vsub.f32 %v951, %v1171
    %v1300 = vsub.f32 %v958, %v1178
    %v1301 = vsub.f32 %v965, %v1185
    %v1302 = vsub.f32 %v972, %v1192
    %v1303 = vsub.f32 %v979, %v1199
    %v1304 = vsub.f32 %v986, %v1206
    %v1305 = vsub.f32 %v993, %v1213
    %v1306 = vsub.f32 %v1000, %v1220
    %v1307 = vsub.f32 %v1007, %v1227
    %v1308 = vsub.f32 %v1014, %v1234
    %v1309 = vsub.f32 %v1021, %v1241
    %v1310 = vsub.f32 %v1028, %v1248
    %v1311 = vsub.f32 %v1035, %v1255
    %v1312 = vsub.f32 %v1042, %v1262
    %v1313 = vsub.f32 %v1049, %v1269
    %v1314 = vsub.f32 %v1056, %v1276
    %v1315 = vsub.f32 %v1063, %v1283
    %v1316 = vsub.f32 %v1070, %v1290
    %v1317 = vsub.f32 %v1077, %v1297
    %v1318 = vpack.c.bf16 %v1300, %v1298
    %v1319 = vpack.c.bf16 %v1301, %v1299
    %v1320 = vpack.c.bf16 %v1304, %v1302
    %v1321 = vpack.c.bf16 %v1305, %v1303
    %v1322 = vpack.c.bf16 %v1308, %v1306
    %v1323 = vpack.c.bf16 %v1309, %v1307
    %v1324 = vpack.c.bf16 %v1312, %v1310
    %v1325 = vpack.c.bf16 %v1313, %v1311
    %v1326 = vpack.c.bf16 %v1316, %v1314
    %v1327 = vpack.c.bf16 %v1317, %v1315
    %v1328 = vld [vmem:[#allocation7] sm:$0xf]
    %v1329 = vld [vmem:[#allocation7 + $0x4] sm:$0xf]
    %v1330 = vld [vmem:[#allocation7 + $0x8] sm:$0xf]
    %v1331 = vld [vmem:[#allocation7 + $0xc] sm:$0xf]
    %v1332 = vld [vmem:[#allocation7 + $0x10] sm:$0xf]
    %v1333 = vld [vmem:[#allocation7 + $0x14] sm:$0xf]
    %v1334 = vld [vmem:[#allocation7 + $0x18] sm:$0xf]
    %v1335 = vld [vmem:[#allocation7 + $0x1c] sm:$0xf]
    %v1336 = vld [vmem:[#allocation7 + $0x20] sm:$0xf]
    %v1337 = vld [vmem:[#allocation7 + $0x24] sm:$0xf]
    %v1338 = vld [vmem:[#allocation7 + $0x28] sm:$0xf]
    %v1339 = vld [vmem:[#allocation7 + $0x2c] sm:$0xf]
    %v1340 = vld [vmem:[#allocation7 + $0x30] sm:$0xf]
    %v1341 = vld [vmem:[#allocation7 + $0x34] sm:$0xf]
    %v1342 = vld [vmem:[#allocation7 + $0x38] sm:$0xf]
    %v1343 = vld [vmem:[#allocation7 + $0x3c] sm:$0xf]
    %v1344 = vld [vmem:[#allocation7 + $0x40] sm:$0xf]
    %v1345 = vld [vmem:[#allocation7 + $0x44] sm:$0xf]
    %v1346 = vld [vmem:[#allocation7 + $0x48] sm:$0xf]
    %v1347 = vld [vmem:[#allocation7 + $0x4c] sm:$0xf]
    %v1348 = vld [vmem:[#allocation7 + $0x50] sm:$0xf]
    %v1349 = vld [vmem:[#allocation7 + $0x54] sm:$0xf]
    %v1350 = vld [vmem:[#allocation7 + $0x58] sm:$0xf]
    %v1351 = vld [vmem:[#allocation7 + $0x5c] sm:$0xf]
    %v1352 = vld [vmem:[#allocation7 + $0x60] sm:$0xf]
    %v1353 = vld [vmem:[#allocation7 + $0x64] sm:$0xf]
    %v1354 = vld [vmem:[#allocation7 + $0x68] sm:$0xf]
    %v1355 = vld [vmem:[#allocation7 + $0x6c] sm:$0xf]
    %v1356 = vld [vmem:[#allocation7 + $0x70] sm:$0xf]
    %v1357 = vld [vmem:[#allocation7 + $0x74] sm:$0xf]
    %v1358 = vld [vmem:[#allocation7 + $0x78] sm:$0xf]
    %v1359 = vld [vmem:[#allocation7 + $0x7c] sm:$0xf]
    %v1392 = vunpack.c.l.b16 %v1328
    %v1393 = vunpack.c.l.b16 %v1329
    %v1394 = vunpack.c.l.b16 %v1330
    %v1395 = vunpack.c.l.b16 %v1331
    %v1396 = vunpack.c.l.b16 %v1332
    %v1397 = vunpack.c.l.b16 %v1333
    %v1398 = vunpack.c.l.b16 %v1334
    %v1399 = vunpack.c.l.b16 %v1335
    %v1400 = vunpack.c.l.b16 %v1336
    %v1401 = vunpack.c.l.b16 %v1337
    %v1402 = vunpack.c.l.b16 %v1338
    %v1403 = vunpack.c.l.b16 %v1339
    %v1404 = vunpack.c.l.b16 %v1340
    %v1405 = vunpack.c.l.b16 %v1341
    %v1406 = vunpack.c.l.b16 %v1342
    %v1407 = vunpack.c.l.b16 %v1343
    %v1408 = vunpack.c.l.b16 %v1344
    %v1409 = vunpack.c.l.b16 %v1345
    %v1410 = vunpack.c.l.b16 %v1346
    %v1411 = vunpack.c.l.b16 %v1347
    %v1412 = vunpack.c.l.b16 %v1348
    %v1413 = vunpack.c.l.b16 %v1349
    %v1414 = vunpack.c.l.b16 %v1350
    %v1415 = vunpack.c.l.b16 %v1351
    %v1416 = vunpack.c.l.b16 %v1352
    %v1417 = vunpack.c.l.b16 %v1353
    %v1418 = vunpack.c.l.b16 %v1354
    %v1419 = vunpack.c.l.b16 %v1355
    %v1420 = vunpack.c.l.b16 %v1356
    %v1421 = vunpack.c.l.b16 %v1357
    %v1422 = vunpack.c.l.b16 %v1358
    %v1423 = vunpack.c.l.b16 %v1359
    %v1424 = vpack.c.b16 %v1393, %v1392
    %v1425 = vpack.c.b16 %v1395, %v1394
    %v1426 = vpack.c.b16 %v1397, %v1396
    %v1427 = vpack.c.b16 %v1399, %v1398
    %v1428 = vpack.c.b16 %v1401, %v1400
    %v1429 = vpack.c.b16 %v1403, %v1402
    %v1430 = vpack.c.b16 %v1405, %v1404
    %v1431 = vpack.c.b16 %v1407, %v1406
    %v1432 = vpack.c.b16 %v1409, %v1408
    %v1433 = vpack.c.b16 %v1411, %v1410
    %v1434 = vpack.c.b16 %v1413, %v1412
    %v1435 = vpack.c.b16 %v1415, %v1414
    %v1436 = vpack.c.b16 %v1417, %v1416
    %v1437 = vpack.c.b16 %v1419, %v1418
    %v1438 = vpack.c.b16 %v1421, %v1420
    %v1439 = vpack.c.b16 %v1423, %v1422
    %1456 = vmatprep.subr.bf16.mxu0 0
    %1457 = vmatpush1.bf16.msra.mxu0 %v1431
    %1458 = vmatprep.subr.bf16.mxu0 0
    %1459 = vmatpush1.bf16.msra.mxu0 %v1430
    %1460 = vmatprep.subr.bf16.mxu0 0
    %1461 = vmatpush1.bf16.msra.mxu0 %v1429
    %1462 = vmatprep.subr.bf16.mxu0 0
    %1463 = vmatpush1.bf16.msra.mxu0 %v1428
    %1464 = vmatprep.subr.bf16.mxu0 0
    %1465 = vmatpush1.bf16.msra.mxu0 %v1427
    %1466 = vmatprep.subr.bf16.mxu0 0
    %1467 = vmatpush1.bf16.msra.mxu0 %v1426
    %1468 = vmatprep.subr.bf16.mxu0 0
    %1469 = vmatpush1.bf16.msra.mxu0 %v1425
    %1470 = vmatprep.subr.bf16.mxu0 0
    %1471 = vmatpush1.bf16.msra.mxu0 %v1424
    %1472 = vmatprep.subr.bf16.mxu0 0
    %1473 = vmatpush2.bf16.msra.mxu0 %v1439
    %1474 = vmatprep.subr.bf16.mxu0 0
    %1475 = vmatpush2.bf16.msra.mxu0 %v1438
    %1476 = vmatprep.subr.bf16.mxu0 0
    %1477 = vmatpush2.bf16.msra.mxu0 %v1437
    %1478 = vmatprep.subr.bf16.mxu0 0
    %1479 = vmatpush2.bf16.msra.mxu0 %v1436
    %1480 = vmatprep.subr.bf16.mxu0 0
    %1481 = vmatpush2.bf16.msra.mxu0 %v1435
    %1482 = vmatprep.subr.bf16.mxu0 0
    %1483 = vmatpush2.bf16.msra.mxu0 %v1434
    %1484 = vmatprep.subr.bf16.mxu0 0
    %1485 = vmatpush2.bf16.msra.mxu0 %v1433
    %1486 = vmatprep.subr.bf16.mxu0 0
    %1487 = vmatpush2.bf16.msra.mxu0 %v1432
    %1488 = vmatprep.mubr.bf16.mxu0 %v1319
    %1489 = vmatmul.mubr.bf16.gmra.mxu0 %v1318
    %v1490 = vpop.f32.mrf.mxu0
    %v1491 = vadd.f32 0.0, %v1490
    %v1492 = vpop.f32.mrf.mxu0
    %v1493 = vpop.f32.mrf.mxu0
    %v1494 = vadd.f32 0.0, %v1493
    %v1495 = vpop.f32.mrf.mxu0
    %1496 = vmatprep.mubr.bf16.mxu0 %v1321
    %1497 = vmatmul.mubr.bf16.gmra.mxu0 %v1320
    %v1498 = vpop.f32.mrf.mxu0
    %v1499 = vadd.f32 0.0, %v1498
    %v1500 = vpop.f32.mrf.mxu0
    %v1501 = vpop.f32.mrf.mxu0
    %v1502 = vadd.f32 0.0, %v1501
    %v1503 = vpop.f32.mrf.mxu0
    %1504 = vmatprep.mubr.bf16.mxu0 %v1323
    %1505 = vmatmul.mubr.bf16.gmra.mxu0 %v1322
    %v1506 = vpop.f32.mrf.mxu0
    %v1507 = vadd.f32 0.0, %v1506
    %v1508 = vpop.f32.mrf.mxu0
    %v1509 = vpop.f32.mrf.mxu0
    %v1510 = vadd.f32 0.0, %v1509
    %v1511 = vpop.f32.mrf.mxu0
    %1512 = vmatprep.mubr.bf16.mxu0 %v1325
    %1513 = vmatmul.mubr.bf16.gmra.mxu0 %v1324
    %v1514 = vpop.f32.mrf.mxu0
    %v1515 = vadd.f32 0.0, %v1514
    %v1516 = vpop.f32.mrf.mxu0
    %v1517 = vpop.f32.mrf.mxu0
    %v1518 = vadd.f32 0.0, %v1517
    %v1519 = vpop.f32.mrf.mxu0
    %1520 = vmatprep.mubr.bf16.mxu0 %v1327
    %1521 = vmatmul.mubr.bf16.gmra.mxu0 %v1326
    %v1522 = vpop.f32.mrf.mxu0
    %v1523 = vadd.f32 0.0, %v1522
    %v1524 = vpop.f32.mrf.mxu0
    %v1525 = vpop.f32.mrf.mxu0
    %v1526 = vadd.f32 0.0, %v1525
    %v1527 = vpop.f32.mrf.mxu0
    %1528 = vdwg.mxu0
    %v1529 = vld [vmem:[#allocation8] sm:$0xff]
    %v1530 = vld [vmem:[#allocation8 + $0x8] sm:$0xff]
    %v1531 = vld [vmem:[#allocation8 + $0x10] sm:$0xff]
    %v1532 = vld [vmem:[#allocation8 + $0x18] sm:$0xff]
    %v1533 = vld [vmem:[#allocation8 + $0x20] sm:$0xff]
    %v1534 = vld [vmem:[#allocation8 + $0x28] sm:$0xff]
    %v1535 = vld [vmem:[#allocation8 + $0x30] sm:$0xff]
    %v1536 = vld [vmem:[#allocation8 + $0x38] sm:$0xff]
    %v1537 = vld [vmem:[#allocation8 + $0x40] sm:$0xff]
    %v1538 = vld [vmem:[#allocation8 + $0x48] sm:$0xff]
    %v1539 = vand.u32 2147483647, %v1491
    %v1540 = vand.u32 2147483647, %v1494
    %v1541 = vand.u32 2147483647, %v1499
    %v1542 = vand.u32 2147483647, %v1502
    %v1543 = vand.u32 2147483647, %v1507
    %v1544 = vand.u32 2147483647, %v1510
    %v1545 = vand.u32 2147483647, %v1515
    %v1546 = vand.u32 2147483647, %v1518
    %v1547 = vand.u32 2147483647, %v1523
    %v1548 = vand.u32 2147483647, %v1526
    %v1549 = vadd.f32 %v1529, %v1539
    %v1550 = vadd.f32 %v1530, %v1540
    %v1551 = vadd.f32 %v1531, %v1541
    %v1552 = vadd.f32 %v1532, %v1542
    %v1553 = vadd.f32 %v1533, %v1543
    %v1554 = vadd.f32 %v1534, %v1544
    %v1555 = vadd.f32 %v1535, %v1545
    %v1556 = vadd.f32 %v1536, %v1546
    %v1557 = vadd.f32 %v1537, %v1547
    %v1558 = vadd.f32 %v1538, %v1548
    %1559 = vst [vmem:[#allocation8] sm:$0xff] %v1549
    %1560 = vst [vmem:[#allocation8 + $0x8] sm:$0xff] %v1550
    %1561 = vst [vmem:[#allocation8 + $0x10] sm:$0xff] %v1551
    %1562 = vst [vmem:[#allocation8 + $0x18] sm:$0xff] %v1552
    %1563 = vst [vmem:[#allocation8 + $0x20] sm:$0xff] %v1553
    %1564 = vst [vmem:[#allocation8 + $0x28] sm:$0xff] %v1554
    %1565 = vst [vmem:[#allocation8 + $0x30] sm:$0xff] %v1555
    %1566 = vst [vmem:[#allocation8 + $0x38] sm:$0xff] %v1556
    %1567 = vst [vmem:[#allocation8 + $0x40] sm:$0xff] %v1557
    %1568 = vst [vmem:[#allocation8 + $0x48] sm:$0xff] %v1558
    %s1569 = scalar_lea.vmem [#allocation8], 80
    %v1570 = vld [vmem:[%s1569] sm:$0xff]
    %v1571 = vld [vmem:[%s1569 + $0x8] sm:$0xff]
    %v1572 = vld [vmem:[%s1569 + $0x10] sm:$0xff]
    %v1573 = vld [vmem:[%s1569 + $0x18] sm:$0xff]
    %v1574 = vld [vmem:[%s1569 + $0x20] sm:$0xff]
    %v1575 = vld [vmem:[%s1569 + $0x28] sm:$0xff]
    %v1576 = vld [vmem:[%s1569 + $0x30] sm:$0xff]
    %v1577 = vld [vmem:[%s1569 + $0x38] sm:$0xff]
    %v1578 = vld [vmem:[%s1569 + $0x40] sm:$0xff]
    %v1579 = vld [vmem:[%s1569 + $0x48] sm:$0xff]
    %v1580 = vmul.f32 %v1491, %v1491
    %v1581 = vmul.f32 %v1494, %v1494
    %v1582 = vmul.f32 %v1499, %v1499
    %v1583 = vmul.f32 %v1502, %v1502
    %v1584 = vmul.f32 %v1507, %v1507
    %v1585 = vmul.f32 %v1510, %v1510
    %v1586 = vmul.f32 %v1515, %v1515
    %v1587 = vmul.f32 %v1518, %v1518
    %v1588 = vmul.f32 %v1523, %v1523
    %v1589 = vmul.f32 %v1526, %v1526
    %v1590 = vadd.f32 %v1570, %v1580
    %v1591 = vadd.f32 %v1571, %v1581
    %v1592 = vadd.f32 %v1572, %v1582
    %v1593 = vadd.f32 %v1573, %v1583
    %v1594 = vadd.f32 %v1574, %v1584
    %v1595 = vadd.f32 %v1575, %v1585
    %v1596 = vadd.f32 %v1576, %v1586
    %v1597 = vadd.f32 %v1577, %v1587
    %v1598 = vadd.f32 %v1578, %v1588
    %v1599 = vadd.f32 %v1579, %v1589
    %1600 = vst [vmem:[%s1569] sm:$0xff] %v1590
    %1601 = vst [vmem:[%s1569 + $0x8] sm:$0xff] %v1591
    %1602 = vst [vmem:[%s1569 + $0x10] sm:$0xff] %v1592
    %1603 = vst [vmem:[%s1569 + $0x18] sm:$0xff] %v1593
    %1604 = vst [vmem:[%s1569 + $0x20] sm:$0xff] %v1594
    %1605 = vst [vmem:[%s1569 + $0x28] sm:$0xff] %v1595
    %1606 = vst [vmem:[%s1569 + $0x30] sm:$0xff] %v1596
    %1607 = vst [vmem:[%s1569 + $0x38] sm:$0xff] %v1597
    %1608 = vst [vmem:[%s1569 + $0x40] sm:$0xff] %v1598
    %1609 = vst [vmem:[%s1569 + $0x48] sm:$0xff] %v1599
    // Predicated region
    $region30: #{tpu_custom_call.1} parent=1 // pred_check
      _
    $region31: #{tpu_custom_call.1} parent=1 // pred_check_branch
      %1611 = sbr.rel (0) target = $region33
    $region32: #{tpu_custom_call.1} parent=1 // pred_region
      %s1613 = ssub.s32 2560, 2560
      %1614 = vsyncadd [#allocation4], %s1613
      %s1615 = sshll.u32 [#allocation8], 4
      %s1616 = int_to_ptr.vmem [resolvable:$true] %s1615
      %1621 = dma.vmem_to_hbm [thread:$0]  %s1616, 2560, %s3, [#allocation4], 128, 128, 8
    $region33: #{tpu_custom_call.1} parent=1 // pred_fallthru
      _
    // Predicated region
    $region34: #{tpu_custom_call.1} parent=1 // pred_check
      _
    $region35: #{tpu_custom_call.1} parent=1 // pred_check_branch
      %1623 = sbr.rel (0) target = $region37
    $region36: #{tpu_custom_call.1} parent=1 // pred_region
      %1624 = dma.done [#allocation4], 2560
    $region37: #{tpu_custom_call.1} parent=1 // pred_fallthru
      _
    %1625 = vsyncpa [#allocation3], 1
    %1626 = vsyncpa [#allocation6], 1
    %1627 = vsyncpa [#allocation4], 1

// kernel: tpu_custom_call.1
$region0: #{tpu_custom_call.1}
  #allocation0 [shape = 'u32[]', space=smem, size = 0x4, offset = 0x4, fixed_abs, tag = 'smem constant byte address 0x4 - core index']
  #allocation1 [shape = 'u32[144,128]{1,0:T(1,128)}', space=vmem, size = 0x12000, scoped, tag = 'internal scratch']
  %s0 = inlined_call_operand.hbm [shape: bf16[2,80,256], index: 0, kind: input, shape index: {}]
  %s1 = inlined_call_operand.hbm [shape: bf16[256,512], index: 1, kind: input, shape index: {}]
  %s2 = inlined_call_operand.hbm [shape: bf16[256,128], index: 2, kind: input, shape index: {}]
  %s3 = inlined_call_operand.hbm [shape: f32[1,2,80,128], index: 3, kind: output, shape index: {}]
  %s4 = sld [smem:[#allocation0]]
  $region38: #{tpu_custom_call.1} parent=0
    _
  %s6 = ssub.s32 1, %s4
  %s7 = scalar_select 0, %s6, %s4
  $region1: #{tpu_custom_call.1} parent=0
    #allocation2 [shape = 'u8[81920]{0}', space=vmem, size = 0x14000, scoped, tag = 'input window, operand 0, single buffered']
    #allocation3 [shape = 's32[1]{0}', space=sflag, size = 0x4, scoped, tag = 'scoped memory for tpu_custom_call.1']
    #allocation4 [shape = 's32[1]{0}', space=sflag, size = 0x4, scoped, tag = 'scoped memory for tpu_custom_call.1']
    #allocation5 [shape = 'u8[262144]{0}', space=vmem, size = 0x40000, scoped, tag = 'input window, operand 1, single buffered']
    #allocation6 [shape = 's32[1]{0}', space=sflag, size = 0x4, scoped, tag = 'scoped memory for tpu_custom_call.1']
    #allocation7 [shape = 'u8[65536]{0}', space=vmem, size = 0x10000, scoped, tag = 'input window, operand 2, single buffered']
    #allocation8 [shape = 'u8[81920]{0}', space=vmem, size = 0x14000, scoped, tag = 'output window, operand 0, single buffered']
    %8 = vsyncpa [#allocation3], 0
    %9 = vsyncpa [#allocation6], 0
    %10 = vsyncpa [#allocation4], 0
    // Predicated region
    $region2: #{tpu_custom_call.1} parent=1 // pred_check
      _
    $region3: #{tpu_custom_call.1} parent=1 // pred_check_branch
      %12 = sbr.rel (0) target = $region5
    $region4: #{tpu_custom_call.1} parent=1 // pred_region
      %s13 = sadd.s32 0, 0
      %s14 = smul.u32 10, %s13
      %s16 = ssub.s32 2560, 2560
      %17 = vsyncadd [#allocation3], %s16
      %s18 = smul.addr %s14, 2
      %s19 = smul.addr %s18, 64
      %s20 = scalar_lea.hbm %s0, %s19
      %s21 = sshll.u32 [#allocation2], 4
      %s22 = int_to_ptr.vmem [resolvable:$true] %s21
      %27 = dma.hbm_to_vmem [thread:$0]  %s20, 2560, %s22, [#allocation3], 128, 128, 8
    $region5: #{tpu_custom_call.1} parent=1 // pred_fallthru
      _
    // Predicated region
    $region6: #{tpu_custom_call.1} parent=1 // pred_check
      _
    $region7: #{tpu_custom_call.1} parent=1 // pred_check_branch
      %29 = sbr.rel (0) target = $region9
    $region8: #{tpu_custom_call.1} parent=1 // pred_region
      %s31 = ssub.s32 8192, 8192
      %32 = vsyncadd [#allocation6], %s31
      %s33 = sshll.u32 [#allocation5], 4
      %s34 = int_to_ptr.vmem [resolvable:$true] %s33
      %39 = dma.hbm_to_vmem [thread:$0]  %s1, 8192, %s34, [#allocation6], 256, 256, 16
    $region9: #{tpu_custom_call.1} parent=1 // pred_fallthru
      _
    // Predicated region
    $region10: #{tpu_custom_call.1} parent=1 // pred_check
      _
    $region11: #{tpu_custom_call.1} parent=1 // pred_check_branch
      %41 = sbr.rel (0) target = $region13
    $region12: #{tpu_custom_call.1} parent=1 // pred_region
      %s43 = ssub.s32 2048, 2048
      %44 = vsyncadd [#allocation6], %s43
      %s45 = sshll.u32 [#allocation7], 4
      %s46 = int_to_ptr.vmem [resolvable:$true] %s45
      %51 = dma.hbm_to_vmem [thread:$0]  %s2, 2048, %s46, [#allocation6], 64, 64, 4
    $region13: #{tpu_custom_call.1} parent=1 // pred_fallthru
      _
    // Predicated region
    $region14: #{tpu_custom_call.1} parent=1 // pred_check
      _
    $region15: #{tpu_custom_call.1} parent=1 // pred_check_branch
      %53 = sbr.rel (0) target = $region17
    $region16: #{tpu_custom_call.1} parent=1 // pred_region
      %54 = dma.done [#allocation3], 2560
    $region17: #{tpu_custom_call.1} parent=1 // pred_fallthru
      _
    // Predicated region
    $region18: #{tpu_custom_call.1} parent=1 // pred_check
      _
    $region19: #{tpu_custom_call.1} parent=1 // pred_check_branch
      %56 = sbr.rel (0) target = $region21
    $region20: #{tpu_custom_call.1} parent=1 // pred_region
      %57 = dma.done [#allocation6], 8192
    $region21: #{tpu_custom_call.1} parent=1 // pred_fallthru
      _
    // Predicated region
    $region22: #{tpu_custom_call.1} parent=1 // pred_check
      _
    $region23: #{tpu_custom_call.1} parent=1 // pred_check_branch
      %59 = sbr.rel (0) target = $region25
    $region24: #{tpu_custom_call.1} parent=1 // pred_region
      %60 = dma.done [#allocation6], 2048
    $region25: #{tpu_custom_call.1} parent=1 // pred_fallthru
      _
    %s61 = sadd.s32 0, 0
    %s62 = smul.u32 10, %s61
    %p64 = scmp.eq.s32.totalorder 0, 0
    // Predicated region
    $region26: #{tpu_custom_call.1} parent=1 // pred_check
      %p65 = pneg %p64
    $region27: #{tpu_custom_call.1} parent=1 // pred_check_branch
      %67 = sbr.rel (%p65) target = $region29
    $region28: #{tpu_custom_call.1} parent=1 // pred_region
      %68 = vst [vmem:[#allocation8] sm:$0xff] 0.0
      %69 = vst [vmem:[#allocation8 + $0x8] sm:$0xff] 0.0
      %70 = vst [vmem:[#allocation8 + $0x10] sm:$0xff] 0.0
      %71 = vst [vmem:[#allocation8 + $0x18] sm:$0xff] 0.0
      %72 = vst [vmem:[#allocation8 + $0x20] sm:$0xff] 0.0
      %73 = vst [vmem:[#allocation8 + $0x28] sm:$0xff] 0.0
      %74 = vst [vmem:[#allocation8 + $0x30] sm:$0xff] 0.0
      %75 = vst [vmem:[#allocation8 + $0x38] sm:$0xff] 0.0
      %76 = vst [vmem:[#allocation8 + $0x40] sm:$0xff] 0.0
      %77 = vst [vmem:[#allocation8 + $0x48] sm:$0xff] 0.0
      %78 = vst [vmem:[#allocation8 + $0x50] sm:$0xff] 0.0
      %79 = vst [vmem:[#allocation8 + $0x58] sm:$0xff] 0.0
      %80 = vst [vmem:[#allocation8 + $0x60] sm:$0xff] 0.0
      %81 = vst [vmem:[#allocation8 + $0x68] sm:$0xff] 0.0
      %82 = vst [vmem:[#allocation8 + $0x70] sm:$0xff] 0.0
      %83 = vst [vmem:[#allocation8 + $0x78] sm:$0xff] 0.0
      %84 = vst [vmem:[#allocation8 + $0x80] sm:$0xff] 0.0
      %85 = vst [vmem:[#allocation8 + $0x88] sm:$0xff] 0.0
      %86 = vst [vmem:[#allocation8 + $0x90] sm:$0xff] 0.0
      %87 = vst [vmem:[#allocation8 + $0x98] sm:$0xff] 0.0
    $region29: #{tpu_custom_call.1} parent=1 // pred_fallthru
      _
    %v88 = vld [vmem:[#allocation2] sm:$0xff]
    %v89 = vld [vmem:[#allocation2 + $0x8] sm:$0xff]
    %v90 = vld [vmem:[#allocation2 + $0x10] sm:$0xff]
    %v91 = vld [vmem:[#allocation2 + $0x18] sm:$0xff]
    %v92 = vld [vmem:[#allocation2 + $0x20] sm:$0xff]
    %v93 = vld [vmem:[#allocation2 + $0x28] sm:$0xff]
    %v94 = vld [vmem:[#allocation2 + $0x30] sm:$0xff]
    %v95 = vld [vmem:[#allocation2 + $0x38] sm:$0xff]
    %v96 = vld [vmem:[#allocation2 + $0x40] sm:$0xff]
    %v97 = vld [vmem:[#allocation2 + $0x48] sm:$0xff]
    %v98 = vld [vmem:[#allocation2 + $0x50] sm:$0xff]
    %v99 = vld [vmem:[#allocation2 + $0x58] sm:$0xff]
    %v100 = vld [vmem:[#allocation2 + $0x60] sm:$0xff]
    %v101 = vld [vmem:[#allocation2 + $0x68] sm:$0xff]
    %v102 = vld [vmem:[#allocation2 + $0x70] sm:$0xff]
    %v103 = vld [vmem:[#allocation2 + $0x78] sm:$0xff]
    %v104 = vld [vmem:[#allocation2 + $0x80] sm:$0xff]
    %v105 = vld [vmem:[#allocation2 + $0x88] sm:$0xff]
    %v106 = vld [vmem:[#allocation2 + $0x90] sm:$0xff]
    %v107 = vld [vmem:[#allocation2 + $0x98] sm:$0xff]
    %v108 = vld [vmem:[#allocation5] sm:$0xff]
    %v109 = vld [vmem:[#allocation5 + $0x8] sm:$0xff]
    %v110 = vld [vmem:[#allocation5 + $0x10] sm:$0xff]
    %v111 = vld [vmem:[#allocation5 + $0x18] sm:$0xff]
    %v112 = vld [vmem:[#allocation5 + $0x20] sm:$0xff]
    %v113 = vld [vmem:[#allocation5 + $0x28] sm:$0xff]
    %v114 = vld [vmem:[#allocation5 + $0x30] sm:$0xff]
    %v115 = vld [vmem:[#allocation5 + $0x38] sm:$0xff]
    %v116 = vld [vmem:[#allocation5 + $0x40] sm:$0xff]
    %v117 = vld [vmem:[#allocation5 + $0x48] sm:$0xff]
    %v118 = vld [vmem:[#allocation5 + $0x50] sm:$0xff]
    %v119 = vld [vmem:[#allocation5 + $0x58] sm:$0xff]
    %v120 = vld [vmem:[#allocation5 + $0x60] sm:$0xff]
    %v121 = vld [vmem:[#allocation5 + $0x68] sm:$0xff]
    %v122 = vld [vmem:[#allocation5 + $0x70] sm:$0xff]
    %v123 = vld [vmem:[#allocation5 + $0x78] sm:$0xff]
    %v124 = vld [vmem:[#allocation5 + $0x80] sm:$0xff]
    %v125 = vld [vmem:[#allocation5 + $0x88] sm:$0xff]
    %v126 = vld [vmem:[#allocation5 + $0x90] sm:$0xff]
    %v127 = vld [vmem:[#allocation5 + $0x98] sm:$0xff]
    %v128 = vld [vmem:[#allocation5 + $0xa0] sm:$0xff]
    %v129 = vld [vmem:[#allocation5 + $0xa8] sm:$0xff]
    %v130 = vld [vmem:[#allocation5 + $0xb0] sm:$0xff]
    %v131 = vld [vmem:[#allocation5 + $0xb8] sm:$0xff]
    %v132 = vld [vmem:[#allocation5 + $0xc0] sm:$0xff]
    %v133 = vld [vmem:[#allocation5 + $0xc8] sm:$0xff]
    %v134 = vld [vmem:[#allocation5 + $0xd0] sm:$0xff]
    %v135 = vld [vmem:[#allocation5 + $0xd8] sm:$0xff]
    %v136 = vld [vmem:[#allocation5 + $0xe0] sm:$0xff]
    %v137 = vld [vmem:[#allocation5 + $0xe8] sm:$0xff]
    %v138 = vld [vmem:[#allocation5 + $0xf0] sm:$0xff]
    %v139 = vld [vmem:[#allocation5 + $0xf8] sm:$0xff]
    %v140 = vld [vmem:[#allocation5 + $0x100] sm:$0xff]
    %v141 = vld [vmem:[#allocation5 + $0x108] sm:$0xff]
    %v142 = vld [vmem:[#allocation5 + $0x110] sm:$0xff]
    %v143 = vld [vmem:[#allocation5 + $0x118] sm:$0xff]
    %v144 = vld [vmem:[#allocation5 + $0x120] sm:$0xff]
    %v145 = vld [vmem:[#allocation5 + $0x128] sm:$0xff]
    %v146 = vld [vmem:[#allocation5 + $0x130] sm:$0xff]
    %v147 = vld [vmem:[#allocation5 + $0x138] sm:$0xff]
    %v148 = vld [vmem:[#allocation5 + $0x140] sm:$0xff]
    %v149 = vld [vmem:[#allocation5 + $0x148] sm:$0xff]
    %v150 = vld [vmem:[#allocation5 + $0x150] sm:$0xff]
    %v151 = vld [vmem:[#allocation5 + $0x158] sm:$0xff]
    %v152 = vld [vmem:[#allocation5 + $0x160] sm:$0xff]
    %v153 = vld [vmem:[#allocation5 + $0x168] sm:$0xff]
    %v154 = vld [vmem:[#allocation5 + $0x170] sm:$0xff]
    %v155 = vld [vmem:[#allocation5 + $0x178] sm:$0xff]
    %v156 = vld [vmem:[#allocation5 + $0x180] sm:$0xff]
    %v157 = vld [vmem:[#allocation5 + $0x188] sm:$0xff]
    %v158 = vld [vmem:[#allocation5 + $0x190] sm:$0xff]
    %v159 = vld [vmem:[#allocation5 + $0x198] sm:$0xff]
    %v160 = vld [vmem:[#allocation5 + $0x1a0] sm:$0xff]
    %v161 = vld [vmem:[#allocation5 + $0x1a8] sm:$0xff]
    %v162 = vld [vmem:[#allocation5 + $0x1b0] sm:$0xff]
    %v163 = vld [vmem:[#allocation5 + $0x1b8] sm:$0xff]
    %v164 = vld [vmem:[#allocation5 + $0x1c0] sm:$0xff]
    %v165 = vld [vmem:[#allocation5 + $0x1c8] sm:$0xff]
    %v166 = vld [vmem:[#allocation5 + $0x1d0] sm:$0xff]
    %v167 = vld [vmem:[#allocation5 + $0x1d8] sm:$0xff]
    %v168 = vld [vmem:[#allocation5 + $0x1e0] sm:$0xff]
    %v169 = vld [vmem:[#allocation5 + $0x1e8] sm:$0xff]
    %v170 = vld [vmem:[#allocation5 + $0x1f0] sm:$0xff]
    %v171 = vld [vmem:[#allocation5 + $0x1f8] sm:$0xff]
    %v192 = vunpack.c.l.b16 %v88
    %v193 = vunpack.c.h.b16 %v88
    %v194 = vunpack.c.l.b16 %v89
    %v195 = vunpack.c.h.b16 %v89
    %v196 = vunpack.c.l.b16 %v90
    %v197 = vunpack.c.h.b16 %v90
    %v198 = vunpack.c.l.b16 %v91
    %v199 = vunpack.c.h.b16 %v91
    %v200 = vunpack.c.l.b16 %v92
    %v201 = vunpack.c.h.b16 %v92
    %v202 = vunpack.c.l.b16 %v93
    %v203 = vunpack.c.h.b16 %v93
    %v204 = vunpack.c.l.b16 %v94
    %v205 = vunpack.c.h.b16 %v94
    %v206 = vunpack.c.l.b16 %v95
    %v207 = vunpack.c.h.b16 %v95
    %v208 = vunpack.c.l.b16 %v96
    %v209 = vunpack.c.h.b16 %v96
    %v210 = vunpack.c.l.b16 %v97
    %v211 = vunpack.c.h.b16 %v97
    %v212 = vunpack.c.l.b16 %v98
    %v213 = vunpack.c.h.b16 %v98
    %v214 = vunpack.c.l.b16 %v99
    %v215 = vunpack.c.h.b16 %v99
    %v216 = vunpack.c.l.b16 %v100
    %v217 = vunpack.c.h.b16 %v100
    %v218 = vunpack.c.l.b16 %v101
    %v219 = vunpack.c.h.b16 %v101
    %v220 = vunpack.c.l.b16 %v102
    %v221 = vunpack.c.h.b16 %v102
    %v222 = vunpack.c.l.b16 %v103
    %v223 = vunpack.c.h.b16 %v103
    %v224 = vunpack.c.l.b16 %v104
    %v225 = vunpack.c.h.b16 %v104
    %v226 = vunpack.c.l.b16 %v105
    %v227 = vunpack.c.h.b16 %v105
    %v228 = vunpack.c.l.b16 %v106
    %v229 = vunpack.c.h.b16 %v106
    %v230 = vunpack.c.l.b16 %v107
    %v231 = vunpack.c.h.b16 %v107
    %v232 = vpack.c.b16 %v194, %v192
    %v233 = vpack.c.b16 %v195, %v193
    %v234 = vpack.c.b16 %v198, %v196
    %v235 = vpack.c.b16 %v199, %v197
    %v236 = vpack.c.b16 %v202, %v200
    %v237 = vpack.c.b16 %v203, %v201
    %v238 = vpack.c.b16 %v206, %v204
    %v239 = vpack.c.b16 %v207, %v205
    %v240 = vpack.c.b16 %v210, %v208
    %v241 = vpack.c.b16 %v211, %v209
    %v242 = vpack.c.b16 %v214, %v212
    %v243 = vpack.c.b16 %v215, %v213
    %v244 = vpack.c.b16 %v218, %v216
    %v245 = vpack.c.b16 %v219, %v217
    %v246 = vpack.c.b16 %v222, %v220
    %v247 = vpack.c.b16 %v223, %v221
    %v248 = vpack.c.b16 %v226, %v224
    %v249 = vpack.c.b16 %v227, %v225
    %v250 = vpack.c.b16 %v230, %v228
    %v251 = vpack.c.b16 %v231, %v229
    %v336 = vunpack.c.l.b16 %v108
    %v337 = vunpack.c.h.b16 %v108
    %v338 = vunpack.c.l.b16 %v109
    %v339 = vunpack.c.h.b16 %v109
    %v340 = vunpack.c.l.b16 %v110
    %v341 = vunpack.c.h.b16 %v110
    %v342 = vunpack.c.l.b16 %v111
    %v343 = vunpack.c.h.b16 %v111
    %v344 = vunpack.c.l.b16 %v112
    %v345 = vunpack.c.h.b16 %v112
    %v346 = vunpack.c.l.b16 %v113
    %v347 = vunpack.c.h.b16 %v113
    %v348 = vunpack.c.l.b16 %v114
    %v349 = vunpack.c.h.b16 %v114
    %v350 = vunpack.c.l.b16 %v115
    %v351 = vunpack.c.h.b16 %v115
    %v352 = vunpack.c.l.b16 %v116
    %v353 = vunpack.c.h.b16 %v116
    %v354 = vunpack.c.l.b16 %v117
    %v355 = vunpack.c.h.b16 %v117
    %v356 = vunpack.c.l.b16 %v118
    %v357 = vunpack.c.h.b16 %v118
    %v358 = vunpack.c.l.b16 %v119
    %v359 = vunpack.c.h.b16 %v119
    %v360 = vunpack.c.l.b16 %v120
    %v361 = vunpack.c.h.b16 %v120
    %v362 = vunpack.c.l.b16 %v121
    %v363 = vunpack.c.h.b16 %v121
    %v364 = vunpack.c.l.b16 %v122
    %v365 = vunpack.c.h.b16 %v122
    %v366 = vunpack.c.l.b16 %v123
    %v367 = vunpack.c.h.b16 %v123
    %v368 = vunpack.c.l.b16 %v124
    %v369 = vunpack.c.h.b16 %v124
    %v370 = vunpack.c.l.b16 %v125
    %v371 = vunpack.c.h.b16 %v125
    %v372 = vunpack.c.l.b16 %v126
    %v373 = vunpack.c.h.b16 %v126
    %v374 = vunpack.c.l.b16 %v127
    %v375 = vunpack.c.h.b16 %v127
    %v376 = vunpack.c.l.b16 %v128
    %v377 = vunpack.c.h.b16 %v128
    %v378 = vunpack.c.l.b16 %v129
    %v379 = vunpack.c.h.b16 %v129
    %v380 = vunpack.c.l.b16 %v130
    %v381 = vunpack.c.h.b16 %v130
    %v382 = vunpack.c.l.b16 %v131
    %v383 = vunpack.c.h.b16 %v131
    %v384 = vunpack.c.l.b16 %v132
    %v385 = vunpack.c.h.b16 %v132
    %v386 = vunpack.c.l.b16 %v133
    %v387 = vunpack.c.h.b16 %v133
    %v388 = vunpack.c.l.b16 %v134
    %v389 = vunpack.c.h.b16 %v134
    %v390 = vunpack.c.l.b16 %v135
    %v391 = vunpack.c.h.b16 %v135
    %v392 = vunpack.c.l.b16 %v136
    %v393 = vunpack.c.h.b16 %v136
    %v394 = vunpack.c.l.b16 %v137
    %v395 = vunpack.c.h.b16 %v137
    %v396 = vunpack.c.l.b16 %v138
    %v397 = vunpack.c.h.b16 %v138
    %v398 = vunpack.c.l.b16 %v139
    %v399 = vunpack.c.h.b16 %v139
    %v400 = vunpack.c.l.b16 %v140
    %v401 = vunpack.c.h.b16 %v140
    %v402 = vunpack.c.l.b16 %v141
    %v403 = vunpack.c.h.b16 %v141
    %v404 = vunpack.c.l.b16 %v142
    %v405 = vunpack.c.h.b16 %v142
    %v406 = vunpack.c.l.b16 %v143
    %v407 = vunpack.c.h.b16 %v143
    %v408 = vunpack.c.l.b16 %v144
    %v409 = vunpack.c.h.b16 %v144
    %v410 = vunpack.c.l.b16 %v145
    %v411 = vunpack.c.h.b16 %v145
    %v412 = vunpack.c.l.b16 %v146
    %v413 = vunpack.c.h.b16 %v146
    %v414 = vunpack.c.l.b16 %v147
    %v415 = vunpack.c.h.b16 %v147
    %v416 = vunpack.c.l.b16 %v148
    %v417 = vunpack.c.h.b16 %v148
    %v418 = vunpack.c.l.b16 %v149
    %v419 = vunpack.c.h.b16 %v149
    %v420 = vunpack.c.l.b16 %v150
    %v421 = vunpack.c.h.b16 %v150
    %v422 = vunpack.c.l.b16 %v151
    %v423 = vunpack.c.h.b16 %v151
    %v424 = vunpack.c.l.b16 %v152
    %v425 = vunpack.c.h.b16 %v152
    %v426 = vunpack.c.l.b16 %v153
    %v427 = vunpack.c.h.b16 %v153
    %v428 = vunpack.c.l.b16 %v154
    %v429 = vunpack.c.h.b16 %v154
    %v430 = vunpack.c.l.b16 %v155
    %v431 = vunpack.c.h.b16 %v155
    %v432 = vunpack.c.l.b16 %v156
    %v433 = vunpack.c.h.b16 %v156
    %v434 = vunpack.c.l.b16 %v157
    %v435 = vunpack.c.h.b16 %v157
    %v436 = vunpack.c.l.b16 %v158
    %v437 = vunpack.c.h.b16 %v158
    %v438 = vunpack.c.l.b16 %v159
    %v439 = vunpack.c.h.b16 %v159
    %v440 = vunpack.c.l.b16 %v160
    %v441 = vunpack.c.h.b16 %v160
    %v442 = vunpack.c.l.b16 %v161
    %v443 = vunpack.c.h.b16 %v161
    %v444 = vunpack.c.l.b16 %v162
    %v445 = vunpack.c.h.b16 %v162
    %v446 = vunpack.c.l.b16 %v163
    %v447 = vunpack.c.h.b16 %v163
    %v448 = vunpack.c.l.b16 %v164
    %v449 = vunpack.c.h.b16 %v164
    %v450 = vunpack.c.l.b16 %v165
    %v451 = vunpack.c.h.b16 %v165
    %v452 = vunpack.c.l.b16 %v166
    %v453 = vunpack.c.h.b16 %v166
    %v454 = vunpack.c.l.b16 %v167
    %v455 = vunpack.c.h.b16 %v167
    %v456 = vunpack.c.l.b16 %v168
    %v457 = vunpack.c.h.b16 %v168
    %v458 = vunpack.c.l.b16 %v169
    %v459 = vunpack.c.h.b16 %v169
    %v460 = vunpack.c.l.b16 %v170
    %v461 = vunpack.c.h.b16 %v170
    %v462 = vunpack.c.l.b16 %v171
    %v463 = vunpack.c.h.b16 %v171
    %v464 = vpack.c.b16 %v340, %v336
    %v465 = vpack.c.b16 %v341, %v337
    %v466 = vpack.c.b16 %v342, %v338
    %v467 = vpack.c.b16 %v343, %v339
    %v468 = vpack.c.b16 %v348, %v344
    %v469 = vpack.c.b16 %v349, %v345
    %v470 = vpack.c.b16 %v350, %v346
    %v471 = vpack.c.b16 %v351, %v347
    %v472 = vpack.c.b16 %v356, %v352
    %v473 = vpack.c.b16 %v357, %v353
    %v474 = vpack.c.b16 %v358, %v354
    %v475 = vpack.c.b16 %v359, %v355
    %v476 = vpack.c.b16 %v364, %v360
    %v477 = vpack.c.b16 %v365, %v361
    %v478 = vpack.c.b16 %v366, %v362
    %v479 = vpack.c.b16 %v367, %v363
    %v480 = vpack.c.b16 %v372, %v368
    %v481 = vpack.c.b16 %v373, %v369
    %v482 = vpack.c.b16 %v374, %v370
    %v483 = vpack.c.b16 %v375, %v371
    %v484 = vpack.c.b16 %v380, %v376
    %v485 = vpack.c.b16 %v381, %v377
    %v486 = vpack.c.b16 %v382, %v378
    %v487 = vpack.c.b16 %v383, %v379
    %v488 = vpack.c.b16 %v388, %v384
    %v489 = vpack.c.b16 %v389, %v385
    %v490 = vpack.c.b16 %v390, %v386
    %v491 = vpack.c.b16 %v391, %v387
    %v492 = vpack.c.b16 %v396, %v392
    %v493 = vpack.c.b16 %v397, %v393
    %v494 = vpack.c.b16 %v398, %v394
    %v495 = vpack.c.b16 %v399, %v395
    %v496 = vpack.c.b16 %v404, %v400
    %v497 = vpack.c.b16 %v405, %v401
    %v498 = vpack.c.b16 %v406, %v402
    %v499 = vpack.c.b16 %v407, %v403
    %v500 = vpack.c.b16 %v412, %v408
    %v501 = vpack.c.b16 %v413, %v409
    %v502 = vpack.c.b16 %v414, %v410
    %v503 = vpack.c.b16 %v415, %v411
    %v504 = vpack.c.b16 %v420, %v416
    %v505 = vpack.c.b16 %v421, %v417
    %v506 = vpack.c.b16 %v422, %v418
    %v507 = vpack.c.b16 %v423, %v419
    %v508 = vpack.c.b16 %v428, %v424
    %v509 = vpack.c.b16 %v429, %v425
    %v510 = vpack.c.b16 %v430, %v426
    %v511 = vpack.c.b16 %v431, %v427
    %v512 = vpack.c.b16 %v436, %v432
    %v513 = vpack.c.b16 %v437, %v433
    %v514 = vpack.c.b16 %v438, %v434
    %v515 = vpack.c.b16 %v439, %v435
    %v516 = vpack.c.b16 %v444, %v440
    %v517 = vpack.c.b16 %v445, %v441
    %v518 = vpack.c.b16 %v446, %v442
    %v519 = vpack.c.b16 %v447, %v443
    %v520 = vpack.c.b16 %v452, %v448
    %v521 = vpack.c.b16 %v453, %v449
    %v522 = vpack.c.b16 %v454, %v450
    %v523 = vpack.c.b16 %v455, %v451
    %v524 = vpack.c.b16 %v460, %v456
    %v525 = vpack.c.b16 %v461, %v457
    %v526 = vpack.c.b16 %v462, %v458
    %v527 = vpack.c.b16 %v463, %v459
    %592 = vmatprep.subr.bf16.mxu0 %v493
    %593 = vmatpush1.bf16.msra.mxu0 %v492
    %594 = vmatprep.subr.bf16.mxu0 %v489
    %595 = vmatpush1.bf16.msra.mxu0 %v488
    %596 = vmatprep.subr.bf16.mxu0 %v485
    %597 = vmatpush1.bf16.msra.mxu0 %v484
    %598 = vmatprep.subr.bf16.mxu0 %v481
    %599 = vmatpush1.bf16.msra.mxu0 %v480
    %600 = vmatprep.subr.bf16.mxu0 %v477
    %601 = vmatpush1.bf16.msra.mxu0 %v476
    %602 = vmatprep.subr.bf16.mxu0 %v473
    %603 = vmatpush1.bf16.msra.mxu0 %v472
    %604 = vmatprep.subr.bf16.mxu0 %v469
    %605 = vmatpush1.bf16.msra.mxu0 %v468
    %606 = vmatprep.subr.bf16.mxu0 %v465
    %607 = vmatpush1.bf16.msra.mxu0 %v464
    %608 = vmatprep.subr.bf16.mxu0 %v525
    %609 = vmatpush2.bf16.msra.mxu0 %v524
    %610 = vmatprep.subr.bf16.mxu0 %v521
    %611 = vmatpush2.bf16.msra.mxu0 %v520
    %612 = vmatprep.subr.bf16.mxu0 %v517
    %613 = vmatpush2.bf16.msra.mxu0 %v516
    %614 = vmatprep.subr.bf16.mxu0 %v513
    %615 = vmatpush2.bf16.msra.mxu0 %v512
    %616 = vmatprep.subr.bf16.mxu0 %v509
    %617 = vmatpush2.bf16.msra.mxu0 %v508
    %618 = vmatprep.subr.bf16.mxu0 %v505
    %619 = vmatpush2.bf16.msra.mxu0 %v504
    %620 = vmatprep.subr.bf16.mxu0 %v501
    %621 = vmatpush2.bf16.msra.mxu0 %v500
    %622 = vmatprep.subr.bf16.mxu0 %v497
    %623 = vmatpush2.bf16.msra.mxu0 %v496
    %624 = vmatprep.mubr.bf16.mxu0 %v233
    %625 = vmatmul.mubr.bf16.gmra.mxu0 %v232
    %v626 = vpop.f32.mrf.mxu0
    %v627 = vadd.f32 0.0, %v626
    %v628 = vpop.f32.mrf.mxu0
    %v629 = vadd.f32 0.0, %v628
    %v630 = vpop.f32.mrf.mxu0
    %v631 = vadd.f32 0.0, %v630
    %v632 = vpop.f32.mrf.mxu0
    %v633 = vadd.f32 0.0, %v632
    %634 = vmatprep.mubr.bf16.mxu0 %v235
    %635 = vmatmul.mubr.bf16.gmra.mxu0 %v234
    %v636 = vpop.f32.mrf.mxu0
    %v637 = vadd.f32 0.0, %v636
    %v638 = vpop.f32.mrf.mxu0
    %v639 = vadd.f32 0.0, %v638
    %v640 = vpop.f32.mrf.mxu0
    %v641 = vadd.f32 0.0, %v640
    %v642 = vpop.f32.mrf.mxu0
    %v643 = vadd.f32 0.0, %v642
    %644 = vmatprep.mubr.bf16.mxu0 %v237
    %645 = vmatmul.mubr.bf16.gmra.mxu0 %v236
    %v646 = vpop.f32.mrf.mxu0
    %v647 = vadd.f32 0.0, %v646
    %v648 = vpop.f32.mrf.mxu0
    %v649 = vadd.f32 0.0, %v648
    %v650 = vpop.f32.mrf.mxu0
    %v651 = vadd.f32 0.0, %v650
    %v652 = vpop.f32.mrf.mxu0
    %v653 = vadd.f32 0.0, %v652
    %654 = vmatprep.mubr.bf16.mxu0 %v239
    %655 = vmatmul.mubr.bf16.gmra.mxu0 %v238
    %v656 = vpop.f32.mrf.mxu0
    %v657 = vadd.f32 0.0, %v656
    %v658 = vpop.f32.mrf.mxu0
    %v659 = vadd.f32 0.0, %v658
    %v660 = vpop.f32.mrf.mxu0
    %v661 = vadd.f32 0.0, %v660
    %v662 = vpop.f32.mrf.mxu0
    %v663 = vadd.f32 0.0, %v662
    %664 = vmatprep.mubr.bf16.mxu0 %v241
    %665 = vmatmul.mubr.bf16.gmra.mxu0 %v240
    %v666 = vpop.f32.mrf.mxu0
    %v667 = vadd.f32 0.0, %v666
    %v668 = vpop.f32.mrf.mxu0
    %v669 = vadd.f32 0.0, %v668
    %v670 = vpop.f32.mrf.mxu0
    %v671 = vadd.f32 0.0, %v670
    %v672 = vpop.f32.mrf.mxu0
    %v673 = vadd.f32 0.0, %v672
    %674 = vmatprep.mubr.bf16.mxu0 %v243
    %675 = vmatmul.mubr.bf16.gmra.mxu0 %v242
    %v676 = vpop.f32.mrf.mxu0
    %v677 = vadd.f32 0.0, %v676
    %v678 = vpop.f32.mrf.mxu0
    %v679 = vadd.f32 0.0, %v678
    %v680 = vpop.f32.mrf.mxu0
    %v681 = vadd.f32 0.0, %v680
    %v682 = vpop.f32.mrf.mxu0
    %v683 = vadd.f32 0.0, %v682
    %684 = vmatprep.mubr.bf16.mxu0 %v245
    %685 = vmatmul.mubr.bf16.gmra.mxu0 %v244
    %v686 = vpop.f32.mrf.mxu0
    %v687 = vadd.f32 0.0, %v686
    %v688 = vpop.f32.mrf.mxu0
    %v689 = vadd.f32 0.0, %v688
    %v690 = vpop.f32.mrf.mxu0
    %v691 = vadd.f32 0.0, %v690
    %v692 = vpop.f32.mrf.mxu0
    %v693 = vadd.f32 0.0, %v692
    %694 = vmatprep.mubr.bf16.mxu0 %v247
    %695 = vmatmul.mubr.bf16.gmra.mxu0 %v246
    %v696 = vpop.f32.mrf.mxu0
    %v697 = vadd.f32 0.0, %v696
    %v698 = vpop.f32.mrf.mxu0
    %v699 = vadd.f32 0.0, %v698
    %v700 = vpop.f32.mrf.mxu0
    %v701 = vadd.f32 0.0, %v700
    %v702 = vpop.f32.mrf.mxu0
    %v703 = vadd.f32 0.0, %v702
    %704 = vmatprep.mubr.bf16.mxu0 %v249
    %705 = vmatmul.mubr.bf16.gmra.mxu0 %v248
    %v706 = vpop.f32.mrf.mxu0
    %v707 = vadd.f32 0.0, %v706
    %v708 = vpop.f32.mrf.mxu0
    %v709 = vadd.f32 0.0, %v708
    %v710 = vpop.f32.mrf.mxu0
    %v711 = vadd.f32 0.0, %v710
    %v712 = vpop.f32.mrf.mxu0
    %v713 = vadd.f32 0.0, %v712
    %714 = vmatprep.mubr.bf16.mxu0 %v251
    %715 = vmatmul.mubr.bf16.gmra.mxu0 %v250
    %v716 = vpop.f32.mrf.mxu0
    %v717 = vadd.f32 0.0, %v716
    %v718 = vpop.f32.mrf.mxu0
    %v719 = vadd.f32 0.0, %v718
    %v720 = vpop.f32.mrf.mxu0
    %v721 = vadd.f32 0.0, %v720
    %v722 = vpop.f32.mrf.mxu0
    %v723 = vadd.f32 0.0, %v722
    %724 = vdwg.mxu0
    %725 = vmatprep.subr.bf16.mxu0 %v495
    %726 = vmatpush1.bf16.msra.mxu0 %v494
    %727 = vmatprep.subr.bf16.mxu0 %v491
    %728 = vmatpush1.bf16.msra.mxu0 %v490
    %729 = vmatprep.subr.bf16.mxu0 %v487
    %730 = vmatpush1.bf16.msra.mxu0 %v486
    %731 = vmatprep.subr.bf16.mxu0 %v483
    %732 = vmatpush1.bf16.msra.mxu0 %v482
    %733 = vmatprep.subr.bf16.mxu0 %v479
    %734 = vmatpush1.bf16.msra.mxu0 %v478
    %735 = vmatprep.subr.bf16.mxu0 %v475
    %736 = vmatpush1.bf16.msra.mxu0 %v474
    %737 = vmatprep.subr.bf16.mxu0 %v471
    %738 = vmatpush1.bf16.msra.mxu0 %v470
    %739 = vmatprep.subr.bf16.mxu0 %v467
    %740 = vmatpush1.bf16.msra.mxu0 %v466
    %741 = vmatprep.subr.bf16.mxu0 %v527
    %742 = vmatpush2.bf16.msra.mxu0 %v526
    %743 = vmatprep.subr.bf16.mxu0 %v523
    %744 = vmatpush2.bf16.msra.mxu0 %v522
    %745 = vmatprep.subr.bf16.mxu0 %v519
    %746 = vmatpush2.bf16.msra.mxu0 %v518
    %747 = vmatprep.subr.bf16.mxu0 %v515
    %748 = vmatpush2.bf16.msra.mxu0 %v514
    %749 = vmatprep.subr.bf16.mxu0 %v511
    %750 = vmatpush2.bf16.msra.mxu0 %v510
    %751 = vmatprep.subr.bf16.mxu0 %v507
    %752 = vmatpush2.bf16.msra.mxu0 %v506
    %753 = vmatprep.subr.bf16.mxu0 %v503
    %754 = vmatpush2.bf16.msra.mxu0 %v502
    %755 = vmatprep.subr.bf16.mxu0 %v499
    %756 = vmatpush2.bf16.msra.mxu0 %v498
    %757 = vmatprep.mubr.bf16.mxu0 %v233
    %758 = vmatmul.mubr.bf16.gmra.mxu0 %v232
    %v759 = vpop.f32.mrf.mxu0
    %v760 = vadd.f32 0.0, %v759
    %v761 = vpop.f32.mrf.mxu0
    %v762 = vadd.f32 0.0, %v761
    %v763 = vpop.f32.mrf.mxu0
    %v764 = vadd.f32 0.0, %v763
    %v765 = vpop.f32.mrf.mxu0
    %v766 = vadd.f32 0.0, %v765
    %767 = vmatprep.mubr.bf16.mxu0 %v235
    %768 = vmatmul.mubr.bf16.gmra.mxu0 %v234
    %v769 = vpop.f32.mrf.mxu0
    %v770 = vadd.f32 0.0, %v769
    %v771 = vpop.f32.mrf.mxu0
    %v772 = vadd.f32 0.0, %v771
    %v773 = vpop.f32.mrf.mxu0
    %v774 = vadd.f32 0.0, %v773
    %v775 = vpop.f32.mrf.mxu0
    %v776 = vadd.f32 0.0, %v775
    %777 = vmatprep.mubr.bf16.mxu0 %v237
    %778 = vmatmul.mubr.bf16.gmra.mxu0 %v236
    %v779 = vpop.f32.mrf.mxu0
    %v780 = vadd.f32 0.0, %v779
    %v781 = vpop.f32.mrf.mxu0
    %v782 = vadd.f32 0.0, %v781
    %v783 = vpop.f32.mrf.mxu0
    %v784 = vadd.f32 0.0, %v783
    %v785 = vpop.f32.mrf.mxu0
    %v786 = vadd.f32 0.0, %v785
    %787 = vmatprep.mubr.bf16.mxu0 %v239
    %788 = vmatmul.mubr.bf16.gmra.mxu0 %v238
    %v789 = vpop.f32.mrf.mxu0
    %v790 = vadd.f32 0.0, %v789
    %v791 = vpop.f32.mrf.mxu0
    %v792 = vadd.f32 0.0, %v791
    %v793 = vpop.f32.mrf.mxu0
    %v794 = vadd.f32 0.0, %v793
    %v795 = vpop.f32.mrf.mxu0
    %v796 = vadd.f32 0.0, %v795
    %797 = vmatprep.mubr.bf16.mxu0 %v241
    %798 = vmatmul.mubr.bf16.gmra.mxu0 %v240
    %v799 = vpop.f32.mrf.mxu0
    %v800 = vadd.f32 0.0, %v799
    %v801 = vpop.f32.mrf.mxu0
    %v802 = vadd.f32 0.0, %v801
    %v803 = vpop.f32.mrf.mxu0
    %v804 = vadd.f32 0.0, %v803
    %v805 = vpop.f32.mrf.mxu0
    %v806 = vadd.f32 0.0, %v805
    %807 = vmatprep.mubr.bf16.mxu0 %v243
    %808 = vmatmul.mubr.bf16.gmra.mxu0 %v242
    %v809 = vpop.f32.mrf.mxu0
    %v810 = vadd.f32 0.0, %v809
    %v811 = vpop.f32.mrf.mxu0
    %v812 = vadd.f32 0.0, %v811
    %v813 = vpop.f32.mrf.mxu0
    %v814 = vadd.f32 0.0, %v813
    %v815 = vpop.f32.mrf.mxu0
    %v816 = vadd.f32 0.0, %v815
    %817 = vmatprep.mubr.bf16.mxu0 %v245
    %818 = vmatmul.mubr.bf16.gmra.mxu0 %v244
    %v819 = vpop.f32.mrf.mxu0
    %v820 = vadd.f32 0.0, %v819
    %v821 = vpop.f32.mrf.mxu0
    %v822 = vadd.f32 0.0, %v821
    %v823 = vpop.f32.mrf.mxu0
    %v824 = vadd.f32 0.0, %v823
    %v825 = vpop.f32.mrf.mxu0
    %v826 = vadd.f32 0.0, %v825
    %827 = vmatprep.mubr.bf16.mxu0 %v247
    %828 = vmatmul.mubr.bf16.gmra.mxu0 %v246
    %v829 = vpop.f32.mrf.mxu0
    %v830 = vadd.f32 0.0, %v829
    %v831 = vpop.f32.mrf.mxu0
    %v832 = vadd.f32 0.0, %v831
    %v833 = vpop.f32.mrf.mxu0
    %v834 = vadd.f32 0.0, %v833
    %v835 = vpop.f32.mrf.mxu0
    %v836 = vadd.f32 0.0, %v835
    %837 = vmatprep.mubr.bf16.mxu0 %v249
    %838 = vmatmul.mubr.bf16.gmra.mxu0 %v248
    %v839 = vpop.f32.mrf.mxu0
    %v840 = vadd.f32 0.0, %v839
    %v841 = vpop.f32.mrf.mxu0
    %v842 = vadd.f32 0.0, %v841
    %v843 = vpop.f32.mrf.mxu0
    %v844 = vadd.f32 0.0, %v843
    %v845 = vpop.f32.mrf.mxu0
    %v846 = vadd.f32 0.0, %v845
    %847 = vmatprep.mubr.bf16.mxu0 %v251
    %848 = vmatmul.mubr.bf16.gmra.mxu0 %v250
    %v849 = vpop.f32.mrf.mxu0
    %v850 = vadd.f32 0.0, %v849
    %v851 = vpop.f32.mrf.mxu0
    %v852 = vadd.f32 0.0, %v851
    %v853 = vpop.f32.mrf.mxu0
    %v854 = vadd.f32 0.0, %v853
    %v855 = vpop.f32.mrf.mxu0
    %v856 = vadd.f32 0.0, %v855
    %857 = vdwg.mxu0
    %v858 = vmul.f32 %v627, %v627
    %v859 = vmul.f32 %v629, %v629
    %v860 = vmul.f32 %v631, %v631
    %v861 = vmul.f32 %v633, %v633
    %v862 = vmul.f32 %v637, %v637
    %v863 = vmul.f32 %v639, %v639
    %v864 = vmul.f32 %v641, %v641
    %v865 = vmul.f32 %v643, %v643
    %v866 = vmul.f32 %v647, %v647
    %v867 = vmul.f32 %v649, %v649
    %v868 = vmul.f32 %v651, %v651
    %v869 = vmul.f32 %v653, %v653
    %v870 = vmul.f32 %v657, %v657
    %v871 = vmul.f32 %v659, %v659
    %v872 = vmul.f32 %v661, %v661
    %v873 = vmul.f32 %v663, %v663
    %v874 = vmul.f32 %v667, %v667
    %v875 = vmul.f32 %v669, %v669
    %v876 = vmul.f32 %v671, %v671
    %v877 = vmul.f32 %v673, %v673
    %v878 = vmul.f32 %v760, %v760
    %v879 = vmul.f32 %v762, %v762
    %v880 = vmul.f32 %v764, %v764
    %v881 = vmul.f32 %v766, %v766
    %v882 = vmul.f32 %v770, %v770
    %v883 = vmul.f32 %v772, %v772
    %v884 = vmul.f32 %v774, %v774
    %v885 = vmul.f32 %v776, %v776
    %v886 = vmul.f32 %v780, %v780
    %v887 = vmul.f32 %v782, %v782
    %v888 = vmul.f32 %v784, %v784
    %v889 = vmul.f32 %v786, %v786
    %v890 = vmul.f32 %v790, %v790
    %v891 = vmul.f32 %v792, %v792
    %v892 = vmul.f32 %v794, %v794
    %v893 = vmul.f32 %v796, %v796
    %v894 = vmul.f32 %v800, %v800
    %v895 = vmul.f32 %v802, %v802
    %v896 = vmul.f32 %v804, %v804
    %v897 = vmul.f32 %v806, %v806
    %v898 = vadd.f32 %v858, %v878
    %v899 = vadd.f32 %v859, %v879
    %v900 = vadd.f32 %v860, %v880
    %v901 = vadd.f32 %v861, %v881
    %v902 = vadd.f32 %v862, %v882
    %v903 = vadd.f32 %v863, %v883
    %v904 = vadd.f32 %v864, %v884
    %v905 = vadd.f32 %v865, %v885
    %v906 = vadd.f32 %v866, %v886
    %v907 = vadd.f32 %v867, %v887
    %v908 = vadd.f32 %v868, %v888
    %v909 = vadd.f32 %v869, %v889
    %v910 = vadd.f32 %v870, %v890
    %v911 = vadd.f32 %v871, %v891
    %v912 = vadd.f32 %v872, %v892
    %v913 = vadd.f32 %v873, %v893
    %v914 = vadd.f32 %v874, %v894
    %v915 = vadd.f32 %v875, %v895
    %v916 = vadd.f32 %v876, %v896
    %v917 = vadd.f32 %v877, %v897
    %v918 = vmax.f32 %v898, 1e-08
    %v919 = vmax.f32 %v899, 1e-08
    %v920 = vmax.f32 %v900, 1e-08
    %v921 = vmax.f32 %v901, 1e-08
    %v922 = vmax.f32 %v902, 1e-08
    %v923 = vmax.f32 %v903, 1e-08
    %v924 = vmax.f32 %v904, 1e-08
    %v925 = vmax.f32 %v905, 1e-08
    %v926 = vmax.f32 %v906, 1e-08
    %v927 = vmax.f32 %v907, 1e-08
    %v928 = vmax.f32 %v908, 1e-08
    %v929 = vmax.f32 %v909, 1e-08
    %v930 = vmax.f32 %v910, 1e-08
    %v931 = vmax.f32 %v911, 1e-08
    %v932 = vmax.f32 %v912, 1e-08
    %v933 = vmax.f32 %v913, 1e-08
    %v934 = vmax.f32 %v914, 1e-08
    %v935 = vmax.f32 %v915, 1e-08
    %v936 = vmax.f32 %v916, 1e-08
    %v937 = vmax.f32 %v917, 1e-08
    %v938 = vrsqrt.pop %v918
    %v939 = vmul.f32 %v918, %v938
    %vm940 = vcmp.eq.f32.partialorder %v918, inf
    %v941 = vsel %vm940, %v918, %v939
    %vm942 = vcmp.eq.f32.partialorder %v918, 0.0
    %v943 = vand.u32 %v918, 2147483648
    %v944 = vsel %vm942, %v943, %v941
    %v945 = vrsqrt.pop %v919
    %v946 = vmul.f32 %v919, %v945
    %vm947 = vcmp.eq.f32.partialorder %v919, inf
    %v948 = vsel %vm947, %v919, %v946
    %vm949 = vcmp.eq.f32.partialorder %v919, 0.0
    %v950 = vand.u32 %v919, 2147483648
    %v951 = vsel %vm949, %v950, %v948
    %v952 = vrsqrt.pop %v920
    %v953 = vmul.f32 %v920, %v952
    %vm954 = vcmp.eq.f32.partialorder %v920, inf
    %v955 = vsel %vm954, %v920, %v953
    %vm956 = vcmp.eq.f32.partialorder %v920, 0.0
    %v957 = vand.u32 %v920, 2147483648
    %v958 = vsel %vm956, %v957, %v955
    %v959 = vrsqrt.pop %v921
    %v960 = vmul.f32 %v921, %v959
    %vm961 = vcmp.eq.f32.partialorder %v921, inf
    %v962 = vsel %vm961, %v921, %v960
    %vm963 = vcmp.eq.f32.partialorder %v921, 0.0
    %v964 = vand.u32 %v921, 2147483648
    %v965 = vsel %vm963, %v964, %v962
    %v966 = vrsqrt.pop %v922
    %v967 = vmul.f32 %v922, %v966
    %vm968 = vcmp.eq.f32.partialorder %v922, inf
    %v969 = vsel %vm968, %v922, %v967
    %vm970 = vcmp.eq.f32.partialorder %v922, 0.0
    %v971 = vand.u32 %v922, 2147483648
    %v972 = vsel %vm970, %v971, %v969
    %v973 = vrsqrt.pop %v923
    %v974 = vmul.f32 %v923, %v973
    %vm975 = vcmp.eq.f32.partialorder %v923, inf
    %v976 = vsel %vm975, %v923, %v974
    %vm977 = vcmp.eq.f32.partialorder %v923, 0.0
    %v978 = vand.u32 %v923, 2147483648
    %v979 = vsel %vm977, %v978, %v976
    %v980 = vrsqrt.pop %v924
    %v981 = vmul.f32 %v924, %v980
    %vm982 = vcmp.eq.f32.partialorder %v924, inf
    %v983 = vsel %vm982, %v924, %v981
    %vm984 = vcmp.eq.f32.partialorder %v924, 0.0
    %v985 = vand.u32 %v924, 2147483648
    %v986 = vsel %vm984, %v985, %v983
    %v987 = vrsqrt.pop %v925
    %v988 = vmul.f32 %v925, %v987
    %vm989 = vcmp.eq.f32.partialorder %v925, inf
    %v990 = vsel %vm989, %v925, %v988
    %vm991 = vcmp.eq.f32.partialorder %v925, 0.0
    %v992 = vand.u32 %v925, 2147483648
    %v993 = vsel %vm991, %v992, %v990
    %v994 = vrsqrt.pop %v926
    %v995 = vmul.f32 %v926, %v994
    %vm996 = vcmp.eq.f32.partialorder %v926, inf
    %v997 = vsel %vm996, %v926, %v995
    %vm998 = vcmp.eq.f32.partialorder %v926, 0.0
    %v999 = vand.u32 %v926, 2147483648
    %v1000 = vsel %vm998, %v999, %v997
    %v1001 = vrsqrt.pop %v927
    %v1002 = vmul.f32 %v927, %v1001
    %vm1003 = vcmp.eq.f32.partialorder %v927, inf
    %v1004 = vsel %vm1003, %v927, %v1002
    %vm1005 = vcmp.eq.f32.partialorder %v927, 0.0
    %v1006 = vand.u32 %v927, 2147483648
    %v1007 = vsel %vm1005, %v1006, %v1004
    %v1008 = vrsqrt.pop %v928
    %v1009 = vmul.f32 %v928, %v1008
    %vm1010 = vcmp.eq.f32.partialorder %v928, inf
    %v1011 = vsel %vm1010, %v928, %v1009
    %vm1012 = vcmp.eq.f32.partialorder %v928, 0.0
    %v1013 = vand.u32 %v928, 2147483648
    %v1014 = vsel %vm1012, %v1013, %v1011
    %v1015 = vrsqrt.pop %v929
    %v1016 = vmul.f32 %v929, %v1015
    %vm1017 = vcmp.eq.f32.partialorder %v929, inf
    %v1018 = vsel %vm1017, %v929, %v1016
    %vm1019 = vcmp.eq.f32.partialorder %v929, 0.0
    %v1020 = vand.u32 %v929, 2147483648
    %v1021 = vsel %vm1019, %v1020, %v1018
    %v1022 = vrsqrt.pop %v930
    %v1023 = vmul.f32 %v930, %v1022
    %vm1024 = vcmp.eq.f32.partialorder %v930, inf
    %v1025 = vsel %vm1024, %v930, %v1023
    %vm1026 = vcmp.eq.f32.partialorder %v930, 0.0
    %v1027 = vand.u32 %v930, 2147483648
    %v1028 = vsel %vm1026, %v1027, %v1025
    %v1029 = vrsqrt.pop %v931
    %v1030 = vmul.f32 %v931, %v1029
    %vm1031 = vcmp.eq.f32.partialorder %v931, inf
    %v1032 = vsel %vm1031, %v931, %v1030
    %vm1033 = vcmp.eq.f32.partialorder %v931, 0.0
    %v1034 = vand.u32 %v931, 2147483648
    %v1035 = vsel %vm1033, %v1034, %v1032
    %v1036 = vrsqrt.pop %v932
    %v1037 = vmul.f32 %v932, %v1036
    %vm1038 = vcmp.eq.f32.partialorder %v932, inf
    %v1039 = vsel %vm1038, %v932, %v1037
    %vm1040 = vcmp.eq.f32.partialorder %v932, 0.0
    %v1041 = vand.u32 %v932, 2147483648
    %v1042 = vsel %vm1040, %v1041, %v1039
    %v1043 = vrsqrt.pop %v933
    %v1044 = vmul.f32 %v933, %v1043
    %vm1045 = vcmp.eq.f32.partialorder %v933, inf
    %v1046 = vsel %vm1045, %v933, %v1044
    %vm1047 = vcmp.eq.f32.partialorder %v933, 0.0
    %v1048 = vand.u32 %v933, 2147483648
    %v1049 = vsel %vm1047, %v1048, %v1046
    %v1050 = vrsqrt.pop %v934
    %v1051 = vmul.f32 %v934, %v1050
    %vm1052 = vcmp.eq.f32.partialorder %v934, inf
    %v1053 = vsel %vm1052, %v934, %v1051
    %vm1054 = vcmp.eq.f32.partialorder %v934, 0.0
    %v1055 = vand.u32 %v934, 2147483648
    %v1056 = vsel %vm1054, %v1055, %v1053
    %v1057 = vrsqrt.pop %v935
    %v1058 = vmul.f32 %v935, %v1057
    %vm1059 = vcmp.eq.f32.partialorder %v935, inf
    %v1060 = vsel %vm1059, %v935, %v1058
    %vm1061 = vcmp.eq.f32.partialorder %v935, 0.0
    %v1062 = vand.u32 %v935, 2147483648
    %v1063 = vsel %vm1061, %v1062, %v1060
    %v1064 = vrsqrt.pop %v936
    %v1065 = vmul.f32 %v936, %v1064
    %vm1066 = vcmp.eq.f32.partialorder %v936, inf
    %v1067 = vsel %vm1066, %v936, %v1065
    %vm1068 = vcmp.eq.f32.partialorder %v936, 0.0
    %v1069 = vand.u32 %v936, 2147483648
    %v1070 = vsel %vm1068, %v1069, %v1067
    %v1071 = vrsqrt.pop %v937
    %v1072 = vmul.f32 %v937, %v1071
    %vm1073 = vcmp.eq.f32.partialorder %v937, inf
    %v1074 = vsel %vm1073, %v937, %v1072
    %vm1075 = vcmp.eq.f32.partialorder %v937, 0.0
    %v1076 = vand.u32 %v937, 2147483648
    %v1077 = vsel %vm1075, %v1076, %v1074
    %v1078 = vmul.f32 %v677, %v677
    %v1079 = vmul.f32 %v679, %v679
    %v1080 = vmul.f32 %v681, %v681
    %v1081 = vmul.f32 %v683, %v683
    %v1082 = vmul.f32 %v687, %v687
    %v1083 = vmul.f32 %v689, %v689
    %v1084 = vmul.f32 %v691, %v691
    %v1085 = vmul.f32 %v693, %v693
    %v1086 = vmul.f32 %v697, %v697
    %v1087 = vmul.f32 %v699, %v699
    %v1088 = vmul.f32 %v701, %v701
    %v1089 = vmul.f32 %v703, %v703
    %v1090 = vmul.f32 %v707, %v707
    %v1091 = vmul.f32 %v709, %v709
    %v1092 = vmul.f32 %v711, %v711
    %v1093 = vmul.f32 %v713, %v713
    %v1094 = vmul.f32 %v717, %v717
    %v1095 = vmul.f32 %v719, %v719
    %v1096 = vmul.f32 %v721, %v721
    %v1097 = vmul.f32 %v723, %v723
    %v1098 = vmul.f32 %v810, %v810
    %v1099 = vmul.f32 %v812, %v812
    %v1100 = vmul.f32 %v814, %v814
    %v1101 = vmul.f32 %v816, %v816
    %v1102 = vmul.f32 %v820, %v820
    %v1103 = vmul.f32 %v822, %v822
    %v1104 = vmul.f32 %v824, %v824
    %v1105 = vmul.f32 %v826, %v826
    %v1106 = vmul.f32 %v830, %v830
    %v1107 = vmul.f32 %v832, %v832
    %v1108 = vmul.f32 %v834, %v834
    %v1109 = vmul.f32 %v836, %v836
    %v1110 = vmul.f32 %v840, %v840
    %v1111 = vmul.f32 %v842, %v842
    %v1112 = vmul.f32 %v844, %v844
    %v1113 = vmul.f32 %v846, %v846
    %v1114 = vmul.f32 %v850, %v850
    %v1115 = vmul.f32 %v852, %v852
    %v1116 = vmul.f32 %v854, %v854
    %v1117 = vmul.f32 %v856, %v856
    %v1118 = vadd.f32 %v1078, %v1098
    %v1119 = vadd.f32 %v1079, %v1099
    %v1120 = vadd.f32 %v1080, %v1100
    %v1121 = vadd.f32 %v1081, %v1101
    %v1122 = vadd.f32 %v1082, %v1102
    %v1123 = vadd.f32 %v1083, %v1103
    %v1124 = vadd.f32 %v1084, %v1104
    %v1125 = vadd.f32 %v1085, %v1105
    %v1126 = vadd.f32 %v1086, %v1106
    %v1127 = vadd.f32 %v1087, %v1107
    %v1128 = vadd.f32 %v1088, %v1108
    %v1129 = vadd.f32 %v1089, %v1109
    %v1130 = vadd.f32 %v1090, %v1110
    %v1131 = vadd.f32 %v1091, %v1111
    %v1132 = vadd.f32 %v1092, %v1112
    %v1133 = vadd.f32 %v1093, %v1113
    %v1134 = vadd.f32 %v1094, %v1114
    %v1135 = vadd.f32 %v1095, %v1115
    %v1136 = vadd.f32 %v1096, %v1116
    %v1137 = vadd.f32 %v1097, %v1117
    %v1138 = vmax.f32 %v1118, 1e-08
    %v1139 = vmax.f32 %v1119, 1e-08
    %v1140 = vmax.f32 %v1120, 1e-08
    %v1141 = vmax.f32 %v1121, 1e-08
    %v1142 = vmax.f32 %v1122, 1e-08
    %v1143 = vmax.f32 %v1123, 1e-08
    %v1144 = vmax.f32 %v1124, 1e-08
    %v1145 = vmax.f32 %v1125, 1e-08
    %v1146 = vmax.f32 %v1126, 1e-08
    %v1147 = vmax.f32 %v1127, 1e-08
    %v1148 = vmax.f32 %v1128, 1e-08
    %v1149 = vmax.f32 %v1129, 1e-08
    %v1150 = vmax.f32 %v1130, 1e-08
    %v1151 = vmax.f32 %v1131, 1e-08
    %v1152 = vmax.f32 %v1132, 1e-08
    %v1153 = vmax.f32 %v1133, 1e-08
    %v1154 = vmax.f32 %v1134, 1e-08
    %v1155 = vmax.f32 %v1135, 1e-08
    %v1156 = vmax.f32 %v1136, 1e-08
    %v1157 = vmax.f32 %v1137, 1e-08
    %v1158 = vrsqrt.pop %v1138
    %v1159 = vmul.f32 %v1138, %v1158
    %vm1160 = vcmp.eq.f32.partialorder %v1138, inf
    %v1161 = vsel %vm1160, %v1138, %v1159
    %vm1162 = vcmp.eq.f32.partialorder %v1138, 0.0
    %v1163 = vand.u32 %v1138, 2147483648
    %v1164 = vsel %vm1162, %v1163, %v1161
    %v1165 = vrsqrt.pop %v1139
    %v1166 = vmul.f32 %v1139, %v1165
    %vm1167 = vcmp.eq.f32.partialorder %v1139, inf
    %v1168 = vsel %vm1167, %v1139, %v1166
    %vm1169 = vcmp.eq.f32.partialorder %v1139, 0.0
    %v1170 = vand.u32 %v1139, 2147483648
    %v1171 = vsel %vm1169, %v1170, %v1168
    %v1172 = vrsqrt.pop %v1140
    %v1173 = vmul.f32 %v1140, %v1172
    %vm1174 = vcmp.eq.f32.partialorder %v1140, inf
    %v1175 = vsel %vm1174, %v1140, %v1173
    %vm1176 = vcmp.eq.f32.partialorder %v1140, 0.0
    %v1177 = vand.u32 %v1140, 2147483648
    %v1178 = vsel %vm1176, %v1177, %v1175
    %v1179 = vrsqrt.pop %v1141
    %v1180 = vmul.f32 %v1141, %v1179
    %vm1181 = vcmp.eq.f32.partialorder %v1141, inf
    %v1182 = vsel %vm1181, %v1141, %v1180
    %vm1183 = vcmp.eq.f32.partialorder %v1141, 0.0
    %v1184 = vand.u32 %v1141, 2147483648
    %v1185 = vsel %vm1183, %v1184, %v1182
    %v1186 = vrsqrt.pop %v1142
    %v1187 = vmul.f32 %v1142, %v1186
    %vm1188 = vcmp.eq.f32.partialorder %v1142, inf
    %v1189 = vsel %vm1188, %v1142, %v1187
    %vm1190 = vcmp.eq.f32.partialorder %v1142, 0.0
    %v1191 = vand.u32 %v1142, 2147483648
    %v1192 = vsel %vm1190, %v1191, %v1189
    %v1193 = vrsqrt.pop %v1143
    %v1194 = vmul.f32 %v1143, %v1193
    %vm1195 = vcmp.eq.f32.partialorder %v1143, inf
    %v1196 = vsel %vm1195, %v1143, %v1194
    %vm1197 = vcmp.eq.f32.partialorder %v1143, 0.0
    %v1198 = vand.u32 %v1143, 2147483648
    %v1199 = vsel %vm1197, %v1198, %v1196
    %v1200 = vrsqrt.pop %v1144
    %v1201 = vmul.f32 %v1144, %v1200
    %vm1202 = vcmp.eq.f32.partialorder %v1144, inf
    %v1203 = vsel %vm1202, %v1144, %v1201
    %vm1204 = vcmp.eq.f32.partialorder %v1144, 0.0
    %v1205 = vand.u32 %v1144, 2147483648
    %v1206 = vsel %vm1204, %v1205, %v1203
    %v1207 = vrsqrt.pop %v1145
    %v1208 = vmul.f32 %v1145, %v1207
    %vm1209 = vcmp.eq.f32.partialorder %v1145, inf
    %v1210 = vsel %vm1209, %v1145, %v1208
    %vm1211 = vcmp.eq.f32.partialorder %v1145, 0.0
    %v1212 = vand.u32 %v1145, 2147483648
    %v1213 = vsel %vm1211, %v1212, %v1210
    %v1214 = vrsqrt.pop %v1146
    %v1215 = vmul.f32 %v1146, %v1214
    %vm1216 = vcmp.eq.f32.partialorder %v1146, inf
    %v1217 = vsel %vm1216, %v1146, %v1215
    %vm1218 = vcmp.eq.f32.partialorder %v1146, 0.0
    %v1219 = vand.u32 %v1146, 2147483648
    %v1220 = vsel %vm1218, %v1219, %v1217
    %v1221 = vrsqrt.pop %v1147
    %v1222 = vmul.f32 %v1147, %v1221
    %vm1223 = vcmp.eq.f32.partialorder %v1147, inf
    %v1224 = vsel %vm1223, %v1147, %v1222
    %vm1225 = vcmp.eq.f32.partialorder %v1147, 0.0
    %v1226 = vand.u32 %v1147, 2147483648
    %v1227 = vsel %vm1225, %v1226, %v1224
    %v1228 = vrsqrt.pop %v1148
    %v1229 = vmul.f32 %v1148, %v1228
    %vm1230 = vcmp.eq.f32.partialorder %v1148, inf
    %v1231 = vsel %vm1230, %v1148, %v1229
    %vm1232 = vcmp.eq.f32.partialorder %v1148, 0.0
    %v1233 = vand.u32 %v1148, 2147483648
    %v1234 = vsel %vm1232, %v1233, %v1231
    %v1235 = vrsqrt.pop %v1149
    %v1236 = vmul.f32 %v1149, %v1235
    %vm1237 = vcmp.eq.f32.partialorder %v1149, inf
    %v1238 = vsel %vm1237, %v1149, %v1236
    %vm1239 = vcmp.eq.f32.partialorder %v1149, 0.0
    %v1240 = vand.u32 %v1149, 2147483648
    %v1241 = vsel %vm1239, %v1240, %v1238
    %v1242 = vrsqrt.pop %v1150
    %v1243 = vmul.f32 %v1150, %v1242
    %vm1244 = vcmp.eq.f32.partialorder %v1150, inf
    %v1245 = vsel %vm1244, %v1150, %v1243
    %vm1246 = vcmp.eq.f32.partialorder %v1150, 0.0
    %v1247 = vand.u32 %v1150, 2147483648
    %v1248 = vsel %vm1246, %v1247, %v1245
    %v1249 = vrsqrt.pop %v1151
    %v1250 = vmul.f32 %v1151, %v1249
    %vm1251 = vcmp.eq.f32.partialorder %v1151, inf
    %v1252 = vsel %vm1251, %v1151, %v1250
    %vm1253 = vcmp.eq.f32.partialorder %v1151, 0.0
    %v1254 = vand.u32 %v1151, 2147483648
    %v1255 = vsel %vm1253, %v1254, %v1252
    %v1256 = vrsqrt.pop %v1152
    %v1257 = vmul.f32 %v1152, %v1256
    %vm1258 = vcmp.eq.f32.partialorder %v1152, inf
    %v1259 = vsel %vm1258, %v1152, %v1257
    %vm1260 = vcmp.eq.f32.partialorder %v1152, 0.0
    %v1261 = vand.u32 %v1152, 2147483648
    %v1262 = vsel %vm1260, %v1261, %v1259
    %v1263 = vrsqrt.pop %v1153
    %v1264 = vmul.f32 %v1153, %v1263
    %vm1265 = vcmp.eq.f32.partialorder %v1153, inf
    %v1266 = vsel %vm1265, %v1153, %v1264
    %vm1267 = vcmp.eq.f32.partialorder %v1153, 0.0
    %v1268 = vand.u32 %v1153, 2147483648
    %v1269 = vsel %vm1267, %v1268, %v1266
    %v1270 = vrsqrt.pop %v1154
    %v1271 = vmul.f32 %v1154, %v1270
    %vm1272 = vcmp.eq.f32.partialorder %v1154, inf
    %v1273 = vsel %vm1272, %v1154, %v1271
    %vm1274 = vcmp.eq.f32.partialorder %v1154, 0.0
    %v1275 = vand.u32 %v1154, 2147483648
    %v1276 = vsel %vm1274, %v1275, %v1273
    %v1277 = vrsqrt.pop %v1155
    %v1278 = vmul.f32 %v1155, %v1277
    %vm1279 = vcmp.eq.f32.partialorder %v1155, inf
    %v1280 = vsel %vm1279, %v1155, %v1278
    %vm1281 = vcmp.eq.f32.partialorder %v1155, 0.0
    %v1282 = vand.u32 %v1155, 2147483648
    %v1283 = vsel %vm1281, %v1282, %v1280
    %v1284 = vrsqrt.pop %v1156
    %v1285 = vmul.f32 %v1156, %v1284
    %vm1286 = vcmp.eq.f32.partialorder %v1156, inf
    %v1287 = vsel %vm1286, %v1156, %v1285
    %vm1288 = vcmp.eq.f32.partialorder %v1156, 0.0
    %v1289 = vand.u32 %v1156, 2147483648
    %v1290 = vsel %vm1288, %v1289, %v1287
    %v1291 = vrsqrt.pop %v1157
    %v1292 = vmul.f32 %v1157, %v1291
    %vm1293 = vcmp.eq.f32.partialorder %v1157, inf
    %v1294 = vsel %vm1293, %v1157, %v1292
    %vm1295 = vcmp.eq.f32.partialorder %v1157, 0.0
    %v1296 = vand.u32 %v1157, 2147483648
    %v1297 = vsel %vm1295, %v1296, %v1294
    %v1298 = vsub.f32 %v944, %v1164
    %v1299 = vsub.f32 %v951, %v1171
    %v1300 = vsub.f32 %v958, %v1178
    %v1301 = vsub.f32 %v965, %v1185
    %v1302 = vsub.f32 %v972, %v1192
    %v1303 = vsub.f32 %v979, %v1199
    %v1304 = vsub.f32 %v986, %v1206
    %v1305 = vsub.f32 %v993, %v1213
    %v1306 = vsub.f32 %v1000, %v1220
    %v1307 = vsub.f32 %v1007, %v1227
    %v1308 = vsub.f32 %v1014, %v1234
    %v1309 = vsub.f32 %v1021, %v1241
    %v1310 = vsub.f32 %v1028, %v1248
    %v1311 = vsub.f32 %v1035, %v1255
    %v1312 = vsub.f32 %v1042, %v1262
    %v1313 = vsub.f32 %v1049, %v1269
    %v1314 = vsub.f32 %v1056, %v1276
    %v1315 = vsub.f32 %v1063, %v1283
    %v1316 = vsub.f32 %v1070, %v1290
    %v1317 = vsub.f32 %v1077, %v1297
    %v1318 = vpack.c.bf16 %v1300, %v1298
    %v1319 = vpack.c.bf16 %v1301, %v1299
    %v1320 = vpack.c.bf16 %v1304, %v1302
    %v1321 = vpack.c.bf16 %v1305, %v1303
    %v1322 = vpack.c.bf16 %v1308, %v1306
    %v1323 = vpack.c.bf16 %v1309, %v1307
    %v1324 = vpack.c.bf16 %v1312, %v1310
    %v1325 = vpack.c.bf16 %v1313, %v1311
    %v1326 = vpack.c.bf16 %v1316, %v1314
    %v1327 = vpack.c.bf16 %v1317, %v1315
    %v1328 = vld [vmem:[#allocation7] sm:$0xf]
    %v1329 = vld [vmem:[#allocation7 + $0x4] sm:$0xf]
    %v1330 = vld [vmem:[#allocation7 + $0x8] sm:$0xf]
    %v1331 = vld [vmem:[#allocation7 + $0xc] sm:$0xf]
    %v1332 = vld [vmem:[#allocation7 + $0x10] sm:$0xf]
    %v1333 = vld [vmem:[#allocation7 + $0x14] sm:$0xf]
    %v1334 = vld [vmem:[#allocation7 + $0x18] sm:$0xf]
    %v1335 = vld [vmem:[#allocation7 + $0x1c] sm:$0xf]
    %v1336 = vld [vmem:[#allocation7 + $0x20] sm:$0xf]
    %v1337 = vld [vmem:[#allocation7 + $0x24] sm:$0xf]
    %v1338 = vld [vmem:[#allocation7 + $0x28] sm:$0xf]
    %v1339 = vld [vmem:[#allocation7 + $0x2c] sm:$0xf]
    %v1340 = vld [vmem:[#allocation7 + $0x30] sm:$0xf]
    %v1341 = vld [vmem:[#allocation7 + $0x34] sm:$0xf]
    %v1342 = vld [vmem:[#allocation7 + $0x38] sm:$0xf]
    %v1343 = vld [vmem:[#allocation7 + $0x3c] sm:$0xf]
    %v1344 = vld [vmem:[#allocation7 + $0x40] sm:$0xf]
    %v1345 = vld [vmem:[#allocation7 + $0x44] sm:$0xf]
    %v1346 = vld [vmem:[#allocation7 + $0x48] sm:$0xf]
    %v1347 = vld [vmem:[#allocation7 + $0x4c] sm:$0xf]
    %v1348 = vld [vmem:[#allocation7 + $0x50] sm:$0xf]
    %v1349 = vld [vmem:[#allocation7 + $0x54] sm:$0xf]
    %v1350 = vld [vmem:[#allocation7 + $0x58] sm:$0xf]
    %v1351 = vld [vmem:[#allocation7 + $0x5c] sm:$0xf]
    %v1352 = vld [vmem:[#allocation7 + $0x60] sm:$0xf]
    %v1353 = vld [vmem:[#allocation7 + $0x64] sm:$0xf]
    %v1354 = vld [vmem:[#allocation7 + $0x68] sm:$0xf]
    %v1355 = vld [vmem:[#allocation7 + $0x6c] sm:$0xf]
    %v1356 = vld [vmem:[#allocation7 + $0x70] sm:$0xf]
    %v1357 = vld [vmem:[#allocation7 + $0x74] sm:$0xf]
    %v1358 = vld [vmem:[#allocation7 + $0x78] sm:$0xf]
    %v1359 = vld [vmem:[#allocation7 + $0x7c] sm:$0xf]
    %v1392 = vunpack.c.l.b16 %v1328
    %v1393 = vunpack.c.l.b16 %v1329
    %v1394 = vunpack.c.l.b16 %v1330
    %v1395 = vunpack.c.l.b16 %v1331
    %v1396 = vunpack.c.l.b16 %v1332
    %v1397 = vunpack.c.l.b16 %v1333
    %v1398 = vunpack.c.l.b16 %v1334
    %v1399 = vunpack.c.l.b16 %v1335
    %v1400 = vunpack.c.l.b16 %v1336
    %v1401 = vunpack.c.l.b16 %v1337
    %v1402 = vunpack.c.l.b16 %v1338
    %v1403 = vunpack.c.l.b16 %v1339
    %v1404 = vunpack.c.l.b16 %v1340
    %v1405 = vunpack.c.l.b16 %v1341
    %v1406 = vunpack.c.l.b16 %v1342
    %v1407 = vunpack.c.l.b16 %v1343
    %v1408 = vunpack.c.l.b16 %v1344
    %v1409 = vunpack.c.l.b16 %v1345
    %v1410 = vunpack.c.l.b16 %v1346
    %v1411 = vunpack.c.l.b16 %v1347
    %v1412 = vunpack.c.l.b16 %v1348
    %v1413 = vunpack.c.l.b16 %v1349
    %v1414 = vunpack.c.l.b16 %v1350
    %v1415 = vunpack.c.l.b16 %v1351
    %v1416 = vunpack.c.l.b16 %v1352
    %v1417 = vunpack.c.l.b16 %v1353
    %v1418 = vunpack.c.l.b16 %v1354
    %v1419 = vunpack.c.l.b16 %v1355
    %v1420 = vunpack.c.l.b16 %v1356
    %v1421 = vunpack.c.l.b16 %v1357
    %v1422 = vunpack.c.l.b16 %v1358
    %v1423 = vunpack.c.l.b16 %v1359
    %v1424 = vpack.c.b16 %v1393, %v1392
    %v1425 = vpack.c.b16 %v1395, %v1394
    %v1426 = vpack.c.b16 %v1397, %v1396
    %v1427 = vpack.c.b16 %v1399, %v1398
    %v1428 = vpack.c.b16 %v1401, %v1400
    %v1429 = vpack.c.b16 %v1403, %v1402
    %v1430 = vpack.c.b16 %v1405, %v1404
    %v1431 = vpack.c.b16 %v1407, %v1406
    %v1432 = vpack.c.b16 %v1409, %v1408
    %v1433 = vpack.c.b16 %v1411, %v1410
    %v1434 = vpack.c.b16 %v1413, %v1412
    %v1435 = vpack.c.b16 %v1415, %v1414
    %v1436 = vpack.c.b16 %v1417, %v1416
    %v1437 = vpack.c.b16 %v1419, %v1418
    %v1438 = vpack.c.b16 %v1421, %v1420
    %v1439 = vpack.c.b16 %v1423, %v1422
    %1456 = vmatprep.subr.bf16.mxu0 0
    %1457 = vmatpush1.bf16.msra.mxu0 %v1431
    %1458 = vmatprep.subr.bf16.mxu0 0
    %1459 = vmatpush1.bf16.msra.mxu0 %v1430
    %1460 = vmatprep.subr.bf16.mxu0 0
    %1461 = vmatpush1.bf16.msra.mxu0 %v1429
    %1462 = vmatprep.subr.bf16.mxu0 0
    %1463 = vmatpush1.bf16.msra.mxu0 %v1428
    %1464 = vmatprep.subr.bf16.mxu0 0
    %1465 = vmatpush1.bf16.msra.mxu0 %v1427
    %1466 = vmatprep.subr.bf16.mxu0 0
    %1467 = vmatpush1.bf16.msra.mxu0 %v1426
    %1468 = vmatprep.subr.bf16.mxu0 0
    %1469 = vmatpush1.bf16.msra.mxu0 %v1425
    %1470 = vmatprep.subr.bf16.mxu0 0
    %1471 = vmatpush1.bf16.msra.mxu0 %v1424
    %1472 = vmatprep.subr.bf16.mxu0 0
    %1473 = vmatpush2.bf16.msra.mxu0 %v1439
    %1474 = vmatprep.subr.bf16.mxu0 0
    %1475 = vmatpush2.bf16.msra.mxu0 %v1438
    %1476 = vmatprep.subr.bf16.mxu0 0
    %1477 = vmatpush2.bf16.msra.mxu0 %v1437
    %1478 = vmatprep.subr.bf16.mxu0 0
    %1479 = vmatpush2.bf16.msra.mxu0 %v1436
    %1480 = vmatprep.subr.bf16.mxu0 0
    %1481 = vmatpush2.bf16.msra.mxu0 %v1435
    %1482 = vmatprep.subr.bf16.mxu0 0
    %1483 = vmatpush2.bf16.msra.mxu0 %v1434
    %1484 = vmatprep.subr.bf16.mxu0 0
    %1485 = vmatpush2.bf16.msra.mxu0 %v1433
    %1486 = vmatprep.subr.bf16.mxu0 0
    %1487 = vmatpush2.bf16.msra.mxu0 %v1432
    %1488 = vmatprep.mubr.bf16.mxu0 %v1319
    %1489 = vmatmul.mubr.bf16.gmra.mxu0 %v1318
    %v1490 = vpop.f32.mrf.mxu0
    %v1491 = vadd.f32 0.0, %v1490
    %v1492 = vpop.f32.mrf.mxu0
    %v1493 = vpop.f32.mrf.mxu0
    %v1494 = vadd.f32 0.0, %v1493
    %v1495 = vpop.f32.mrf.mxu0
    %1496 = vmatprep.mubr.bf16.mxu0 %v1321
    %1497 = vmatmul.mubr.bf16.gmra.mxu0 %v1320
    %v1498 = vpop.f32.mrf.mxu0
    %v1499 = vadd.f32 0.0, %v1498
    %v1500 = vpop.f32.mrf.mxu0
    %v1501 = vpop.f32.mrf.mxu0
    %v1502 = vadd.f32 0.0, %v1501
    %v1503 = vpop.f32.mrf.mxu0
    %1504 = vmatprep.mubr.bf16.mxu0 %v1323
    %1505 = vmatmul.mubr.bf16.gmra.mxu0 %v1322
    %v1506 = vpop.f32.mrf.mxu0
    %v1507 = vadd.f32 0.0, %v1506
    %v1508 = vpop.f32.mrf.mxu0
    %v1509 = vpop.f32.mrf.mxu0
    %v1510 = vadd.f32 0.0, %v1509
    %v1511 = vpop.f32.mrf.mxu0
    %1512 = vmatprep.mubr.bf16.mxu0 %v1325
    %1513 = vmatmul.mubr.bf16.gmra.mxu0 %v1324
    %v1514 = vpop.f32.mrf.mxu0
    %v1515 = vadd.f32 0.0, %v1514
    %v1516 = vpop.f32.mrf.mxu0
    %v1517 = vpop.f32.mrf.mxu0
    %v1518 = vadd.f32 0.0, %v1517
    %v1519 = vpop.f32.mrf.mxu0
    %1520 = vmatprep.mubr.bf16.mxu0 %v1327
    %1521 = vmatmul.mubr.bf16.gmra.mxu0 %v1326
    %v1522 = vpop.f32.mrf.mxu0
    %v1523 = vadd.f32 0.0, %v1522
    %v1524 = vpop.f32.mrf.mxu0
    %v1525 = vpop.f32.mrf.mxu0
    %v1526 = vadd.f32 0.0, %v1525
    %v1527 = vpop.f32.mrf.mxu0
    %1528 = vdwg.mxu0
    %v1529 = vld [vmem:[#allocation8] sm:$0xff]
    %v1530 = vld [vmem:[#allocation8 + $0x8] sm:$0xff]
    %v1531 = vld [vmem:[#allocation8 + $0x10] sm:$0xff]
    %v1532 = vld [vmem:[#allocation8 + $0x18] sm:$0xff]
    %v1533 = vld [vmem:[#allocation8 + $0x20] sm:$0xff]
    %v1534 = vld [vmem:[#allocation8 + $0x28] sm:$0xff]
    %v1535 = vld [vmem:[#allocation8 + $0x30] sm:$0xff]
    %v1536 = vld [vmem:[#allocation8 + $0x38] sm:$0xff]
    %v1537 = vld [vmem:[#allocation8 + $0x40] sm:$0xff]
    %v1538 = vld [vmem:[#allocation8 + $0x48] sm:$0xff]
    %v1539 = vand.u32 2147483647, %v1491
    %v1540 = vand.u32 2147483647, %v1494
    %v1541 = vand.u32 2147483647, %v1499
    %v1542 = vand.u32 2147483647, %v1502
    %v1543 = vand.u32 2147483647, %v1507
    %v1544 = vand.u32 2147483647, %v1510
    %v1545 = vand.u32 2147483647, %v1515
    %v1546 = vand.u32 2147483647, %v1518
    %v1547 = vand.u32 2147483647, %v1523
    %v1548 = vand.u32 2147483647, %v1526
    %v1549 = vadd.f32 %v1529, %v1539
    %v1550 = vadd.f32 %v1530, %v1540
    %v1551 = vadd.f32 %v1531, %v1541
    %v1552 = vadd.f32 %v1532, %v1542
    %v1553 = vadd.f32 %v1533, %v1543
    %v1554 = vadd.f32 %v1534, %v1544
    %v1555 = vadd.f32 %v1535, %v1545
    %v1556 = vadd.f32 %v1536, %v1546
    %v1557 = vadd.f32 %v1537, %v1547
    %v1558 = vadd.f32 %v1538, %v1548
    %1559 = vst [vmem:[#allocation8] sm:$0xff] %v1549
    %1560 = vst [vmem:[#allocation8 + $0x8] sm:$0xff] %v1550
    %1561 = vst [vmem:[#allocation8 + $0x10] sm:$0xff] %v1551
    %1562 = vst [vmem:[#allocation8 + $0x18] sm:$0xff] %v1552
    %1563 = vst [vmem:[#allocation8 + $0x20] sm:$0xff] %v1553
    %1564 = vst [vmem:[#allocation8 + $0x28] sm:$0xff] %v1554
    %1565 = vst [vmem:[#allocation8 + $0x30] sm:$0xff] %v1555
    %1566 = vst [vmem:[#allocation8 + $0x38] sm:$0xff] %v1556
    %1567 = vst [vmem:[#allocation8 + $0x40] sm:$0xff] %v1557
    %1568 = vst [vmem:[#allocation8 + $0x48] sm:$0xff] %v1558
    %s1569 = scalar_lea.vmem [#allocation8], 80
    %v1570 = vld [vmem:[%s1569] sm:$0xff]
    %v1571 = vld [vmem:[%s1569 + $0x8] sm:$0xff]
    %v1572 = vld [vmem:[%s1569 + $0x10] sm:$0xff]
    %v1573 = vld [vmem:[%s1569 + $0x18] sm:$0xff]
    %v1574 = vld [vmem:[%s1569 + $0x20] sm:$0xff]
    %v1575 = vld [vmem:[%s1569 + $0x28] sm:$0xff]
    %v1576 = vld [vmem:[%s1569 + $0x30] sm:$0xff]
    %v1577 = vld [vmem:[%s1569 + $0x38] sm:$0xff]
    %v1578 = vld [vmem:[%s1569 + $0x40] sm:$0xff]
    %v1579 = vld [vmem:[%s1569 + $0x48] sm:$0xff]
    %v1580 = vmul.f32 %v1491, %v1491
    %v1581 = vmul.f32 %v1494, %v1494
    %v1582 = vmul.f32 %v1499, %v1499
    %v1583 = vmul.f32 %v1502, %v1502
    %v1584 = vmul.f32 %v1507, %v1507
    %v1585 = vmul.f32 %v1510, %v1510
    %v1586 = vmul.f32 %v1515, %v1515
    %v1587 = vmul.f32 %v1518, %v1518
    %v1588 = vmul.f32 %v1523, %v1523
    %v1589 = vmul.f32 %v1526, %v1526
    %v1590 = vadd.f32 %v1570, %v1580
    %v1591 = vadd.f32 %v1571, %v1581
    %v1592 = vadd.f32 %v1572, %v1582
    %v1593 = vadd.f32 %v1573, %v1583
    %v1594 = vadd.f32 %v1574, %v1584
    %v1595 = vadd.f32 %v1575, %v1585
    %v1596 = vadd.f32 %v1576, %v1586
    %v1597 = vadd.f32 %v1577, %v1587
    %v1598 = vadd.f32 %v1578, %v1588
    %v1599 = vadd.f32 %v1579, %v1589
    %1600 = vst [vmem:[%s1569] sm:$0xff] %v1590
    %1601 = vst [vmem:[%s1569 + $0x8] sm:$0xff] %v1591
    %1602 = vst [vmem:[%s1569 + $0x10] sm:$0xff] %v1592
    %1603 = vst [vmem:[%s1569 + $0x18] sm:$0xff] %v1593
    %1604 = vst [vmem:[%s1569 + $0x20] sm:$0xff] %v1594
    %1605 = vst [vmem:[%s1569 + $0x28] sm:$0xff] %v1595
    %1606 = vst [vmem:[%s1569 + $0x30] sm:$0xff] %v1596
    %1607 = vst [vmem:[%s1569 + $0x38] sm:$0xff] %v1597
    %1608 = vst [vmem:[%s1569 + $0x40] sm:$0xff] %v1598
    %1609 = vst [vmem:[%s1569 + $0x48] sm:$0xff] %v1599
    // Predicated region
    $region30: #{tpu_custom_call.1} parent=1 // pred_check
      _
    $region31: #{tpu_custom_call.1} parent=1 // pred_check_branch
      %1611 = sbr.rel (0) target = $region33
    $region32: #{tpu_custom_call.1} parent=1 // pred_region
      %s1613 = ssub.s32 2560, 2560
      %1614 = vsyncadd [#allocation4], %s1613
      %s1615 = sshll.u32 [#allocation8], 4
      %s1616 = int_to_ptr.vmem [resolvable:$true] %s1615
      %1621 = dma.vmem_to_hbm [thread:$0]  %s1616, 2560, %s3, [#allocation4], 128, 128, 8
    $region33: #{tpu_custom_call.1} parent=1 // pred_fallthru
      _
    // Predicated region
    $region34: #{tpu_custom_call.1} parent=1 // pred_check
      _
    $region35: #{tpu_custom_call.1} parent=1 // pred_check_branch
      %1623 = sbr.rel (0) target = $region37
    $region36: #{tpu_custom_call.1} parent=1 // pred_region
      %1624 = dma.done [#allocation4], 2560
    $region37: #{tpu_custom_call.1} parent=1 // pred_fallthru
      _
    %1625 = vsyncpa [#allocation3], 1
    %1626 = vsyncpa [#allocation6], 1
    %1627 = vsyncpa [#allocation4], 1

</llo_original>
